<compile_context>
chip_gen: v5e
topology: v5e:2x2
jax: 0.10.0
libtpu: 0.0.40
codegen_flags: <defaults>
</compile_context>

<pallas_src>
import math

import jax
import jax.numpy as jnp
import numpy as np
from jax.experimental import pallas as pl
from jax.experimental.pallas import tpu as pltpu

_SUBLANES = 8
_LANE_PAD = 128      # pad hidden (64) up to one full lane group
_MAX_TILE_B = 128    # batch rows per program (M of the recurrent matmuls)


def lstm_demand_kernel(x_ref,      # (T, TB, I)     inputs for this batch tile, time-major
                       wx0_ref,    # (I, 4*Hp)      layer-0 input weights, gate order (i,f,o,g)
                       wh0_ref,    # (Hp, 4*Hp)     layer-0 recurrent weights
                       b0_ref,     # (1, 4*Hp)
                       wxh1_ref,   # (2*Hp, 4*Hp)   layer-1 fused [wx1 ; wh1]
                       b1_ref,     # (1, 4*Hp)
                       wl_ref,     # (Hp, O)        final linear
                       bl_ref,     # (1, O)
                       out_ref):   # (TB, O)
    T = x_ref.shape[0]
    I = x_ref.shape[2]
    TB = out_ref.shape[0]
    Hp = wh0_ref.shape[0]           # lane-padded hidden size (128)

    def sigmoid(v):
        # tanh identity keeps the transcendental on the EUP (no explicit VALU divide).
        return 0.5 * jnp.tanh(0.5 * v) + 0.5

    def cell(pre, c):
        # Gate layout along lanes: [ i | f | o | g ], each slab Hp == 128 lanes wide,
        # so every slice below starts on a vreg boundary (no XLU relayouts).
        sig = sigmoid(pre[:, :3 * Hp])
        i = sig[:, :Hp]
        f = sig[:, Hp:2 * Hp]
        o = sig[:, 2 * Hp:]
        g = jnp.tanh(pre[:, 3 * Hp:])
        c = f * c + i * g
        h = o * jnp.tanh(c)
        return h, c

    zeros = jnp.zeros((TB, Hp), jnp.float32)
    h1 = c1 = h2 = c2 = zeros

    # T is a small static trip count -> Python unroll; only the 4 state tiles are carried,
    # weights are re-read from their VMEM refs inside every step (loop-invariant vlds are
    # nearly free and avoid spilling the vreg file across the unrolled recurrence).
    # TODO(synk): switch to lax.fori_loop(..., unroll=True) carries if T grows beyond ~16.
    for t in range(T):
        # ---- layer 0 cell: input_size == 1 -> x-projection is a VPU broadcast multiply ----
        if I == 1:
            xp = x_ref[t] * wx0_ref[...]
        else:
            xp = jnp.dot(x_ref[t], wx0_ref[...], preferred_element_type=jnp.float32)
        pre1 = (xp + b0_ref[...]
                + jnp.dot(h1, wh0_ref[...], preferred_element_type=jnp.float32))
        h1, c1 = cell(pre1, c1)

        # ---- layer 1 cell: single fused K = 2*Hp matmul over [h1 | h2] ----
        hh = jnp.concatenate([h1, h2], axis=-1)
        pre2 = (jnp.dot(hh, wxh1_ref[...], preferred_element_type=jnp.float32)
                + b1_ref[...])
        h2, c2 = cell(pre2, c2)

    # Final linear on the last timestep's top-layer hidden state. O == 1: a single tiny
    # matmul + 1-lane masked store outside the loop -> negligible (per review, left as-is).
    out_ref[...] = (jnp.dot(h2, wl_ref[...], preferred_element_type=jnp.float32)
                    + bl_ref[...])


# PyTorch per-gate order (i, f, g, o) -> kernel gate-slab order (i, f, o, g)
_GATE_ORDER = (0, 1, 3, 2)


def _fuse_gates_padded(w4, hp):
    """(4, K, H) PyTorch gate order -> (K, 4*hp) kernel order, each gate zero-padded to hp lanes."""
    _, k, h = w4.shape
    out = jnp.zeros((k, 4 * hp), jnp.float32)
    for slot, g in enumerate(_GATE_ORDER):
        out = out.at[:, slot * hp:slot * hp + h].set(w4[g])
    return out


def _pad_rows(w, rows):
    pad = rows - w.shape[0]
    return jnp.pad(w, ((0, pad), (0, 0))) if pad else w


def _full_spec(a):
    zeros = (0,) * a.ndim
    return pl.BlockSpec(a.shape, lambda b: zeros)


def lstm_demand_predictor(x, params):
    """x: (B, T, I) float32 -> (B, O) float32."""
    B, T, I = x.shape
    H = params["wh0"].shape[-1]
    O = params["wl"].shape[-1]
    Hp = max(_LANE_PAD, H)   # lane-pad hidden so every gate slab is vreg aligned

    # --- fuse / pad weights (zeros in padded lanes & rows keep padded state at exactly 0) ---
    wx0 = _fuse_gates_padded(params["wx0"], Hp)                          # (I, 4Hp)
    wh0 = _pad_rows(_fuse_gates_padded(params["wh0"], Hp), Hp)           # (Hp, 4Hp)
    b0 = _fuse_gates_padded(params["b0"], Hp)                            # (1, 4Hp)
    wxh1 = jnp.concatenate(
        [_pad_rows(_fuse_gates_padded(params["wx1"], Hp), Hp),
         _pad_rows(_fuse_gates_padded(params["wh1"], Hp), Hp)], axis=0)  # (2Hp, 4Hp)
    b1 = _fuse_gates_padded(params["b1"], Hp)                            # (1, 4Hp)
    wl = _pad_rows(params["wl"].astype(jnp.float32), Hp)                 # (Hp, O)
    bl = params["bl"].astype(jnp.float32)                                # (1, O)

    # --- batch tiling: pad B to a sublane multiple, tile across a parallel grid axis ---
    tile_b = min(((B + _SUBLANES - 1) // _SUBLANES) * _SUBLANES, _MAX_TILE_B)
    Bp = ((B + tile_b - 1) // tile_b) * tile_b
    x_tbi = jnp.transpose(x, (1, 0, 2)).astype(jnp.float32)              # (T, B, I): time-major
    if Bp != B:
        x_tbi = jnp.pad(x_tbi, ((0, 0), (0, Bp - B), (0, 0)))

    args = (x_tbi, wx0, wh0, b0, wxh1, b1, wl, bl)

    out = pl.pallas_call(
        lstm_demand_kernel,
        out_shape=jax.ShapeDtypeStruct((Bp, O), jnp.float32),
        grid_spec=pltpu.PrefetchScalarGridSpec(
            num_scalar_prefetch=0,
            grid=(Bp // tile_b,),
            in_specs=[pl.BlockSpec((T, tile_b, I), lambda b: (0, b, 0))]
                     + [_full_spec(a) for a in args[1:]],
            out_specs=pl.BlockSpec((tile_b, O), lambda b: (b, 0)),
        ),
        compiler_params=pltpu.CompilerParams(
            dimension_semantics=("parallel",)),
    )(*args)
    return out[:B]


def lstm_demand_predictor_ref(x, params):
    """Pure-JAX reference with identical semantics (PyTorch gate order i, f, g, o)."""
    B, T, I = x.shape
    H = params["wh0"].shape[-1]

    def sigmoid(v):
        return 1.0 / (1.0 + jnp.exp(-v))

    def cell(x_t, h, c, wx, wh, b):
        pre = [x_t @ wx[g] + h @ wh[g] + b[g] for g in range(4)]
        i_g = sigmoid(pre[0])
        f_g = sigmoid(pre[1])
        g_g = jnp.tanh(pre[2])
        o_g = sigmoid(pre[3])
        c = f_g * c + i_g * g_g
        h = o_g * jnp.tanh(c)
        return h, c

    h1 = c1 = h2 = c2 = jnp.zeros((B, H), jnp.float32)
    for t in range(T):
        x_t = x[:, t, :]
        h1, c1 = cell(x_t, h1, c1, params["wx0"], params["wh0"], params["b0"])
        h2, c2 = cell(h1, h2, c2, params["wx1"], params["wh1"], params["b1"])
    return h2 @ params["wl"] + params["bl"]


def init_params(key, input_size, hidden_size, output_size):
    """Deterministic synthetic init (uniform +-1/sqrt(H), like PyTorch's default).

    Stored in PyTorch per-gate (i, f, g, o) layout; biases already combined (b_ih + b_hh).
    """
    k = 1.0 / math.sqrt(hidden_size)
    ks = jax.random.split(key, 8)
    u = lambda kk, shape: jax.random.uniform(kk, shape, jnp.float32, -k, k)
    return {
        "wx0": u(ks[0], (4, input_size, hidden_size)),
        "wh0": u(ks[1], (4, hidden_size, hidden_size)),
        "b0":  u(ks[2], (4, 1, hidden_size)),
        "wx1": u(ks[3], (4, hidden_size, hidden_size)),
        "wh1": u(ks[4], (4, hidden_size, hidden_size)),
        "b1":  u(ks[5], (4, 1, hidden_size)),
        "wl":  u(ks[6], (hidden_size, output_size)),
        "bl":  u(ks[7], (1, output_size)),
    }


if __name__ == "__main__":
    INPUT_SIZE = 1      # module default
    HIDDEN_SIZE = 64    # module default
    OUTPUT_SIZE = 1     # module default
    BATCH, SEQ = 4, 8

    key = jax.random.PRNGKey(0)
    pkey, xkey = jax.random.split(key)
    params = init_params(pkey, INPUT_SIZE, HIDDEN_SIZE, OUTPUT_SIZE)
    x = jax.random.normal(xkey, (BATCH, SEQ, INPUT_SIZE), jnp.float32)

    out = lstm_demand_predictor(x, params)
    out = jax.block_until_ready(out)

    ref = jax.block_until_ready(lstm_demand_predictor_ref(x, params))
    np.testing.assert_allclose(np.asarray(out), np.asarray(ref),
                               rtol=1e-5, atol=1e-5)
    assert out.shape == (BATCH, OUTPUT_SIZE)

    print("KERNEL_OK")
</pallas_src>

<mosaic_0001>
module attributes {stable_mosaic.version = 11 : i64} {
  func.func @lstm_demand_kernel(%arg0: i32, %arg1: memref<8x8x1xf32, #tpu.memory_space<vmem>>, %arg2: memref<1x512xf32, #tpu.memory_space<vmem>>, %arg3: memref<128x512xf32, #tpu.memory_space<vmem>>, %arg4: memref<1x512xf32, #tpu.memory_space<vmem>>, %arg5: memref<256x512xf32, #tpu.memory_space<vmem>>, %arg6: memref<1x512xf32, #tpu.memory_space<vmem>>, %arg7: memref<128x1xf32, #tpu.memory_space<vmem>>, %arg8: memref<1x1xf32, #tpu.memory_space<vmem>>, %arg9: memref<8x1xf32, #tpu.memory_space<vmem>>) attributes {dimension_semantics = [#tpu.dimension_semantics<parallel>], iteration_bounds = array<i64: 1>, scalar_prefetch = 0 : i64, scratch_operands = 0 : i64, tpu.core_type = #tpu.core_type<tc>, window_params = [{transform_indices = @transform_0, window_bounds = array<i64: 8, 8, 1>}, {pipeline_mode = #tpu.pipeline_mode<synchronous>, transform_indices = @transform_1, window_bounds = array<i64: 1, 512>}, {pipeline_mode = #tpu.pipeline_mode<synchronous>, transform_indices = @transform_2, window_bounds = array<i64: 128, 512>}, {pipeline_mode = #tpu.pipeline_mode<synchronous>, transform_indices = @transform_3, window_bounds = array<i64: 1, 512>}, {pipeline_mode = #tpu.pipeline_mode<synchronous>, transform_indices = @transform_4, window_bounds = array<i64: 256, 512>}, {pipeline_mode = #tpu.pipeline_mode<synchronous>, transform_indices = @transform_5, window_bounds = array<i64: 1, 512>}, {pipeline_mode = #tpu.pipeline_mode<synchronous>, transform_indices = @transform_6, window_bounds = array<i64: 128, 1>}, {pipeline_mode = #tpu.pipeline_mode<synchronous>, transform_indices = @transform_7, window_bounds = array<i64: 1, 1>}, {transform_indices = @transform_8, window_bounds = array<i64: 8, 1>}]} {
    %cst = arith.constant 0.000000e+00 : f32
    %0 = vector.broadcast %cst : f32 to vector<8x128xf32>
    %c0 = arith.constant 0 : index
    %c0_0 = arith.constant 0 : index
    %c0_1 = arith.constant 0 : index
    %1 = vector.load %arg1[%c0, %c0_0, %c0_1] : memref<8x8x1xf32, #tpu.memory_space<vmem>>, vector<1x8x1xf32>
    %2 = vector.shape_cast %1 : vector<1x8x1xf32> to vector<8x1xf32>
    %c0_2 = arith.constant 0 : index
    %c0_3 = arith.constant 0 : index
    %3 = vector.load %arg2[%c0_2, %c0_3] : memref<1x512xf32, #tpu.memory_space<vmem>>, vector<1x512xf32>
    %4 = vector.broadcast %2 : vector<8x1xf32> to vector<8x512xf32>
    %5 = vector.broadcast %3 : vector<1x512xf32> to vector<8x512xf32>
    %6 = arith.mulf %4, %5 : vector<8x512xf32>
    %c0_4 = arith.constant 0 : index
    %c0_5 = arith.constant 0 : index
    %7 = vector.load %arg4[%c0_4, %c0_5] : memref<1x512xf32, #tpu.memory_space<vmem>>, vector<1x512xf32>
    %8 = vector.broadcast %7 : vector<1x512xf32> to vector<8x512xf32>
    %9 = arith.addf %6, %8 : vector<8x512xf32>
    %c0_6 = arith.constant 0 : index
    %c0_7 = arith.constant 0 : index
    %10 = vector.load %arg3[%c0_6, %c0_7] : memref<128x512xf32, #tpu.memory_space<vmem>>, vector<128x512xf32>
    %cst_8 = arith.constant dense<0.000000e+00> : vector<8x512xf32>
    %11 = tpu.matmul %0, %10, %cst_8 {dimension_numbers = #tpu.dot_dimension_numbers<[1], [0], [0], [1], [0, 0, 1, 1], [], []>} : vector<8x128xf32>, vector<128x512xf32>, vector<8x512xf32> -> vector<8x512xf32>
    %12 = arith.addf %9, %11 : vector<8x512xf32>
    %13 = vector.extract_strided_slice %12 {offsets = [0, 0], sizes = [8, 384], strides = [1, 1]} : vector<8x512xf32> to vector<8x384xf32>
    %cst_9 = arith.constant 5.000000e-01 : f32
    %14 = vector.broadcast %cst_9 : f32 to vector<8x384xf32>
    %15 = arith.mulf %14, %13 : vector<8x384xf32>
    %16 = math.tanh %15 : vector<8x384xf32>
    %cst_10 = arith.constant 5.000000e-01 : f32
    %17 = vector.broadcast %cst_10 : f32 to vector<8x384xf32>
    %18 = arith.mulf %17, %16 : vector<8x384xf32>
    %cst_11 = arith.constant 5.000000e-01 : f32
    %19 = vector.broadcast %cst_11 : f32 to vector<8x384xf32>
    %20 = arith.addf %18, %19 : vector<8x384xf32>
    %21 = vector.extract_strided_slice %20 {offsets = [0, 0], sizes = [8, 128], strides = [1, 1]} : vector<8x384xf32> to vector<8x128xf32>
    %22 = vector.extract_strided_slice %20 {offsets = [0, 128], sizes = [8, 128], strides = [1, 1]} : vector<8x384xf32> to vector<8x128xf32>
    %23 = vector.extract_strided_slice %20 {offsets = [0, 256], sizes = [8, 128], strides = [1, 1]} : vector<8x384xf32> to vector<8x128xf32>
    %24 = vector.extract_strided_slice %12 {offsets = [0, 384], sizes = [8, 128], strides = [1, 1]} : vector<8x512xf32> to vector<8x128xf32>
    %25 = math.tanh %24 : vector<8x128xf32>
    %26 = arith.mulf %22, %0 : vector<8x128xf32>
    %27 = arith.mulf %21, %25 : vector<8x128xf32>
    %28 = arith.addf %26, %27 : vector<8x128xf32>
    %29 = math.tanh %28 : vector<8x128xf32>
    %30 = arith.mulf %23, %29 : vector<8x128xf32>
    %31 = tpu.concatenate %30, %0 in 1 : vector<8x128xf32>, vector<8x128xf32> -> vector<8x256xf32>
    %c0_12 = arith.constant 0 : index
    %c0_13 = arith.constant 0 : index
    %32 = vector.load %arg5[%c0_12, %c0_13] : memref<256x512xf32, #tpu.memory_space<vmem>>, vector<256x512xf32>
    %cst_14 = arith.constant dense<0.000000e+00> : vector<8x512xf32>
    %33 = tpu.matmul %31, %32, %cst_14 {dimension_numbers = #tpu.dot_dimension_numbers<[1], [0], [0], [1], [0, 0, 1, 1], [], []>} : vector<8x256xf32>, vector<256x512xf32>, vector<8x512xf32> -> vector<8x512xf32>
    %c0_15 = arith.constant 0 : index
    %c0_16 = arith.constant 0 : index
    %34 = vector.load %arg6[%c0_15, %c0_16] : memref<1x512xf32, #tpu.memory_space<vmem>>, vector<1x512xf32>
    %35 = vector.broadcast %34 : vector<1x512xf32> to vector<8x512xf32>
    %36 = arith.addf %33, %35 : vector<8x512xf32>
    %37 = vector.extract_strided_slice %36 {offsets = [0, 0], sizes = [8, 384], strides = [1, 1]} : vector<8x512xf32> to vector<8x384xf32>
    %cst_17 = arith.constant 5.000000e-01 : f32
    %38 = vector.broadcast %cst_17 : f32 to vector<8x384xf32>
    %39 = arith.mulf %38, %37 : vector<8x384xf32>
    %40 = math.tanh %39 : vector<8x384xf32>
    %cst_18 = arith.constant 5.000000e-01 : f32
    %41 = vector.broadcast %cst_18 : f32 to vector<8x384xf32>
    %42 = arith.mulf %41, %40 : vector<8x384xf32>
    %cst_19 = arith.constant 5.000000e-01 : f32
    %43 = vector.broadcast %cst_19 : f32 to vector<8x384xf32>
    %44 = arith.addf %42, %43 : vector<8x384xf32>
    %45 = vector.extract_strided_slice %44 {offsets = [0, 0], sizes = [8, 128], strides = [1, 1]} : vector<8x384xf32> to vector<8x128xf32>
    %46 = vector.extract_strided_slice %44 {offsets = [0, 128], sizes = [8, 128], strides = [1, 1]} : vector<8x384xf32> to vector<8x128xf32>
    %47 = vector.extract_strided_slice %44 {offsets = [0, 256], sizes = [8, 128], strides = [1, 1]} : vector<8x384xf32> to vector<8x128xf32>
    %48 = vector.extract_strided_slice %36 {offsets = [0, 384], sizes = [8, 128], strides = [1, 1]} : vector<8x512xf32> to vector<8x128xf32>
    %49 = math.tanh %48 : vector<8x128xf32>
    %50 = arith.mulf %46, %0 : vector<8x128xf32>
    %51 = arith.mulf %45, %49 : vector<8x128xf32>
    %52 = arith.addf %50, %51 : vector<8x128xf32>
    %53 = math.tanh %52 : vector<8x128xf32>
    %54 = arith.mulf %47, %53 : vector<8x128xf32>
    %c1 = arith.constant 1 : index
    %c0_20 = arith.constant 0 : index
    %c0_21 = arith.constant 0 : index
    %55 = vector.load %arg1[%c1, %c0_20, %c0_21] : memref<8x8x1xf32, #tpu.memory_space<vmem>>, vector<1x8x1xf32>
    %56 = vector.shape_cast %55 : vector<1x8x1xf32> to vector<8x1xf32>
    %c0_22 = arith.constant 0 : index
    %c0_23 = arith.constant 0 : index
    %57 = vector.load %arg2[%c0_22, %c0_23] : memref<1x512xf32, #tpu.memory_space<vmem>>, vector<1x512xf32>
    %58 = vector.broadcast %56 : vector<8x1xf32> to vector<8x512xf32>
    %59 = vector.broadcast %57 : vector<1x512xf32> to vector<8x512xf32>
    %60 = arith.mulf %58, %59 : vector<8x512xf32>
    %c0_24 = arith.constant 0 : index
    %c0_25 = arith.constant 0 : index
    %61 = vector.load %arg4[%c0_24, %c0_25] : memref<1x512xf32, #tpu.memory_space<vmem>>, vector<1x512xf32>
    %62 = vector.broadcast %61 : vector<1x512xf32> to vector<8x512xf32>
    %63 = arith.addf %60, %62 : vector<8x512xf32>
    %c0_26 = arith.constant 0 : index
    %c0_27 = arith.constant 0 : index
    %64 = vector.load %arg3[%c0_26, %c0_27] : memref<128x512xf32, #tpu.memory_space<vmem>>, vector<128x512xf32>
    %cst_28 = arith.constant dense<0.000000e+00> : vector<8x512xf32>
    %65 = tpu.matmul %30, %64, %cst_28 {dimension_numbers = #tpu.dot_dimension_numbers<[1], [0], [0], [1], [0, 0, 1, 1], [], []>} : vector<8x128xf32>, vector<128x512xf32>, vector<8x512xf32> -> vector<8x512xf32>
    %66 = arith.addf %63, %65 : vector<8x512xf32>
    %67 = vector.extract_strided_slice %66 {offsets = [0, 0], sizes = [8, 384], strides = [1, 1]} : vector<8x512xf32> to vector<8x384xf32>
    %cst_29 = arith.constant 5.000000e-01 : f32
    %68 = vector.broadcast %cst_29 : f32 to vector<8x384xf32>
    %69 = arith.mulf %68, %67 : vector<8x384xf32>
    %70 = math.tanh %69 : vector<8x384xf32>
    %cst_30 = arith.constant 5.000000e-01 : f32
    %71 = vector.broadcast %cst_30 : f32 to vector<8x384xf32>
    %72 = arith.mulf %71, %70 : vector<8x384xf32>
    %cst_31 = arith.constant 5.000000e-01 : f32
    %73 = vector.broadcast %cst_31 : f32 to vector<8x384xf32>
    %74 = arith.addf %72, %73 : vector<8x384xf32>
    %75 = vector.extract_strided_slice %74 {offsets = [0, 0], sizes = [8, 128], strides = [1, 1]} : vector<8x384xf32> to vector<8x128xf32>
    %76 = vector.extract_strided_slice %74 {offsets = [0, 128], sizes = [8, 128], strides = [1, 1]} : vector<8x384xf32> to vector<8x128xf32>
    %77 = vector.extract_strided_slice %74 {offsets = [0, 256], sizes = [8, 128], strides = [1, 1]} : vector<8x384xf32> to vector<8x128xf32>
    %78 = vector.extract_strided_slice %66 {offsets = [0, 384], sizes = [8, 128], strides = [1, 1]} : vector<8x512xf32> to vector<8x128xf32>
    %79 = math.tanh %78 : vector<8x128xf32>
    %80 = arith.mulf %76, %28 : vector<8x128xf32>
    %81 = arith.mulf %75, %79 : vector<8x128xf32>
    %82 = arith.addf %80, %81 : vector<8x128xf32>
    %83 = math.tanh %82 : vector<8x128xf32>
    %84 = arith.mulf %77, %83 : vector<8x128xf32>
    %85 = tpu.concatenate %84, %54 in 1 : vector<8x128xf32>, vector<8x128xf32> -> vector<8x256xf32>
    %c0_32 = arith.constant 0 : index
    %c0_33 = arith.constant 0 : index
    %86 = vector.load %arg5[%c0_32, %c0_33] : memref<256x512xf32, #tpu.memory_space<vmem>>, vector<256x512xf32>
    %cst_34 = arith.constant dense<0.000000e+00> : vector<8x512xf32>
    %87 = tpu.matmul %85, %86, %cst_34 {dimension_numbers = #tpu.dot_dimension_numbers<[1], [0], [0], [1], [0, 0, 1, 1], [], []>} : vector<8x256xf32>, vector<256x512xf32>, vector<8x512xf32> -> vector<8x512xf32>
    %c0_35 = arith.constant 0 : index
    %c0_36 = arith.constant 0 : index
    %88 = vector.load %arg6[%c0_35, %c0_36] : memref<1x512xf32, #tpu.memory_space<vmem>>, vector<1x512xf32>
    %89 = vector.broadcast %88 : vector<1x512xf32> to vector<8x512xf32>
    %90 = arith.addf %87, %89 : vector<8x512xf32>
    %91 = vector.extract_strided_slice %90 {offsets = [0, 0], sizes = [8, 384], strides = [1, 1]} : vector<8x512xf32> to vector<8x384xf32>
    %cst_37 = arith.constant 5.000000e-01 : f32
    %92 = vector.broadcast %cst_37 : f32 to vector<8x384xf32>
    %93 = arith.mulf %92, %91 : vector<8x384xf32>
    %94 = math.tanh %93 : vector<8x384xf32>
    %cst_38 = arith.constant 5.000000e-01 : f32
    %95 = vector.broadcast %cst_38 : f32 to vector<8x384xf32>
    %96 = arith.mulf %95, %94 : vector<8x384xf32>
    %cst_39 = arith.constant 5.000000e-01 : f32
    %97 = vector.broadcast %cst_39 : f32 to vector<8x384xf32>
    %98 = arith.addf %96, %97 : vector<8x384xf32>
    %99 = vector.extract_strided_slice %98 {offsets = [0, 0], sizes = [8, 128], strides = [1, 1]} : vector<8x384xf32> to vector<8x128xf32>
    %100 = vector.extract_strided_slice %98 {offsets = [0, 128], sizes = [8, 128], strides = [1, 1]} : vector<8x384xf32> to vector<8x128xf32>
    %101 = vector.extract_strided_slice %98 {offsets = [0, 256], sizes = [8, 128], strides = [1, 1]} : vector<8x384xf32> to vector<8x128xf32>
    %102 = vector.extract_strided_slice %90 {offsets = [0, 384], sizes = [8, 128], strides = [1, 1]} : vector<8x512xf32> to vector<8x128xf32>
    %103 = math.tanh %102 : vector<8x128xf32>
    %104 = arith.mulf %100, %52 : vector<8x128xf32>
    %105 = arith.mulf %99, %103 : vector<8x128xf32>
    %106 = arith.addf %104, %105 : vector<8x128xf32>
    %107 = math.tanh %106 : vector<8x128xf32>
    %108 = arith.mulf %101, %107 : vector<8x128xf32>
    %c2 = arith.constant 2 : index
    %c0_40 = arith.constant 0 : index
    %c0_41 = arith.constant 0 : index
    %109 = vector.load %arg1[%c2, %c0_40, %c0_41] : memref<8x8x1xf32, #tpu.memory_space<vmem>>, vector<1x8x1xf32>
    %110 = vector.shape_cast %109 : vector<1x8x1xf32> to vector<8x1xf32>
    %c0_42 = arith.constant 0 : index
    %c0_43 = arith.constant 0 : index
    %111 = vector.load %arg2[%c0_42, %c0_43] : memref<1x512xf32, #tpu.memory_space<vmem>>, vector<1x512xf32>
    %112 = vector.broadcast %110 : vector<8x1xf32> to vector<8x512xf32>
    %113 = vector.broadcast %111 : vector<1x512xf32> to vector<8x512xf32>
    %114 = arith.mulf %112, %113 : vector<8x512xf32>
    %c0_44 = arith.constant 0 : index
    %c0_45 = arith.constant 0 : index
    %115 = vector.load %arg4[%c0_44, %c0_45] : memref<1x512xf32, #tpu.memory_space<vmem>>, vector<1x512xf32>
    %116 = vector.broadcast %115 : vector<1x512xf32> to vector<8x512xf32>
    %117 = arith.addf %114, %116 : vector<8x512xf32>
    %c0_46 = arith.constant 0 : index
    %c0_47 = arith.constant 0 : index
    %118 = vector.load %arg3[%c0_46, %c0_47] : memref<128x512xf32, #tpu.memory_space<vmem>>, vector<128x512xf32>
    %cst_48 = arith.constant dense<0.000000e+00> : vector<8x512xf32>
    %119 = tpu.matmul %84, %118, %cst_48 {dimension_numbers = #tpu.dot_dimension_numbers<[1], [0], [0], [1], [0, 0, 1, 1], [], []>} : vector<8x128xf32>, vector<128x512xf32>, vector<8x512xf32> -> vector<8x512xf32>
    %120 = arith.addf %117, %119 : vector<8x512xf32>
    %121 = vector.extract_strided_slice %120 {offsets = [0, 0], sizes = [8, 384], strides = [1, 1]} : vector<8x512xf32> to vector<8x384xf32>
    %cst_49 = arith.constant 5.000000e-01 : f32
    %122 = vector.broadcast %cst_49 : f32 to vector<8x384xf32>
    %123 = arith.mulf %122, %121 : vector<8x384xf32>
    %124 = math.tanh %123 : vector<8x384xf32>
    %cst_50 = arith.constant 5.000000e-01 : f32
    %125 = vector.broadcast %cst_50 : f32 to vector<8x384xf32>
    %126 = arith.mulf %125, %124 : vector<8x384xf32>
    %cst_51 = arith.constant 5.000000e-01 : f32
    %127 = vector.broadcast %cst_51 : f32 to vector<8x384xf32>
    %128 = arith.addf %126, %127 : vector<8x384xf32>
    %129 = vector.extract_strided_slice %128 {offsets = [0, 0], sizes = [8, 128], strides = [1, 1]} : vector<8x384xf32> to vector<8x128xf32>
    %130 = vector.extract_strided_slice %128 {offsets = [0, 128], sizes = [8, 128], strides = [1, 1]} : vector<8x384xf32> to vector<8x128xf32>
    %131 = vector.extract_strided_slice %128 {offsets = [0, 256], sizes = [8, 128], strides = [1, 1]} : vector<8x384xf32> to vector<8x128xf32>
    %132 = vector.extract_strided_slice %120 {offsets = [0, 384], sizes = [8, 128], strides = [1, 1]} : vector<8x512xf32> to vector<8x128xf32>
    %133 = math.tanh %132 : vector<8x128xf32>
    %134 = arith.mulf %130, %82 : vector<8x128xf32>
    %135 = arith.mulf %129, %133 : vector<8x128xf32>
    %136 = arith.addf %134, %135 : vector<8x128xf32>
    %137 = math.tanh %136 : vector<8x128xf32>
    %138 = arith.mulf %131, %137 : vector<8x128xf32>
    %139 = tpu.concatenate %138, %108 in 1 : vector<8x128xf32>, vector<8x128xf32> -> vector<8x256xf32>
    %c0_52 = arith.constant 0 : index
    %c0_53 = arith.constant 0 : index
    %140 = vector.load %arg5[%c0_52, %c0_53] : memref<256x512xf32, #tpu.memory_space<vmem>>, vector<256x512xf32>
    %cst_54 = arith.constant dense<0.000000e+00> : vector<8x512xf32>
    %141 = tpu.matmul %139, %140, %cst_54 {dimension_numbers = #tpu.dot_dimension_numbers<[1], [0], [0], [1], [0, 0, 1, 1], [], []>} : vector<8x256xf32>, vector<256x512xf32>, vector<8x512xf32> -> vector<8x512xf32>
    %c0_55 = arith.constant 0 : index
    %c0_56 = arith.constant 0 : index
    %142 = vector.load %arg6[%c0_55, %c0_56] : memref<1x512xf32, #tpu.memory_space<vmem>>, vector<1x512xf32>
    %143 = vector.broadcast %142 : vector<1x512xf32> to vector<8x512xf32>
    %144 = arith.addf %141, %143 : vector<8x512xf32>
    %145 = vector.extract_strided_slice %144 {offsets = [0, 0], sizes = [8, 384], strides = [1, 1]} : vector<8x512xf32> to vector<8x384xf32>
    %cst_57 = arith.constant 5.000000e-01 : f32
    %146 = vector.broadcast %cst_57 : f32 to vector<8x384xf32>
    %147 = arith.mulf %146, %145 : vector<8x384xf32>
    %148 = math.tanh %147 : vector<8x384xf32>
    %cst_58 = arith.constant 5.000000e-01 : f32
    %149 = vector.broadcast %cst_58 : f32 to vector<8x384xf32>
    %150 = arith.mulf %149, %148 : vector<8x384xf32>
    %cst_59 = arith.constant 5.000000e-01 : f32
    %151 = vector.broadcast %cst_59 : f32 to vector<8x384xf32>
    %152 = arith.addf %150, %151 : vector<8x384xf32>
    %153 = vector.extract_strided_slice %152 {offsets = [0, 0], sizes = [8, 128], strides = [1, 1]} : vector<8x384xf32> to vector<8x128xf32>
    %154 = vector.extract_strided_slice %152 {offsets = [0, 128], sizes = [8, 128], strides = [1, 1]} : vector<8x384xf32> to vector<8x128xf32>
    %155 = vector.extract_strided_slice %152 {offsets = [0, 256], sizes = [8, 128], strides = [1, 1]} : vector<8x384xf32> to vector<8x128xf32>
    %156 = vector.extract_strided_slice %144 {offsets = [0, 384], sizes = [8, 128], strides = [1, 1]} : vector<8x512xf32> to vector<8x128xf32>
    %157 = math.tanh %156 : vector<8x128xf32>
    %158 = arith.mulf %154, %106 : vector<8x128xf32>
    %159 = arith.mulf %153, %157 : vector<8x128xf32>
    %160 = arith.addf %158, %159 : vector<8x128xf32>
    %161 = math.tanh %160 : vector<8x128xf32>
    %162 = arith.mulf %155, %161 : vector<8x128xf32>
    %c3 = arith.constant 3 : index
    %c0_60 = arith.constant 0 : index
    %c0_61 = arith.constant 0 : index
    %163 = vector.load %arg1[%c3, %c0_60, %c0_61] : memref<8x8x1xf32, #tpu.memory_space<vmem>>, vector<1x8x1xf32>
    %164 = vector.shape_cast %163 : vector<1x8x1xf32> to vector<8x1xf32>
    %c0_62 = arith.constant 0 : index
    %c0_63 = arith.constant 0 : index
    %165 = vector.load %arg2[%c0_62, %c0_63] : memref<1x512xf32, #tpu.memory_space<vmem>>, vector<1x512xf32>
    %166 = vector.broadcast %164 : vector<8x1xf32> to vector<8x512xf32>
    %167 = vector.broadcast %165 : vector<1x512xf32> to vector<8x512xf32>
    %168 = arith.mulf %166, %167 : vector<8x512xf32>
    %c0_64 = arith.constant 0 : index
    %c0_65 = arith.constant 0 : index
    %169 = vector.load %arg4[%c0_64, %c0_65] : memref<1x512xf32, #tpu.memory_space<vmem>>, vector<1x512xf32>
    %170 = vector.broadcast %169 : vector<1x512xf32> to vector<8x512xf32>
    %171 = arith.addf %168, %170 : vector<8x512xf32>
    %c0_66 = arith.constant 0 : index
    %c0_67 = arith.constant 0 : index
    %172 = vector.load %arg3[%c0_66, %c0_67] : memref<128x512xf32, #tpu.memory_space<vmem>>, vector<128x512xf32>
    %cst_68 = arith.constant dense<0.000000e+00> : vector<8x512xf32>
    %173 = tpu.matmul %138, %172, %cst_68 {dimension_numbers = #tpu.dot_dimension_numbers<[1], [0], [0], [1], [0, 0, 1, 1], [], []>} : vector<8x128xf32>, vector<128x512xf32>, vector<8x512xf32> -> vector<8x512xf32>
    %174 = arith.addf %171, %173 : vector<8x512xf32>
    %175 = vector.extract_strided_slice %174 {offsets = [0, 0], sizes = [8, 384], strides = [1, 1]} : vector<8x512xf32> to vector<8x384xf32>
    %cst_69 = arith.constant 5.000000e-01 : f32
    %176 = vector.broadcast %cst_69 : f32 to vector<8x384xf32>
    %177 = arith.mulf %176, %175 : vector<8x384xf32>
    %178 = math.tanh %177 : vector<8x384xf32>
    %cst_70 = arith.constant 5.000000e-01 : f32
    %179 = vector.broadcast %cst_70 : f32 to vector<8x384xf32>
    %180 = arith.mulf %179, %178 : vector<8x384xf32>
    %cst_71 = arith.constant 5.000000e-01 : f32
    %181 = vector.broadcast %cst_71 : f32 to vector<8x384xf32>
    %182 = arith.addf %180, %181 : vector<8x384xf32>
    %183 = vector.extract_strided_slice %182 {offsets = [0, 0], sizes = [8, 128], strides = [1, 1]} : vector<8x384xf32> to vector<8x128xf32>
    %184 = vector.extract_strided_slice %182 {offsets = [0, 128], sizes = [8, 128], strides = [1, 1]} : vector<8x384xf32> to vector<8x128xf32>
    %185 = vector.extract_strided_slice %182 {offsets = [0, 256], sizes = [8, 128], strides = [1, 1]} : vector<8x384xf32> to vector<8x128xf32>
    %186 = vector.extract_strided_slice %174 {offsets = [0, 384], sizes = [8, 128], strides = [1, 1]} : vector<8x512xf32> to vector<8x128xf32>
    %187 = math.tanh %186 : vector<8x128xf32>
    %188 = arith.mulf %184, %136 : vector<8x128xf32>
    %189 = arith.mulf %183, %187 : vector<8x128xf32>
    %190 = arith.addf %188, %189 : vector<8x128xf32>
    %191 = math.tanh %190 : vector<8x128xf32>
    %192 = arith.mulf %185, %191 : vector<8x128xf32>
    %193 = tpu.concatenate %192, %162 in 1 : vector<8x128xf32>, vector<8x128xf32> -> vector<8x256xf32>
    %c0_72 = arith.constant 0 : index
    %c0_73 = arith.constant 0 : index
    %194 = vector.load %arg5[%c0_72, %c0_73] : memref<256x512xf32, #tpu.memory_space<vmem>>, vector<256x512xf32>
    %cst_74 = arith.constant dense<0.000000e+00> : vector<8x512xf32>
    %195 = tpu.matmul %193, %194, %cst_74 {dimension_numbers = #tpu.dot_dimension_numbers<[1], [0], [0], [1], [0, 0, 1, 1], [], []>} : vector<8x256xf32>, vector<256x512xf32>, vector<8x512xf32> -> vector<8x512xf32>
    %c0_75 = arith.constant 0 : index
    %c0_76 = arith.constant 0 : index
    %196 = vector.load %arg6[%c0_75, %c0_76] : memref<1x512xf32, #tpu.memory_space<vmem>>, vector<1x512xf32>
    %197 = vector.broadcast %196 : vector<1x512xf32> to vector<8x512xf32>
    %198 = arith.addf %195, %197 : vector<8x512xf32>
    %199 = vector.extract_strided_slice %198 {offsets = [0, 0], sizes = [8, 384], strides = [1, 1]} : vector<8x512xf32> to vector<8x384xf32>
    %cst_77 = arith.constant 5.000000e-01 : f32
    %200 = vector.broadcast %cst_77 : f32 to vector<8x384xf32>
    %201 = arith.mulf %200, %199 : vector<8x384xf32>
    %202 = math.tanh %201 : vector<8x384xf32>
    %cst_78 = arith.constant 5.000000e-01 : f32
    %203 = vector.broadcast %cst_78 : f32 to vector<8x384xf32>
    %204 = arith.mulf %203, %202 : vector<8x384xf32>
    %cst_79 = arith.constant 5.000000e-01 : f32
    %205 = vector.broadcast %cst_79 : f32 to vector<8x384xf32>
    %206 = arith.addf %204, %205 : vector<8x384xf32>
    %207 = vector.extract_strided_slice %206 {offsets = [0, 0], sizes = [8, 128], strides = [1, 1]} : vector<8x384xf32> to vector<8x128xf32>
    %208 = vector.extract_strided_slice %206 {offsets = [0, 128], sizes = [8, 128], strides = [1, 1]} : vector<8x384xf32> to vector<8x128xf32>
    %209 = vector.extract_strided_slice %206 {offsets = [0, 256], sizes = [8, 128], strides = [1, 1]} : vector<8x384xf32> to vector<8x128xf32>
    %210 = vector.extract_strided_slice %198 {offsets = [0, 384], sizes = [8, 128], strides = [1, 1]} : vector<8x512xf32> to vector<8x128xf32>
    %211 = math.tanh %210 : vector<8x128xf32>
    %212 = arith.mulf %208, %160 : vector<8x128xf32>
    %213 = arith.mulf %207, %211 : vector<8x128xf32>
    %214 = arith.addf %212, %213 : vector<8x128xf32>
    %215 = math.tanh %214 : vector<8x128xf32>
    %216 = arith.mulf %209, %215 : vector<8x128xf32>
    %c4 = arith.constant 4 : index
    %c0_80 = arith.constant 0 : index
    %c0_81 = arith.constant 0 : index
    %217 = vector.load %arg1[%c4, %c0_80, %c0_81] : memref<8x8x1xf32, #tpu.memory_space<vmem>>, vector<1x8x1xf32>
    %218 = vector.shape_cast %217 : vector<1x8x1xf32> to vector<8x1xf32>
    %c0_82 = arith.constant 0 : index
    %c0_83 = arith.constant 0 : index
    %219 = vector.load %arg2[%c0_82, %c0_83] : memref<1x512xf32, #tpu.memory_space<vmem>>, vector<1x512xf32>
    %220 = vector.broadcast %218 : vector<8x1xf32> to vector<8x512xf32>
    %221 = vector.broadcast %219 : vector<1x512xf32> to vector<8x512xf32>
    %222 = arith.mulf %220, %221 : vector<8x512xf32>
    %c0_84 = arith.constant 0 : index
    %c0_85 = arith.constant 0 : index
    %223 = vector.load %arg4[%c0_84, %c0_85] : memref<1x512xf32, #tpu.memory_space<vmem>>, vector<1x512xf32>
    %224 = vector.broadcast %223 : vector<1x512xf32> to vector<8x512xf32>
    %225 = arith.addf %222, %224 : vector<8x512xf32>
    %c0_86 = arith.constant 0 : index
    %c0_87 = arith.constant 0 : index
    %226 = vector.load %arg3[%c0_86, %c0_87] : memref<128x512xf32, #tpu.memory_space<vmem>>, vector<128x512xf32>
    %cst_88 = arith.constant dense<0.000000e+00> : vector<8x512xf32>
    %227 = tpu.matmul %192, %226, %cst_88 {dimension_numbers = #tpu.dot_dimension_numbers<[1], [0], [0], [1], [0, 0, 1, 1], [], []>} : vector<8x128xf32>, vector<128x512xf32>, vector<8x512xf32> -> vector<8x512xf32>
    %228 = arith.addf %225, %227 : vector<8x512xf32>
    %229 = vector.extract_strided_slice %228 {offsets = [0, 0], sizes = [8, 384], strides = [1, 1]} : vector<8x512xf32> to vector<8x384xf32>
    %cst_89 = arith.constant 5.000000e-01 : f32
    %230 = vector.broadcast %cst_89 : f32 to vector<8x384xf32>
    %231 = arith.mulf %230, %229 : vector<8x384xf32>
    %232 = math.tanh %231 : vector<8x384xf32>
    %cst_90 = arith.constant 5.000000e-01 : f32
    %233 = vector.broadcast %cst_90 : f32 to vector<8x384xf32>
    %234 = arith.mulf %233, %232 : vector<8x384xf32>
    %cst_91 = arith.constant 5.000000e-01 : f32
    %235 = vector.broadcast %cst_91 : f32 to vector<8x384xf32>
    %236 = arith.addf %234, %235 : vector<8x384xf32>
    %237 = vector.extract_strided_slice %236 {offsets = [0, 0], sizes = [8, 128], strides = [1, 1]} : vector<8x384xf32> to vector<8x128xf32>
    %238 = vector.extract_strided_slice %236 {offsets = [0, 128], sizes = [8, 128], strides = [1, 1]} : vector<8x384xf32> to vector<8x128xf32>
    %239 = vector.extract_strided_slice %236 {offsets = [0, 256], sizes = [8, 128], strides = [1, 1]} : vector<8x384xf32> to vector<8x128xf32>
    %240 = vector.extract_strided_slice %228 {offsets = [0, 384], sizes = [8, 128], strides = [1, 1]} : vector<8x512xf32> to vector<8x128xf32>
    %241 = math.tanh %240 : vector<8x128xf32>
    %242 = arith.mulf %238, %190 : vector<8x128xf32>
    %243 = arith.mulf %237, %241 : vector<8x128xf32>
    %244 = arith.addf %242, %243 : vector<8x128xf32>
    %245 = math.tanh %244 : vector<8x128xf32>
    %246 = arith.mulf %239, %245 : vector<8x128xf32>
    %247 = tpu.concatenate %246, %216 in 1 : vector<8x128xf32>, vector<8x128xf32> -> vector<8x256xf32>
    %c0_92 = arith.constant 0 : index
    %c0_93 = arith.constant 0 : index
    %248 = vector.load %arg5[%c0_92, %c0_93] : memref<256x512xf32, #tpu.memory_space<vmem>>, vector<256x512xf32>
    %cst_94 = arith.constant dense<0.000000e+00> : vector<8x512xf32>
    %249 = tpu.matmul %247, %248, %cst_94 {dimension_numbers = #tpu.dot_dimension_numbers<[1], [0], [0], [1], [0, 0, 1, 1], [], []>} : vector<8x256xf32>, vector<256x512xf32>, vector<8x512xf32> -> vector<8x512xf32>
    %c0_95 = arith.constant 0 : index
    %c0_96 = arith.constant 0 : index
    %250 = vector.load %arg6[%c0_95, %c0_96] : memref<1x512xf32, #tpu.memory_space<vmem>>, vector<1x512xf32>
    %251 = vector.broadcast %250 : vector<1x512xf32> to vector<8x512xf32>
    %252 = arith.addf %249, %251 : vector<8x512xf32>
    %253 = vector.extract_strided_slice %252 {offsets = [0, 0], sizes = [8, 384], strides = [1, 1]} : vector<8x512xf32> to vector<8x384xf32>
    %cst_97 = arith.constant 5.000000e-01 : f32
    %254 = vector.broadcast %cst_97 : f32 to vector<8x384xf32>
    %255 = arith.mulf %254, %253 : vector<8x384xf32>
    %256 = math.tanh %255 : vector<8x384xf32>
    %cst_98 = arith.constant 5.000000e-01 : f32
    %257 = vector.broadcast %cst_98 : f32 to vector<8x384xf32>
    %258 = arith.mulf %257, %256 : vector<8x384xf32>
    %cst_99 = arith.constant 5.000000e-01 : f32
    %259 = vector.broadcast %cst_99 : f32 to vector<8x384xf32>
    %260 = arith.addf %258, %259 : vector<8x384xf32>
    %261 = vector.extract_strided_slice %260 {offsets = [0, 0], sizes = [8, 128], strides = [1, 1]} : vector<8x384xf32> to vector<8x128xf32>
    %262 = vector.extract_strided_slice %260 {offsets = [0, 128], sizes = [8, 128], strides = [1, 1]} : vector<8x384xf32> to vector<8x128xf32>
    %263 = vector.extract_strided_slice %260 {offsets = [0, 256], sizes = [8, 128], strides = [1, 1]} : vector<8x384xf32> to vector<8x128xf32>
    %264 = vector.extract_strided_slice %252 {offsets = [0, 384], sizes = [8, 128], strides = [1, 1]} : vector<8x512xf32> to vector<8x128xf32>
    %265 = math.tanh %264 : vector<8x128xf32>
    %266 = arith.mulf %262, %214 : vector<8x128xf32>
    %267 = arith.mulf %261, %265 : vector<8x128xf32>
    %268 = arith.addf %266, %267 : vector<8x128xf32>
    %269 = math.tanh %268 : vector<8x128xf32>
    %270 = arith.mulf %263, %269 : vector<8x128xf32>
    %c5 = arith.constant 5 : index
    %c0_100 = arith.constant 0 : index
    %c0_101 = arith.constant 0 : index
    %271 = vector.load %arg1[%c5, %c0_100, %c0_101] : memref<8x8x1xf32, #tpu.memory_space<vmem>>, vector<1x8x1xf32>
    %272 = vector.shape_cast %271 : vector<1x8x1xf32> to vector<8x1xf32>
    %c0_102 = arith.constant 0 : index
    %c0_103 = arith.constant 0 : index
    %273 = vector.load %arg2[%c0_102, %c0_103] : memref<1x512xf32, #tpu.memory_space<vmem>>, vector<1x512xf32>
    %274 = vector.broadcast %272 : vector<8x1xf32> to vector<8x512xf32>
    %275 = vector.broadcast %273 : vector<1x512xf32> to vector<8x512xf32>
    %276 = arith.mulf %274, %275 : vector<8x512xf32>
    %c0_104 = arith.constant 0 : index
    %c0_105 = arith.constant 0 : index
    %277 = vector.load %arg4[%c0_104, %c0_105] : memref<1x512xf32, #tpu.memory_space<vmem>>, vector<1x512xf32>
    %278 = vector.broadcast %277 : vector<1x512xf32> to vector<8x512xf32>
    %279 = arith.addf %276, %278 : vector<8x512xf32>
    %c0_106 = arith.constant 0 : index
    %c0_107 = arith.constant 0 : index
    %280 = vector.load %arg3[%c0_106, %c0_107] : memref<128x512xf32, #tpu.memory_space<vmem>>, vector<128x512xf32>
    %cst_108 = arith.constant dense<0.000000e+00> : vector<8x512xf32>
    %281 = tpu.matmul %246, %280, %cst_108 {dimension_numbers = #tpu.dot_dimension_numbers<[1], [0], [0], [1], [0, 0, 1, 1], [], []>} : vector<8x128xf32>, vector<128x512xf32>, vector<8x512xf32> -> vector<8x512xf32>
    %282 = arith.addf %279, %281 : vector<8x512xf32>
    %283 = vector.extract_strided_slice %282 {offsets = [0, 0], sizes = [8, 384], strides = [1, 1]} : vector<8x512xf32> to vector<8x384xf32>
    %cst_109 = arith.constant 5.000000e-01 : f32
    %284 = vector.broadcast %cst_109 : f32 to vector<8x384xf32>
    %285 = arith.mulf %284, %283 : vector<8x384xf32>
    %286 = math.tanh %285 : vector<8x384xf32>
    %cst_110 = arith.constant 5.000000e-01 : f32
    %287 = vector.broadcast %cst_110 : f32 to vector<8x384xf32>
    %288 = arith.mulf %287, %286 : vector<8x384xf32>
    %cst_111 = arith.constant 5.000000e-01 : f32
    %289 = vector.broadcast %cst_111 : f32 to vector<8x384xf32>
    %290 = arith.addf %288, %289 : vector<8x384xf32>
    %291 = vector.extract_strided_slice %290 {offsets = [0, 0], sizes = [8, 128], strides = [1, 1]} : vector<8x384xf32> to vector<8x128xf32>
    %292 = vector.extract_strided_slice %290 {offsets = [0, 128], sizes = [8, 128], strides = [1, 1]} : vector<8x384xf32> to vector<8x128xf32>
    %293 = vector.extract_strided_slice %290 {offsets = [0, 256], sizes = [8, 128], strides = [1, 1]} : vector<8x384xf32> to vector<8x128xf32>
    %294 = vector.extract_strided_slice %282 {offsets = [0, 384], sizes = [8, 128], strides = [1, 1]} : vector<8x512xf32> to vector<8x128xf32>
    %295 = math.tanh %294 : vector<8x128xf32>
    %296 = arith.mulf %292, %244 : vector<8x128xf32>
    %297 = arith.mulf %291, %295 : vector<8x128xf32>
    %298 = arith.addf %296, %297 : vector<8x128xf32>
    %299 = math.tanh %298 : vector<8x128xf32>
    %300 = arith.mulf %293, %299 : vector<8x128xf32>
    %301 = tpu.concatenate %300, %270 in 1 : vector<8x128xf32>, vector<8x128xf32> -> vector<8x256xf32>
    %c0_112 = arith.constant 0 : index
    %c0_113 = arith.constant 0 : index
    %302 = vector.load %arg5[%c0_112, %c0_113] : memref<256x512xf32, #tpu.memory_space<vmem>>, vector<256x512xf32>
    %cst_114 = arith.constant dense<0.000000e+00> : vector<8x512xf32>
    %303 = tpu.matmul %301, %302, %cst_114 {dimension_numbers = #tpu.dot_dimension_numbers<[1], [0], [0], [1], [0, 0, 1, 1], [], []>} : vector<8x256xf32>, vector<256x512xf32>, vector<8x512xf32> -> vector<8x512xf32>
    %c0_115 = arith.constant 0 : index
    %c0_116 = arith.constant 0 : index
    %304 = vector.load %arg6[%c0_115, %c0_116] : memref<1x512xf32, #tpu.memory_space<vmem>>, vector<1x512xf32>
    %305 = vector.broadcast %304 : vector<1x512xf32> to vector<8x512xf32>
    %306 = arith.addf %303, %305 : vector<8x512xf32>
    %307 = vector.extract_strided_slice %306 {offsets = [0, 0], sizes = [8, 384], strides = [1, 1]} : vector<8x512xf32> to vector<8x384xf32>
    %cst_117 = arith.constant 5.000000e-01 : f32
    %308 = vector.broadcast %cst_117 : f32 to vector<8x384xf32>
    %309 = arith.mulf %308, %307 : vector<8x384xf32>
    %310 = math.tanh %309 : vector<8x384xf32>
    %cst_118 = arith.constant 5.000000e-01 : f32
    %311 = vector.broadcast %cst_118 : f32 to vector<8x384xf32>
    %312 = arith.mulf %311, %310 : vector<8x384xf32>
    %cst_119 = arith.constant 5.000000e-01 : f32
    %313 = vector.broadcast %cst_119 : f32 to vector<8x384xf32>
    %314 = arith.addf %312, %313 : vector<8x384xf32>
    %315 = vector.extract_strided_slice %314 {offsets = [0, 0], sizes = [8, 128], strides = [1, 1]} : vector<8x384xf32> to vector<8x128xf32>
    %316 = vector.extract_strided_slice %314 {offsets = [0, 128], sizes = [8, 128], strides = [1, 1]} : vector<8x384xf32> to vector<8x128xf32>
    %317 = vector.extract_strided_slice %314 {offsets = [0, 256], sizes = [8, 128], strides = [1, 1]} : vector<8x384xf32> to vector<8x128xf32>
    %318 = vector.extract_strided_slice %306 {offsets = [0, 384], sizes = [8, 128], strides = [1, 1]} : vector<8x512xf32> to vector<8x128xf32>
    %319 = math.tanh %318 : vector<8x128xf32>
    %320 = arith.mulf %316, %268 : vector<8x128xf32>
    %321 = arith.mulf %315, %319 : vector<8x128xf32>
    %322 = arith.addf %320, %321 : vector<8x128xf32>
    %323 = math.tanh %322 : vector<8x128xf32>
    %324 = arith.mulf %317, %323 : vector<8x128xf32>
    %c6 = arith.constant 6 : index
    %c0_120 = arith.constant 0 : index
    %c0_121 = arith.constant 0 : index
    %325 = vector.load %arg1[%c6, %c0_120, %c0_121] : memref<8x8x1xf32, #tpu.memory_space<vmem>>, vector<1x8x1xf32>
    %326 = vector.shape_cast %325 : vector<1x8x1xf32> to vector<8x1xf32>
    %c0_122 = arith.constant 0 : index
    %c0_123 = arith.constant 0 : index
    %327 = vector.load %arg2[%c0_122, %c0_123] : memref<1x512xf32, #tpu.memory_space<vmem>>, vector<1x512xf32>
    %328 = vector.broadcast %326 : vector<8x1xf32> to vector<8x512xf32>
    %329 = vector.broadcast %327 : vector<1x512xf32> to vector<8x512xf32>
    %330 = arith.mulf %328, %329 : vector<8x512xf32>
    %c0_124 = arith.constant 0 : index
    %c0_125 = arith.constant 0 : index
    %331 = vector.load %arg4[%c0_124, %c0_125] : memref<1x512xf32, #tpu.memory_space<vmem>>, vector<1x512xf32>
    %332 = vector.broadcast %331 : vector<1x512xf32> to vector<8x512xf32>
    %333 = arith.addf %330, %332 : vector<8x512xf32>
    %c0_126 = arith.constant 0 : index
    %c0_127 = arith.constant 0 : index
    %334 = vector.load %arg3[%c0_126, %c0_127] : memref<128x512xf32, #tpu.memory_space<vmem>>, vector<128x512xf32>
    %cst_128 = arith.constant dense<0.000000e+00> : vector<8x512xf32>
    %335 = tpu.matmul %300, %334, %cst_128 {dimension_numbers = #tpu.dot_dimension_numbers<[1], [0], [0], [1], [0, 0, 1, 1], [], []>} : vector<8x128xf32>, vector<128x512xf32>, vector<8x512xf32> -> vector<8x512xf32>
    %336 = arith.addf %333, %335 : vector<8x512xf32>
    %337 = vector.extract_strided_slice %336 {offsets = [0, 0], sizes = [8, 384], strides = [1, 1]} : vector<8x512xf32> to vector<8x384xf32>
    %cst_129 = arith.constant 5.000000e-01 : f32
    %338 = vector.broadcast %cst_129 : f32 to vector<8x384xf32>
    %339 = arith.mulf %338, %337 : vector<8x384xf32>
    %340 = math.tanh %339 : vector<8x384xf32>
    %cst_130 = arith.constant 5.000000e-01 : f32
    %341 = vector.broadcast %cst_130 : f32 to vector<8x384xf32>
    %342 = arith.mulf %341, %340 : vector<8x384xf32>
    %cst_131 = arith.constant 5.000000e-01 : f32
    %343 = vector.broadcast %cst_131 : f32 to vector<8x384xf32>
    %344 = arith.addf %342, %343 : vector<8x384xf32>
    %345 = vector.extract_strided_slice %344 {offsets = [0, 0], sizes = [8, 128], strides = [1, 1]} : vector<8x384xf32> to vector<8x128xf32>
    %346 = vector.extract_strided_slice %344 {offsets = [0, 128], sizes = [8, 128], strides = [1, 1]} : vector<8x384xf32> to vector<8x128xf32>
    %347 = vector.extract_strided_slice %344 {offsets = [0, 256], sizes = [8, 128], strides = [1, 1]} : vector<8x384xf32> to vector<8x128xf32>
    %348 = vector.extract_strided_slice %336 {offsets = [0, 384], sizes = [8, 128], strides = [1, 1]} : vector<8x512xf32> to vector<8x128xf32>
    %349 = math.tanh %348 : vector<8x128xf32>
    %350 = arith.mulf %346, %298 : vector<8x128xf32>
    %351 = arith.mulf %345, %349 : vector<8x128xf32>
    %352 = arith.addf %350, %351 : vector<8x128xf32>
    %353 = math.tanh %352 : vector<8x128xf32>
    %354 = arith.mulf %347, %353 : vector<8x128xf32>
    %355 = tpu.concatenate %354, %324 in 1 : vector<8x128xf32>, vector<8x128xf32> -> vector<8x256xf32>
    %c0_132 = arith.constant 0 : index
    %c0_133 = arith.constant 0 : index
    %356 = vector.load %arg5[%c0_132, %c0_133] : memref<256x512xf32, #tpu.memory_space<vmem>>, vector<256x512xf32>
    %cst_134 = arith.constant dense<0.000000e+00> : vector<8x512xf32>
    %357 = tpu.matmul %355, %356, %cst_134 {dimension_numbers = #tpu.dot_dimension_numbers<[1], [0], [0], [1], [0, 0, 1, 1], [], []>} : vector<8x256xf32>, vector<256x512xf32>, vector<8x512xf32> -> vector<8x512xf32>
    %c0_135 = arith.constant 0 : index
    %c0_136 = arith.constant 0 : index
    %358 = vector.load %arg6[%c0_135, %c0_136] : memref<1x512xf32, #tpu.memory_space<vmem>>, vector<1x512xf32>
    %359 = vector.broadcast %358 : vector<1x512xf32> to vector<8x512xf32>
    %360 = arith.addf %357, %359 : vector<8x512xf32>
    %361 = vector.extract_strided_slice %360 {offsets = [0, 0], sizes = [8, 384], strides = [1, 1]} : vector<8x512xf32> to vector<8x384xf32>
    %cst_137 = arith.constant 5.000000e-01 : f32
    %362 = vector.broadcast %cst_137 : f32 to vector<8x384xf32>
    %363 = arith.mulf %362, %361 : vector<8x384xf32>
    %364 = math.tanh %363 : vector<8x384xf32>
    %cst_138 = arith.constant 5.000000e-01 : f32
    %365 = vector.broadcast %cst_138 : f32 to vector<8x384xf32>
    %366 = arith.mulf %365, %364 : vector<8x384xf32>
    %cst_139 = arith.constant 5.000000e-01 : f32
    %367 = vector.broadcast %cst_139 : f32 to vector<8x384xf32>
    %368 = arith.addf %366, %367 : vector<8x384xf32>
    %369 = vector.extract_strided_slice %368 {offsets = [0, 0], sizes = [8, 128], strides = [1, 1]} : vector<8x384xf32> to vector<8x128xf32>
    %370 = vector.extract_strided_slice %368 {offsets = [0, 128], sizes = [8, 128], strides = [1, 1]} : vector<8x384xf32> to vector<8x128xf32>
    %371 = vector.extract_strided_slice %368 {offsets = [0, 256], sizes = [8, 128], strides = [1, 1]} : vector<8x384xf32> to vector<8x128xf32>
    %372 = vector.extract_strided_slice %360 {offsets = [0, 384], sizes = [8, 128], strides = [1, 1]} : vector<8x512xf32> to vector<8x128xf32>
    %373 = math.tanh %372 : vector<8x128xf32>
    %374 = arith.mulf %370, %322 : vector<8x128xf32>
    %375 = arith.mulf %369, %373 : vector<8x128xf32>
    %376 = arith.addf %374, %375 : vector<8x128xf32>
    %377 = math.tanh %376 : vector<8x128xf32>
    %378 = arith.mulf %371, %377 : vector<8x128xf32>
    %c7 = arith.constant 7 : index
    %c0_140 = arith.constant 0 : index
    %c0_141 = arith.constant 0 : index
    %379 = vector.load %arg1[%c7, %c0_140, %c0_141] : memref<8x8x1xf32, #tpu.memory_space<vmem>>, vector<1x8x1xf32>
    %380 = vector.shape_cast %379 : vector<1x8x1xf32> to vector<8x1xf32>
    %c0_142 = arith.constant 0 : index
    %c0_143 = arith.constant 0 : index
    %381 = vector.load %arg2[%c0_142, %c0_143] : memref<1x512xf32, #tpu.memory_space<vmem>>, vector<1x512xf32>
    %382 = vector.broadcast %380 : vector<8x1xf32> to vector<8x512xf32>
    %383 = vector.broadcast %381 : vector<1x512xf32> to vector<8x512xf32>
    %384 = arith.mulf %382, %383 : vector<8x512xf32>
    %c0_144 = arith.constant 0 : index
    %c0_145 = arith.constant 0 : index
    %385 = vector.load %arg4[%c0_144, %c0_145] : memref<1x512xf32, #tpu.memory_space<vmem>>, vector<1x512xf32>
    %386 = vector.broadcast %385 : vector<1x512xf32> to vector<8x512xf32>
    %387 = arith.addf %384, %386 : vector<8x512xf32>
    %c0_146 = arith.constant 0 : index
    %c0_147 = arith.constant 0 : index
    %388 = vector.load %arg3[%c0_146, %c0_147] : memref<128x512xf32, #tpu.memory_space<vmem>>, vector<128x512xf32>
    %cst_148 = arith.constant dense<0.000000e+00> : vector<8x512xf32>
    %389 = tpu.matmul %354, %388, %cst_148 {dimension_numbers = #tpu.dot_dimension_numbers<[1], [0], [0], [1], [0, 0, 1, 1], [], []>} : vector<8x128xf32>, vector<128x512xf32>, vector<8x512xf32> -> vector<8x512xf32>
    %390 = arith.addf %387, %389 : vector<8x512xf32>
    %391 = vector.extract_strided_slice %390 {offsets = [0, 0], sizes = [8, 384], strides = [1, 1]} : vector<8x512xf32> to vector<8x384xf32>
    %cst_149 = arith.constant 5.000000e-01 : f32
    %392 = vector.broadcast %cst_149 : f32 to vector<8x384xf32>
    %393 = arith.mulf %392, %391 : vector<8x384xf32>
    %394 = math.tanh %393 : vector<8x384xf32>
    %cst_150 = arith.constant 5.000000e-01 : f32
    %395 = vector.broadcast %cst_150 : f32 to vector<8x384xf32>
    %396 = arith.mulf %395, %394 : vector<8x384xf32>
    %cst_151 = arith.constant 5.000000e-01 : f32
    %397 = vector.broadcast %cst_151 : f32 to vector<8x384xf32>
    %398 = arith.addf %396, %397 : vector<8x384xf32>
    %399 = vector.extract_strided_slice %398 {offsets = [0, 0], sizes = [8, 128], strides = [1, 1]} : vector<8x384xf32> to vector<8x128xf32>
    %400 = vector.extract_strided_slice %398 {offsets = [0, 128], sizes = [8, 128], strides = [1, 1]} : vector<8x384xf32> to vector<8x128xf32>
    %401 = vector.extract_strided_slice %398 {offsets = [0, 256], sizes = [8, 128], strides = [1, 1]} : vector<8x384xf32> to vector<8x128xf32>
    %402 = vector.extract_strided_slice %390 {offsets = [0, 384], sizes = [8, 128], strides = [1, 1]} : vector<8x512xf32> to vector<8x128xf32>
    %403 = math.tanh %402 : vector<8x128xf32>
    %404 = arith.mulf %400, %352 : vector<8x128xf32>
    %405 = arith.mulf %399, %403 : vector<8x128xf32>
    %406 = arith.addf %404, %405 : vector<8x128xf32>
    %407 = math.tanh %406 : vector<8x128xf32>
    %408 = arith.mulf %401, %407 : vector<8x128xf32>
    %409 = tpu.concatenate %408, %378 in 1 : vector<8x128xf32>, vector<8x128xf32> -> vector<8x256xf32>
    %c0_152 = arith.constant 0 : index
    %c0_153 = arith.constant 0 : index
    %410 = vector.load %arg5[%c0_152, %c0_153] : memref<256x512xf32, #tpu.memory_space<vmem>>, vector<256x512xf32>
    %cst_154 = arith.constant dense<0.000000e+00> : vector<8x512xf32>
    %411 = tpu.matmul %409, %410, %cst_154 {dimension_numbers = #tpu.dot_dimension_numbers<[1], [0], [0], [1], [0, 0, 1, 1], [], []>} : vector<8x256xf32>, vector<256x512xf32>, vector<8x512xf32> -> vector<8x512xf32>
    %c0_155 = arith.constant 0 : index
    %c0_156 = arith.constant 0 : index
    %412 = vector.load %arg6[%c0_155, %c0_156] : memref<1x512xf32, #tpu.memory_space<vmem>>, vector<1x512xf32>
    %413 = vector.broadcast %412 : vector<1x512xf32> to vector<8x512xf32>
    %414 = arith.addf %411, %413 : vector<8x512xf32>
    %415 = vector.extract_strided_slice %414 {offsets = [0, 0], sizes = [8, 384], strides = [1, 1]} : vector<8x512xf32> to vector<8x384xf32>
    %cst_157 = arith.constant 5.000000e-01 : f32
    %416 = vector.broadcast %cst_157 : f32 to vector<8x384xf32>
    %417 = arith.mulf %416, %415 : vector<8x384xf32>
    %418 = math.tanh %417 : vector<8x384xf32>
    %cst_158 = arith.constant 5.000000e-01 : f32
    %419 = vector.broadcast %cst_158 : f32 to vector<8x384xf32>
    %420 = arith.mulf %419, %418 : vector<8x384xf32>
    %cst_159 = arith.constant 5.000000e-01 : f32
    %421 = vector.broadcast %cst_159 : f32 to vector<8x384xf32>
    %422 = arith.addf %420, %421 : vector<8x384xf32>
    %423 = vector.extract_strided_slice %422 {offsets = [0, 0], sizes = [8, 128], strides = [1, 1]} : vector<8x384xf32> to vector<8x128xf32>
    %424 = vector.extract_strided_slice %422 {offsets = [0, 128], sizes = [8, 128], strides = [1, 1]} : vector<8x384xf32> to vector<8x128xf32>
    %425 = vector.extract_strided_slice %422 {offsets = [0, 256], sizes = [8, 128], strides = [1, 1]} : vector<8x384xf32> to vector<8x128xf32>
    %426 = vector.extract_strided_slice %414 {offsets = [0, 384], sizes = [8, 128], strides = [1, 1]} : vector<8x512xf32> to vector<8x128xf32>
    %427 = math.tanh %426 : vector<8x128xf32>
    %428 = arith.mulf %424, %376 : vector<8x128xf32>
    %429 = arith.mulf %423, %427 : vector<8x128xf32>
    %430 = arith.addf %428, %429 : vector<8x128xf32>
    %431 = math.tanh %430 : vector<8x128xf32>
    %432 = arith.mulf %425, %431 : vector<8x128xf32>
    %c0_160 = arith.constant 0 : index
    %c0_161 = arith.constant 0 : index
    %433 = vector.load %arg7[%c0_160, %c0_161] : memref<128x1xf32, #tpu.memory_space<vmem>>, vector<128x1xf32>
    %cst_162 = arith.constant dense<0.000000e+00> : vector<8x1xf32>
    %434 = tpu.matmul %432, %433, %cst_162 {dimension_numbers = #tpu.dot_dimension_numbers<[1], [0], [0], [1], [0, 0, 1, 1], [], []>} : vector<8x128xf32>, vector<128x1xf32>, vector<8x1xf32> -> vector<8x1xf32>
    %c0_163 = arith.constant 0 : index
    %c0_164 = arith.constant 0 : index
    %435 = vector.load %arg8[%c0_163, %c0_164] : memref<1x1xf32, #tpu.memory_space<vmem>>, vector<1x1xf32>
    %436 = vector.broadcast %435 : vector<1x1xf32> to vector<8x1xf32>
    %437 = arith.addf %434, %436 : vector<8x1xf32>
    %c0_165 = arith.constant 0 : index
    %c0_166 = arith.constant 0 : index
    %438 = vector.load %arg9[%c0_165, %c0_166] : memref<8x1xf32, #tpu.memory_space<vmem>>, vector<8x1xf32>
    tpu.vector_store %arg9[%c0_165, %c0_166], %437 {strides = array<i32>} : memref<8x1xf32, #tpu.memory_space<vmem>>, vector<8x1xf32>,
    return
  }
  func.func @transform_0(%arg0: i32) -> (i32, i32, i32) {
    %c0_i32 = arith.constant 0 : i32
    %c0_i32_0 = arith.constant 0 : i32
    %c0_i32_1 = arith.constant 0 : i32
    return %c0_i32, %arg0, %c0_i32_0 : i32, i32, i32
  }
  func.func @transform_1(%arg0: i32) -> (i32, i32) {
    %c0_i32 = arith.constant 0 : i32
    %c0_i32_0 = arith.constant 0 : i32
    %c0_i32_1 = arith.constant 0 : i32
    return %c0_i32, %c0_i32_0 : i32, i32
  }
  func.func @transform_2(%arg0: i32) -> (i32, i32) {
    %c0_i32 = arith.constant 0 : i32
    %c0_i32_0 = arith.constant 0 : i32
    %c0_i32_1 = arith.constant 0 : i32
    return %c0_i32, %c0_i32_0 : i32, i32
  }
  func.func @transform_3(%arg0: i32) -> (i32, i32) {
    %c0_i32 = arith.constant 0 : i32
    %c0_i32_0 = arith.constant 0 : i32
    %c0_i32_1 = arith.constant 0 : i32
    return %c0_i32, %c0_i32_0 : i32, i32
  }
  func.func @transform_4(%arg0: i32) -> (i32, i32) {
    %c0_i32 = arith.constant 0 : i32
    %c0_i32_0 = arith.constant 0 : i32
    %c0_i32_1 = arith.constant 0 : i32
    return %c0_i32, %c0_i32_0 : i32, i32
  }
  func.func @transform_5(%arg0: i32) -> (i32, i32) {
    %c0_i32 = arith.constant 0 : i32
    %c0_i32_0 = arith.constant 0 : i32
    %c0_i32_1 = arith.constant 0 : i32
    return %c0_i32, %c0_i32_0 : i32, i32
  }
  func.func @transform_6(%arg0: i32) -> (i32, i32) {
    %c0_i32 = arith.constant 0 : i32
    %c0_i32_0 = arith.constant 0 : i32
    %c0_i32_1 = arith.constant 0 : i32
    return %c0_i32, %c0_i32_0 : i32, i32
  }
  func.func @transform_7(%arg0: i32) -> (i32, i32) {
    %c0_i32 = arith.constant 0 : i32
    %c0_i32_0 = arith.constant 0 : i32
    %c0_i32_1 = arith.constant 0 : i32
    return %c0_i32, %c0_i32_0 : i32, i32
  }
  func.func @transform_8(%arg0: i32) -> (i32, i32) {
    %c0_i32 = arith.constant 0 : i32
    %c0_i32_0 = arith.constant 0 : i32
    return %arg0, %c0_i32 : i32, i32
  }
}

</mosaic_0001>

<llo_original>
// kernel: tpu_custom_call.1
$region0: #{tpu_custom_call.1}
  #allocation0 [shape = 'u32[]', space=smem, size = 0x4, offset = 0x4, fixed_abs, tag = 'smem constant byte address 0x4 - core index']
  #allocation1 [shape = 'u32[72,128]{1,0:T(1,128)}', space=vmem, size = 0x9000, scoped, tag = 'internal scratch']
  #allocation2 [shape = 'f32[1,1]{1,0:T(1,128)S(1)}', space=vmem, size = 0x200, scoped, tag = 'scoped memory for tpu_custom_call.1']
  %s0 = inlined_call_operand.vmem [shape: f32[8,8,1], index: 0, kind: input, shape index: {}]
  %s1 = inlined_call_operand.vmem [shape: f32[1,512], index: 1, kind: input, shape index: {}]
  %s2 = inlined_call_operand.hbm [shape: f32[128,512], index: 2, kind: input, shape index: {}]
  %s3 = inlined_call_operand.vmem [shape: f32[1,512], index: 3, kind: input, shape index: {}]
  %s4 = inlined_call_operand.hbm [shape: f32[256,512], index: 4, kind: input, shape index: {}]
  %s5 = inlined_call_operand.vmem [shape: f32[1,512], index: 5, kind: input, shape index: {}]
  %s6 = inlined_call_operand.vmem [shape: f32[128,1], index: 6, kind: input, shape index: {}]
  %s7 = inlined_call_operand.<no memory space> [shape: f32[1,1], index: 7, kind: input, shape index: {}]
  %s8 = inlined_call_operand.vmem [shape: f32[8,1], index: 8, kind: output, shape index: {}]
  %s9 = sld [smem:[#allocation0]]
  $region50: #{tpu_custom_call.1} parent=0
    _
  %s11 = ssub.s32 1, %s9
  %s12 = scalar_select 0, %s11, %s9
  %v13 = vstv %s7
  %14 = vst [vmem:[#allocation2] sm:$0x1] %v13
  $region1: #{tpu_custom_call.1} parent=0
    #allocation3 [shape = 'u8[262144]{0}', space=vmem, size = 0x40000, scoped, tag = 'input window, operand 2, single buffered']
    #allocation4 [shape = 's32[1]{0}', space=sflag, size = 0x4, scoped, tag = 'scoped memory for tpu_custom_call.1']
    #allocation5 [shape = 'u8[524288]{0}', space=vmem, size = 0x80000, scoped, tag = 'input window, operand 4, single buffered']
    #allocation6 [shape = 's32[1]{0}', space=sflag, size = 0x4, scoped, tag = 'scoped memory for tpu_custom_call.1']
    %15 = vsyncpa [#allocation4], 0
    %16 = vsyncpa [#allocation6], 0
    // Predicated region
    $region2: #{tpu_custom_call.1} parent=1 // pred_check
      _
    $region3: #{tpu_custom_call.1} parent=1 // pred_check_branch
      %18 = sbr.rel (0) target = $region5
    $region4: #{tpu_custom_call.1} parent=1 // pred_region
      _
    $region5: #{tpu_custom_call.1} parent=1 // pred_fallthru
      _
    // Predicated region
    $region6: #{tpu_custom_call.1} parent=1 // pred_check
      _
    $region7: #{tpu_custom_call.1} parent=1 // pred_check_branch
      %20 = sbr.rel (0) target = $region9
    $region8: #{tpu_custom_call.1} parent=1 // pred_region
      _
    $region9: #{tpu_custom_call.1} parent=1 // pred_fallthru
      _
    // Predicated region
    $region10: #{tpu_custom_call.1} parent=1 // pred_check
      _
    $region11: #{tpu_custom_call.1} parent=1 // pred_check_branch
      %22 = sbr.rel (0) target = $region13
    $region12: #{tpu_custom_call.1} parent=1 // pred_region
      %24 = vsyncadd [#allocation4], 0
      %s25 = sshll.u32 %s2, 4
      %s26 = int_to_ptr.hbm [resolvable:$true] %s25
      %s27 = sshll.u32 [#allocation3], 4
      %s28 = int_to_ptr.vmem [resolvable:$true] %s27
      %33 = dma.hbm_to_vmem [thread:$0]  %s26, 8192, %s28, [#allocation4], 512, 512, 32
    $region13: #{tpu_custom_call.1} parent=1 // pred_fallthru
      _
    // Predicated region
    $region14: #{tpu_custom_call.1} parent=1 // pred_check
      _
    $region15: #{tpu_custom_call.1} parent=1 // pred_check_branch
      %35 = sbr.rel (0) target = $region17
    $region16: #{tpu_custom_call.1} parent=1 // pred_region
      _
    $region17: #{tpu_custom_call.1} parent=1 // pred_fallthru
      _
    // Predicated region
    $region18: #{tpu_custom_call.1} parent=1 // pred_check
      _
    $region19: #{tpu_custom_call.1} parent=1 // pred_check_branch
      %37 = sbr.rel (0) target = $region21
    $region20: #{tpu_custom_call.1} parent=1 // pred_region
      %39 = vsyncadd [#allocation6], 0
      %s40 = sshll.u32 %s4, 4
      %s41 = int_to_ptr.hbm [resolvable:$true] %s40
      %s42 = sshll.u32 [#allocation5], 4
      %s43 = int_to_ptr.vmem [resolvable:$true] %s42
      %48 = dma.hbm_to_vmem [thread:$0]  %s41, 16384, %s43, [#allocation6], 512, 512, 32
    $region21: #{tpu_custom_call.1} parent=1 // pred_fallthru
      _
    // Predicated region
    $region22: #{tpu_custom_call.1} parent=1 // pred_check
      _
    $region23: #{tpu_custom_call.1} parent=1 // pred_check_branch
      %50 = sbr.rel (0) target = $region25
    $region24: #{tpu_custom_call.1} parent=1 // pred_region
      _
    $region25: #{tpu_custom_call.1} parent=1 // pred_fallthru
      _
    // Predicated region
    $region26: #{tpu_custom_call.1} parent=1 // pred_check
      _
    $region27: #{tpu_custom_call.1} parent=1 // pred_check_branch
      %52 = sbr.rel (0) target = $region29
    $region28: #{tpu_custom_call.1} parent=1 // pred_region
      _
    $region29: #{tpu_custom_call.1} parent=1 // pred_fallthru
      _
    // Predicated region
    $region30: #{tpu_custom_call.1} parent=1 // pred_check
      _
    $region31: #{tpu_custom_call.1} parent=1 // pred_check_branch
      %54 = sbr.rel (0) target = $region33
    $region32: #{tpu_custom_call.1} parent=1 // pred_region
      _
    $region33: #{tpu_custom_call.1} parent=1 // pred_fallthru
      _
    // Predicated region
    $region34: #{tpu_custom_call.1} parent=1 // pred_check
      _
    $region35: #{tpu_custom_call.1} parent=1 // pred_check_branch
      %56 = sbr.rel (0) target = $region37
    $region36: #{tpu_custom_call.1} parent=1 // pred_region
      %58 = dma.done [#allocation4], 8192
    $region37: #{tpu_custom_call.1} parent=1 // pred_fallthru
      _
    // Predicated region
    $region38: #{tpu_custom_call.1} parent=1 // pred_check
      _
    $region39: #{tpu_custom_call.1} parent=1 // pred_check_branch
      %60 = sbr.rel (0) target = $region41
    $region40: #{tpu_custom_call.1} parent=1 // pred_region
      %62 = dma.done [#allocation6], 16384
    $region41: #{tpu_custom_call.1} parent=1 // pred_fallthru
      _
    %v63 = vld [vmem:[%s0] sm:$0xff]
    %v64 = vld [vmem:[%s1] sm:$0xf]
    %66 = vset.pattern.permute.xlu0 0
    %67 = vperm.xlu0 %66, %v63
    %v68 = vpop.permute.xlu0 %67
    %v71 = vperm.slane %v64, 0
    %v72 = vperm.slane %v64, 1
    %v73 = vperm.slane %v64, 2
    %v74 = vperm.slane %v64, 3
    %v79 = vmul.f32 %v68, %v71
    %v80 = vmul.f32 %v68, %v72
    %v81 = vmul.f32 %v68, %v73
    %v82 = vmul.f32 %v68, %v74
    %v83 = vld [vmem:[%s3] sm:$0xf]
    %v85 = vperm.slane %v83, 0
    %v86 = vperm.slane %v83, 1
    %v87 = vperm.slane %v83, 2
    %v88 = vperm.slane %v83, 3
    %v93 = vadd.f32 %v79, %v85
    %v94 = vadd.f32 %v80, %v86
    %v95 = vadd.f32 %v81, %v87
    %v96 = vadd.f32 %v82, %v88
    %v97 = vld [vmem:[#allocation3] sm:$0xff]
    %v98 = vld [vmem:[#allocation3 + $0x8] sm:$0xff]
    %v99 = vld [vmem:[#allocation3 + $0x10] sm:$0xff]
    %v100 = vld [vmem:[#allocation3 + $0x18] sm:$0xff]
    %v101 = vld [vmem:[#allocation3 + $0x20] sm:$0xff]
    %v102 = vld [vmem:[#allocation3 + $0x28] sm:$0xff]
    %v103 = vld [vmem:[#allocation3 + $0x30] sm:$0xff]
    %v104 = vld [vmem:[#allocation3 + $0x38] sm:$0xff]
    %v105 = vld [vmem:[#allocation3 + $0x40] sm:$0xff]
    %v106 = vld [vmem:[#allocation3 + $0x48] sm:$0xff]
    %v107 = vld [vmem:[#allocation3 + $0x50] sm:$0xff]
    %v108 = vld [vmem:[#allocation3 + $0x58] sm:$0xff]
    %v109 = vld [vmem:[#allocation3 + $0x60] sm:$0xff]
    %v110 = vld [vmem:[#allocation3 + $0x68] sm:$0xff]
    %v111 = vld [vmem:[#allocation3 + $0x70] sm:$0xff]
    %v112 = vld [vmem:[#allocation3 + $0x78] sm:$0xff]
    %v113 = vld [vmem:[#allocation3 + $0x80] sm:$0xff]
    %v114 = vld [vmem:[#allocation3 + $0x88] sm:$0xff]
    %v115 = vld [vmem:[#allocation3 + $0x90] sm:$0xff]
    %v116 = vld [vmem:[#allocation3 + $0x98] sm:$0xff]
    %v117 = vld [vmem:[#allocation3 + $0xa0] sm:$0xff]
    %v118 = vld [vmem:[#allocation3 + $0xa8] sm:$0xff]
    %v119 = vld [vmem:[#allocation3 + $0xb0] sm:$0xff]
    %v120 = vld [vmem:[#allocation3 + $0xb8] sm:$0xff]
    %v121 = vld [vmem:[#allocation3 + $0xc0] sm:$0xff]
    %v122 = vld [vmem:[#allocation3 + $0xc8] sm:$0xff]
    %v123 = vld [vmem:[#allocation3 + $0xd0] sm:$0xff]
    %v124 = vld [vmem:[#allocation3 + $0xd8] sm:$0xff]
    %v125 = vld [vmem:[#allocation3 + $0xe0] sm:$0xff]
    %v126 = vld [vmem:[#allocation3 + $0xe8] sm:$0xff]
    %v127 = vld [vmem:[#allocation3 + $0xf0] sm:$0xff]
    %v128 = vld [vmem:[#allocation3 + $0xf8] sm:$0xff]
    %v129 = vld [vmem:[#allocation3 + $0x100] sm:$0xff]
    %v130 = vld [vmem:[#allocation3 + $0x108] sm:$0xff]
    %v131 = vld [vmem:[#allocation3 + $0x110] sm:$0xff]
    %v132 = vld [vmem:[#allocation3 + $0x118] sm:$0xff]
    %v133 = vld [vmem:[#allocation3 + $0x120] sm:$0xff]
    %v134 = vld [vmem:[#allocation3 + $0x128] sm:$0xff]
    %v135 = vld [vmem:[#allocation3 + $0x130] sm:$0xff]
    %v136 = vld [vmem:[#allocation3 + $0x138] sm:$0xff]
    %v137 = vld [vmem:[#allocation3 + $0x140] sm:$0xff]
    %v138 = vld [vmem:[#allocation3 + $0x148] sm:$0xff]
    %v139 = vld [vmem:[#allocation3 + $0x150] sm:$0xff]
    %v140 = vld [vmem:[#allocation3 + $0x158] sm:$0xff]
    %v141 = vld [vmem:[#allocation3 + $0x160] sm:$0xff]
    %v142 = vld [vmem:[#allocation3 + $0x168] sm:$0xff]
    %v143 = vld [vmem:[#allocation3 + $0x170] sm:$0xff]
    %v144 = vld [vmem:[#allocation3 + $0x178] sm:$0xff]
    %v145 = vld [vmem:[#allocation3 + $0x180] sm:$0xff]
    %v146 = vld [vmem:[#allocation3 + $0x188] sm:$0xff]
    %v147 = vld [vmem:[#allocation3 + $0x190] sm:$0xff]
    %v148 = vld [vmem:[#allocation3 + $0x198] sm:$0xff]
    %v149 = vld [vmem:[#allocation3 + $0x1a0] sm:$0xff]
    %v150 = vld [vmem:[#allocation3 + $0x1a8] sm:$0xff]
    %v151 = vld [vmem:[#allocation3 + $0x1b0] sm:$0xff]
    %v152 = vld [vmem:[#allocation3 + $0x1b8] sm:$0xff]
    %v153 = vld [vmem:[#allocation3 + $0x1c0] sm:$0xff]
    %v154 = vld [vmem:[#allocation3 + $0x1c8] sm:$0xff]
    %v155 = vld [vmem:[#allocation3 + $0x1d0] sm:$0xff]
    %v156 = vld [vmem:[#allocation3 + $0x1d8] sm:$0xff]
    %v157 = vld [vmem:[#allocation3 + $0x1e0] sm:$0xff]
    %v158 = vld [vmem:[#allocation3 + $0x1e8] sm:$0xff]
    %v159 = vld [vmem:[#allocation3 + $0x1f0] sm:$0xff]
    %v160 = vld [vmem:[#allocation3 + $0x1f8] sm:$0xff]
    %161 = vmatpush.msra.mxu0 %v157
    %162 = vmatpush.msra.mxu0 %v153
    %163 = vmatpush.msra.mxu0 %v149
    %164 = vmatpush.msra.mxu0 %v145
    %165 = vmatpush.msra.mxu0 %v141
    %166 = vmatpush.msra.mxu0 %v137
    %167 = vmatpush.msra.mxu0 %v133
    %168 = vmatpush.msra.mxu0 %v129
    %169 = vmatpush.msra.mxu0 %v125
    %170 = vmatpush.msra.mxu0 %v121
    %171 = vmatpush.msra.mxu0 %v117
    %172 = vmatpush.msra.mxu0 %v113
    %173 = vmatpush.msra.mxu0 %v109
    %174 = vmatpush.msra.mxu0 %v105
    %175 = vmatpush.msra.mxu0 %v101
    %176 = vmatpush.msra.mxu0 %v97
    %177 = vmatmul.f32.gmra.mxu0 0.0
    %v178 = vpop.f32.mrf.mxu0
    %v179 = vadd.f32 0.0, %v178
    %180 = vdwg.mxu0
    %181 = vmatpush.msra.mxu0 %v158
    %182 = vmatpush.msra.mxu0 %v154
    %183 = vmatpush.msra.mxu0 %v150
    %184 = vmatpush.msra.mxu0 %v146
    %185 = vmatpush.msra.mxu0 %v142
    %186 = vmatpush.msra.mxu0 %v138
    %187 = vmatpush.msra.mxu0 %v134
    %188 = vmatpush.msra.mxu0 %v130
    %189 = vmatpush.msra.mxu0 %v126
    %190 = vmatpush.msra.mxu0 %v122
    %191 = vmatpush.msra.mxu0 %v118
    %192 = vmatpush.msra.mxu0 %v114
    %193 = vmatpush.msra.mxu0 %v110
    %194 = vmatpush.msra.mxu0 %v106
    %195 = vmatpush.msra.mxu0 %v102
    %196 = vmatpush.msra.mxu0 %v98
    %197 = vmatmul.f32.gmra.mxu0 0.0
    %v198 = vpop.f32.mrf.mxu0
    %v199 = vadd.f32 0.0, %v198
    %200 = vdwg.mxu0
    %201 = vmatpush.msra.mxu0 %v159
    %202 = vmatpush.msra.mxu0 %v155
    %203 = vmatpush.msra.mxu0 %v151
    %204 = vmatpush.msra.mxu0 %v147
    %205 = vmatpush.msra.mxu0 %v143
    %206 = vmatpush.msra.mxu0 %v139
    %207 = vmatpush.msra.mxu0 %v135
    %208 = vmatpush.msra.mxu0 %v131
    %209 = vmatpush.msra.mxu0 %v127
    %210 = vmatpush.msra.mxu0 %v123
    %211 = vmatpush.msra.mxu0 %v119
    %212 = vmatpush.msra.mxu0 %v115
    %213 = vmatpush.msra.mxu0 %v111
    %214 = vmatpush.msra.mxu0 %v107
    %215 = vmatpush.msra.mxu0 %v103
    %216 = vmatpush.msra.mxu0 %v99
    %217 = vmatmul.f32.gmra.mxu0 0.0
    %v218 = vpop.f32.mrf.mxu0
    %v219 = vadd.f32 0.0, %v218
    %220 = vdwg.mxu0
    %221 = vmatpush.msra.mxu0 %v160
    %222 = vmatpush.msra.mxu0 %v156
    %223 = vmatpush.msra.mxu0 %v152
    %224 = vmatpush.msra.mxu0 %v148
    %225 = vmatpush.msra.mxu0 %v144
    %226 = vmatpush.msra.mxu0 %v140
    %227 = vmatpush.msra.mxu0 %v136
    %228 = vmatpush.msra.mxu0 %v132
    %229 = vmatpush.msra.mxu0 %v128
    %230 = vmatpush.msra.mxu0 %v124
    %231 = vmatpush.msra.mxu0 %v120
    %232 = vmatpush.msra.mxu0 %v116
    %233 = vmatpush.msra.mxu0 %v112
    %234 = vmatpush.msra.mxu0 %v108
    %235 = vmatpush.msra.mxu0 %v104
    %236 = vmatpush.msra.mxu0 %v100
    %237 = vmatmul.f32.gmra.mxu0 0.0
    %v238 = vpop.f32.mrf.mxu0
    %v239 = vadd.f32 0.0, %v238
    %240 = vdwg.mxu0
    %v241 = vadd.f32 %v93, %v179
    %v242 = vadd.f32 %v94, %v199
    %v243 = vadd.f32 %v95, %v219
    %v244 = vadd.f32 %v96, %v239
    %v245 = vmul.f32 %v241, 0.5
    %v246 = vmul.f32 %v242, 0.5
    %v247 = vmul.f32 %v243, 0.5
    %v248 = vtanh.pop %v245
    %v249 = vtanh.pop %v246
    %v250 = vtanh.pop %v247
    %v251 = vmul.f32 %v248, 0.5
    %v252 = vmul.f32 %v249, 0.5
    %v253 = vmul.f32 %v250, 0.5
    %v254 = vadd.f32 %v251, 0.5
    %v255 = vadd.f32 %v252, 0.5
    %v256 = vadd.f32 %v253, 0.5
    %v257 = vtanh.pop %v244
    %v258 = vmul.f32 %v255, 0.0
    %v259 = vmul.f32 %v254, %v257
    %v260 = vadd.f32 %v258, %v259
    %v261 = vtanh.pop %v260
    %v262 = vmul.f32 %v256, %v261
    %v263 = vld [vmem:[#allocation5] sm:$0xff]
    %v264 = vld [vmem:[#allocation5 + $0x8] sm:$0xff]
    %v265 = vld [vmem:[#allocation5 + $0x10] sm:$0xff]
    %v266 = vld [vmem:[#allocation5 + $0x18] sm:$0xff]
    %v267 = vld [vmem:[#allocation5 + $0x20] sm:$0xff]
    %v268 = vld [vmem:[#allocation5 + $0x28] sm:$0xff]
    %v269 = vld [vmem:[#allocation5 + $0x30] sm:$0xff]
    %v270 = vld [vmem:[#allocation5 + $0x38] sm:$0xff]
    %v271 = vld [vmem:[#allocation5 + $0x40] sm:$0xff]
    %v272 = vld [vmem:[#allocation5 + $0x48] sm:$0xff]
    %v273 = vld [vmem:[#allocation5 + $0x50] sm:$0xff]
    %v274 = vld [vmem:[#allocation5 + $0x58] sm:$0xff]
    %v275 = vld [vmem:[#allocation5 + $0x60] sm:$0xff]
    %v276 = vld [vmem:[#allocation5 + $0x68] sm:$0xff]
    %v277 = vld [vmem:[#allocation5 + $0x70] sm:$0xff]
    %v278 = vld [vmem:[#allocation5 + $0x78] sm:$0xff]
    %v279 = vld [vmem:[#allocation5 + $0x80] sm:$0xff]
    %v280 = vld [vmem:[#allocation5 + $0x88] sm:$0xff]
    %v281 = vld [vmem:[#allocation5 + $0x90] sm:$0xff]
    %v282 = vld [vmem:[#allocation5 + $0x98] sm:$0xff]
    %v283 = vld [vmem:[#allocation5 + $0xa0] sm:$0xff]
    %v284 = vld [vmem:[#allocation5 + $0xa8] sm:$0xff]
    %v285 = vld [vmem:[#allocation5 + $0xb0] sm:$0xff]
    %v286 = vld [vmem:[#allocation5 + $0xb8] sm:$0xff]
    %v287 = vld [vmem:[#allocation5 + $0xc0] sm:$0xff]
    %v288 = vld [vmem:[#allocation5 + $0xc8] sm:$0xff]
    %v289 = vld [vmem:[#allocation5 + $0xd0] sm:$0xff]
    %v290 = vld [vmem:[#allocation5 + $0xd8] sm:$0xff]
    %v291 = vld [vmem:[#allocation5 + $0xe0] sm:$0xff]
    %v292 = vld [vmem:[#allocation5 + $0xe8] sm:$0xff]
    %v293 = vld [vmem:[#allocation5 + $0xf0] sm:$0xff]
    %v294 = vld [vmem:[#allocation5 + $0xf8] sm:$0xff]
    %v295 = vld [vmem:[#allocation5 + $0x100] sm:$0xff]
    %v296 = vld [vmem:[#allocation5 + $0x108] sm:$0xff]
    %v297 = vld [vmem:[#allocation5 + $0x110] sm:$0xff]
    %v298 = vld [vmem:[#allocation5 + $0x118] sm:$0xff]
    %v299 = vld [vmem:[#allocation5 + $0x120] sm:$0xff]
    %v300 = vld [vmem:[#allocation5 + $0x128] sm:$0xff]
    %v301 = vld [vmem:[#allocation5 + $0x130] sm:$0xff]
    %v302 = vld [vmem:[#allocation5 + $0x138] sm:$0xff]
    %v303 = vld [vmem:[#allocation5 + $0x140] sm:$0xff]
    %v304 = vld [vmem:[#allocation5 + $0x148] sm:$0xff]
    %v305 = vld [vmem:[#allocation5 + $0x150] sm:$0xff]
    %v306 = vld [vmem:[#allocation5 + $0x158] sm:$0xff]
    %v307 = vld [vmem:[#allocation5 + $0x160] sm:$0xff]
    %v308 = vld [vmem:[#allocation5 + $0x168] sm:$0xff]
    %v309 = vld [vmem:[#allocation5 + $0x170] sm:$0xff]
    %v310 = vld [vmem:[#allocation5 + $0x178] sm:$0xff]
    %v311 = vld [vmem:[#allocation5 + $0x180] sm:$0xff]
    %v312 = vld [vmem:[#allocation5 + $0x188] sm:$0xff]
    %v313 = vld [vmem:[#allocation5 + $0x190] sm:$0xff]
    %v314 = vld [vmem:[#allocation5 + $0x198] sm:$0xff]
    %v315 = vld [vmem:[#allocation5 + $0x1a0] sm:$0xff]
    %v316 = vld [vmem:[#allocation5 + $0x1a8] sm:$0xff]
    %v317 = vld [vmem:[#allocation5 + $0x1b0] sm:$0xff]
    %v318 = vld [vmem:[#allocation5 + $0x1b8] sm:$0xff]
    %v319 = vld [vmem:[#allocation5 + $0x1c0] sm:$0xff]
    %v320 = vld [vmem:[#allocation5 + $0x1c8] sm:$0xff]
    %v321 = vld [vmem:[#allocation5 + $0x1d0] sm:$0xff]
    %v322 = vld [vmem:[#allocation5 + $0x1d8] sm:$0xff]
    %v323 = vld [vmem:[#allocation5 + $0x1e0] sm:$0xff]
    %v324 = vld [vmem:[#allocation5 + $0x1e8] sm:$0xff]
    %v325 = vld [vmem:[#allocation5 + $0x1f0] sm:$0xff]
    %v326 = vld [vmem:[#allocation5 + $0x1f8] sm:$0xff]
    %v327 = vld [vmem:[#allocation5 + $0x200] sm:$0xff]
    %v328 = vld [vmem:[#allocation5 + $0x208] sm:$0xff]
    %v329 = vld [vmem:[#allocation5 + $0x210] sm:$0xff]
    %v330 = vld [vmem:[#allocation5 + $0x218] sm:$0xff]
    %v331 = vld [vmem:[#allocation5 + $0x220] sm:$0xff]
    %v332 = vld [vmem:[#allocation5 + $0x228] sm:$0xff]
    %v333 = vld [vmem:[#allocation5 + $0x230] sm:$0xff]
    %v334 = vld [vmem:[#allocation5 + $0x238] sm:$0xff]
    %v335 = vld [vmem:[#allocation5 + $0x240] sm:$0xff]
    %v336 = vld [vmem:[#allocation5 + $0x248] sm:$0xff]
    %v337 = vld [vmem:[#allocation5 + $0x250] sm:$0xff]
    %v338 = vld [vmem:[#allocation5 + $0x258] sm:$0xff]
    %v339 = vld [vmem:[#allocation5 + $0x260] sm:$0xff]
    %v340 = vld [vmem:[#allocation5 + $0x268] sm:$0xff]
    %v341 = vld [vmem:[#allocation5 + $0x270] sm:$0xff]
    %v342 = vld [vmem:[#allocation5 + $0x278] sm:$0xff]
    %v343 = vld [vmem:[#allocation5 + $0x280] sm:$0xff]
    %v344 = vld [vmem:[#allocation5 + $0x288] sm:$0xff]
    %v345 = vld [vmem:[#allocation5 + $0x290] sm:$0xff]
    %v346 = vld [vmem:[#allocation5 + $0x298] sm:$0xff]
    %v347 = vld [vmem:[#allocation5 + $0x2a0] sm:$0xff]
    %v348 = vld [vmem:[#allocation5 + $0x2a8] sm:$0xff]
    %v349 = vld [vmem:[#allocation5 + $0x2b0] sm:$0xff]
    %v350 = vld [vmem:[#allocation5 + $0x2b8] sm:$0xff]
    %v351 = vld [vmem:[#allocation5 + $0x2c0] sm:$0xff]
    %v352 = vld [vmem:[#allocation5 + $0x2c8] sm:$0xff]
    %v353 = vld [vmem:[#allocation5 + $0x2d0] sm:$0xff]
    %v354 = vld [vmem:[#allocation5 + $0x2d8] sm:$0xff]
    %v355 = vld [vmem:[#allocation5 + $0x2e0] sm:$0xff]
    %v356 = vld [vmem:[#allocation5 + $0x2e8] sm:$0xff]
    %v357 = vld [vmem:[#allocation5 + $0x2f0] sm:$0xff]
    %v358 = vld [vmem:[#allocation5 + $0x2f8] sm:$0xff]
    %v359 = vld [vmem:[#allocation5 + $0x300] sm:$0xff]
    %v360 = vld [vmem:[#allocation5 + $0x308] sm:$0xff]
    %v361 = vld [vmem:[#allocation5 + $0x310] sm:$0xff]
    %v362 = vld [vmem:[#allocation5 + $0x318] sm:$0xff]
    %v363 = vld [vmem:[#allocation5 + $0x320] sm:$0xff]
    %v364 = vld [vmem:[#allocation5 + $0x328] sm:$0xff]
    %v365 = vld [vmem:[#allocation5 + $0x330] sm:$0xff]
    %v366 = vld [vmem:[#allocation5 + $0x338] sm:$0xff]
    %v367 = vld [vmem:[#allocation5 + $0x340] sm:$0xff]
    %v368 = vld [vmem:[#allocation5 + $0x348] sm:$0xff]
    %v369 = vld [vmem:[#allocation5 + $0x350] sm:$0xff]
    %v370 = vld [vmem:[#allocation5 + $0x358] sm:$0xff]
    %v371 = vld [vmem:[#allocation5 + $0x360] sm:$0xff]
    %v372 = vld [vmem:[#allocation5 + $0x368] sm:$0xff]
    %v373 = vld [vmem:[#allocation5 + $0x370] sm:$0xff]
    %v374 = vld [vmem:[#allocation5 + $0x378] sm:$0xff]
    %v375 = vld [vmem:[#allocation5 + $0x380] sm:$0xff]
    %v376 = vld [vmem:[#allocation5 + $0x388] sm:$0xff]
    %v377 = vld [vmem:[#allocation5 + $0x390] sm:$0xff]
    %v378 = vld [vmem:[#allocation5 + $0x398] sm:$0xff]
    %v379 = vld [vmem:[#allocation5 + $0x3a0] sm:$0xff]
    %v380 = vld [vmem:[#allocation5 + $0x3a8] sm:$0xff]
    %v381 = vld [vmem:[#allocation5 + $0x3b0] sm:$0xff]
    %v382 = vld [vmem:[#allocation5 + $0x3b8] sm:$0xff]
    %v383 = vld [vmem:[#allocation5 + $0x3c0] sm:$0xff]
    %v384 = vld [vmem:[#allocation5 + $0x3c8] sm:$0xff]
    %v385 = vld [vmem:[#allocation5 + $0x3d0] sm:$0xff]
    %v386 = vld [vmem:[#allocation5 + $0x3d8] sm:$0xff]
    %v387 = vld [vmem:[#allocation5 + $0x3e0] sm:$0xff]
    %v388 = vld [vmem:[#allocation5 + $0x3e8] sm:$0xff]
    %v389 = vld [vmem:[#allocation5 + $0x3f0] sm:$0xff]
    %v390 = vld [vmem:[#allocation5 + $0x3f8] sm:$0xff]
    %v391 = vld [vmem:[%s5] sm:$0xf]
    %v393 = vperm.slane %v391, 0
    %v394 = vperm.slane %v391, 1
    %v395 = vperm.slane %v391, 2
    %v396 = vperm.slane %v391, 3
    %401 = vmatpush.msra.mxu0 %v323
    %402 = vmatpush.msra.mxu0 %v319
    %403 = vmatpush.msra.mxu0 %v315
    %404 = vmatpush.msra.mxu0 %v311
    %405 = vmatpush.msra.mxu0 %v307
    %406 = vmatpush.msra.mxu0 %v303
    %407 = vmatpush.msra.mxu0 %v299
    %408 = vmatpush.msra.mxu0 %v295
    %409 = vmatpush.msra.mxu0 %v291
    %410 = vmatpush.msra.mxu0 %v287
    %411 = vmatpush.msra.mxu0 %v283
    %412 = vmatpush.msra.mxu0 %v279
    %413 = vmatpush.msra.mxu0 %v275
    %414 = vmatpush.msra.mxu0 %v271
    %415 = vmatpush.msra.mxu0 %v267
    %416 = vmatpush.msra.mxu0 %v263
    %417 = vmatmul.f32.gmra.mxu0 %v262
    %v418 = vpop.f32.mrf.mxu0
    %v419 = vadd.f32 %v393, %v418
    %420 = vdwg.mxu0
    %421 = vmatpush.msra.mxu0 %v387
    %422 = vmatpush.msra.mxu0 %v383
    %423 = vmatpush.msra.mxu0 %v379
    %424 = vmatpush.msra.mxu0 %v375
    %425 = vmatpush.msra.mxu0 %v371
    %426 = vmatpush.msra.mxu0 %v367
    %427 = vmatpush.msra.mxu0 %v363
    %428 = vmatpush.msra.mxu0 %v359
    %429 = vmatpush.msra.mxu0 %v355
    %430 = vmatpush.msra.mxu0 %v351
    %431 = vmatpush.msra.mxu0 %v347
    %432 = vmatpush.msra.mxu0 %v343
    %433 = vmatpush.msra.mxu0 %v339
    %434 = vmatpush.msra.mxu0 %v335
    %435 = vmatpush.msra.mxu0 %v331
    %436 = vmatpush.msra.mxu0 %v327
    %437 = vmatmul.f32.gmra.mxu0 0.0
    %v438 = vpop.f32.mrf.mxu0
    %v439 = vadd.f32 %v419, %v438
    %440 = vdwg.mxu0
    %441 = vmatpush.msra.mxu0 %v324
    %442 = vmatpush.msra.mxu0 %v320
    %443 = vmatpush.msra.mxu0 %v316
    %444 = vmatpush.msra.mxu0 %v312
    %445 = vmatpush.msra.mxu0 %v308
    %446 = vmatpush.msra.mxu0 %v304
    %447 = vmatpush.msra.mxu0 %v300
    %448 = vmatpush.msra.mxu0 %v296
    %449 = vmatpush.msra.mxu0 %v292
    %450 = vmatpush.msra.mxu0 %v288
    %451 = vmatpush.msra.mxu0 %v284
    %452 = vmatpush.msra.mxu0 %v280
    %453 = vmatpush.msra.mxu0 %v276
    %454 = vmatpush.msra.mxu0 %v272
    %455 = vmatpush.msra.mxu0 %v268
    %456 = vmatpush.msra.mxu0 %v264
    %457 = vmatmul.f32.gmra.mxu0 %v262
    %v458 = vpop.f32.mrf.mxu0
    %v459 = vadd.f32 %v394, %v458
    %460 = vdwg.mxu0
    %461 = vmatpush.msra.mxu0 %v388
    %462 = vmatpush.msra.mxu0 %v384
    %463 = vmatpush.msra.mxu0 %v380
    %464 = vmatpush.msra.mxu0 %v376
    %465 = vmatpush.msra.mxu0 %v372
    %466 = vmatpush.msra.mxu0 %v368
    %467 = vmatpush.msra.mxu0 %v364
    %468 = vmatpush.msra.mxu0 %v360
    %469 = vmatpush.msra.mxu0 %v356
    %470 = vmatpush.msra.mxu0 %v352
    %471 = vmatpush.msra.mxu0 %v348
    %472 = vmatpush.msra.mxu0 %v344
    %473 = vmatpush.msra.mxu0 %v340
    %474 = vmatpush.msra.mxu0 %v336
    %475 = vmatpush.msra.mxu0 %v332
    %476 = vmatpush.msra.mxu0 %v328
    %477 = vmatmul.f32.gmra.mxu0 0.0
    %v478 = vpop.f32.mrf.mxu0
    %v479 = vadd.f32 %v459, %v478
    %480 = vdwg.mxu0
    %481 = vmatpush.msra.mxu0 %v325
    %482 = vmatpush.msra.mxu0 %v321
    %483 = vmatpush.msra.mxu0 %v317
    %484 = vmatpush.msra.mxu0 %v313
    %485 = vmatpush.msra.mxu0 %v309
    %486 = vmatpush.msra.mxu0 %v305
    %487 = vmatpush.msra.mxu0 %v301
    %488 = vmatpush.msra.mxu0 %v297
    %489 = vmatpush.msra.mxu0 %v293
    %490 = vmatpush.msra.mxu0 %v289
    %491 = vmatpush.msra.mxu0 %v285
    %492 = vmatpush.msra.mxu0 %v281
    %493 = vmatpush.msra.mxu0 %v277
    %494 = vmatpush.msra.mxu0 %v273
    %495 = vmatpush.msra.mxu0 %v269
    %496 = vmatpush.msra.mxu0 %v265
    %497 = vmatmul.f32.gmra.mxu0 %v262
    %v498 = vpop.f32.mrf.mxu0
    %v499 = vadd.f32 %v395, %v498
    %500 = vdwg.mxu0
    %501 = vmatpush.msra.mxu0 %v389
    %502 = vmatpush.msra.mxu0 %v385
    %503 = vmatpush.msra.mxu0 %v381
    %504 = vmatpush.msra.mxu0 %v377
    %505 = vmatpush.msra.mxu0 %v373
    %506 = vmatpush.msra.mxu0 %v369
    %507 = vmatpush.msra.mxu0 %v365
    %508 = vmatpush.msra.mxu0 %v361
    %509 = vmatpush.msra.mxu0 %v357
    %510 = vmatpush.msra.mxu0 %v353
    %511 = vmatpush.msra.mxu0 %v349
    %512 = vmatpush.msra.mxu0 %v345
    %513 = vmatpush.msra.mxu0 %v341
    %514 = vmatpush.msra.mxu0 %v337
    %515 = vmatpush.msra.mxu0 %v333
    %516 = vmatpush.msra.mxu0 %v329
    %517 = vmatmul.f32.gmra.mxu0 0.0
    %v518 = vpop.f32.mrf.mxu0
    %v519 = vadd.f32 %v499, %v518
    %520 = vdwg.mxu0
    %521 = vmatpush.msra.mxu0 %v326
    %522 = vmatpush.msra.mxu0 %v322
    %523 = vmatpush.msra.mxu0 %v318
    %524 = vmatpush.msra.mxu0 %v314
    %525 = vmatpush.msra.mxu0 %v310
    %526 = vmatpush.msra.mxu0 %v306
    %527 = vmatpush.msra.mxu0 %v302
    %528 = vmatpush.msra.mxu0 %v298
    %529 = vmatpush.msra.mxu0 %v294
    %530 = vmatpush.msra.mxu0 %v290
    %531 = vmatpush.msra.mxu0 %v286
    %532 = vmatpush.msra.mxu0 %v282
    %533 = vmatpush.msra.mxu0 %v278
    %534 = vmatpush.msra.mxu0 %v274
    %535 = vmatpush.msra.mxu0 %v270
    %536 = vmatpush.msra.mxu0 %v266
    %537 = vmatmul.f32.gmra.mxu0 %v262
    %v538 = vpop.f32.mrf.mxu0
    %v539 = vadd.f32 %v396, %v538
    %540 = vdwg.mxu0
    %541 = vmatpush.msra.mxu0 %v390
    %542 = vmatpush.msra.mxu0 %v386
    %543 = vmatpush.msra.mxu0 %v382
    %544 = vmatpush.msra.mxu0 %v378
    %545 = vmatpush.msra.mxu0 %v374
    %546 = vmatpush.msra.mxu0 %v370
    %547 = vmatpush.msra.mxu0 %v366
    %548 = vmatpush.msra.mxu0 %v362
    %549 = vmatpush.msra.mxu0 %v358
    %550 = vmatpush.msra.mxu0 %v354
    %551 = vmatpush.msra.mxu0 %v350
    %552 = vmatpush.msra.mxu0 %v346
    %553 = vmatpush.msra.mxu0 %v342
    %554 = vmatpush.msra.mxu0 %v338
    %555 = vmatpush.msra.mxu0 %v334
    %556 = vmatpush.msra.mxu0 %v330
    %557 = vmatmul.f32.gmra.mxu0 0.0
    %v558 = vpop.f32.mrf.mxu0
    %v559 = vadd.f32 %v539, %v558
    %560 = vdwg.mxu0
    %v561 = vmul.f32 %v439, 0.5
    %v562 = vmul.f32 %v479, 0.5
    %v563 = vmul.f32 %v519, 0.5
    %v564 = vtanh.pop %v561
    %v565 = vtanh.pop %v562
    %v566 = vtanh.pop %v563
    %v567 = vmul.f32 %v564, 0.5
    %v568 = vmul.f32 %v565, 0.5
    %v569 = vmul.f32 %v566, 0.5
    %v570 = vadd.f32 %v567, 0.5
    %v571 = vadd.f32 %v568, 0.5
    %v572 = vadd.f32 %v569, 0.5
    %v573 = vtanh.pop %v559
    %v574 = vmul.f32 %v571, 0.0
    %v575 = vmul.f32 %v570, %v573
    %v576 = vadd.f32 %v574, %v575
    %v577 = vtanh.pop %v576
    %v578 = vmul.f32 %v572, %v577
    %s579 = scalar_lea.vmem %s0, 8
    %v580 = vld [vmem:[%s579] sm:$0xff]
    %582 = vset.pattern.permute.xlu0 0
    %583 = vperm.xlu0 %582, %v580
    %v584 = vpop.permute.xlu0 %583
    %v586 = vmul.f32 %v584, %v71
    %v587 = vmul.f32 %v584, %v72
    %v588 = vmul.f32 %v584, %v73
    %v589 = vmul.f32 %v584, %v74
    %v590 = vadd.f32 %v586, %v85
    %v591 = vadd.f32 %v587, %v86
    %v592 = vadd.f32 %v588, %v87
    %v593 = vadd.f32 %v589, %v88
    %594 = vmatpush.msra.mxu0 %v157
    %595 = vmatpush.msra.mxu0 %v153
    %596 = vmatpush.msra.mxu0 %v149
    %597 = vmatpush.msra.mxu0 %v145
    %598 = vmatpush.msra.mxu0 %v141
    %599 = vmatpush.msra.mxu0 %v137
    %600 = vmatpush.msra.mxu0 %v133
    %601 = vmatpush.msra.mxu0 %v129
    %602 = vmatpush.msra.mxu0 %v125
    %603 = vmatpush.msra.mxu0 %v121
    %604 = vmatpush.msra.mxu0 %v117
    %605 = vmatpush.msra.mxu0 %v113
    %606 = vmatpush.msra.mxu0 %v109
    %607 = vmatpush.msra.mxu0 %v105
    %608 = vmatpush.msra.mxu0 %v101
    %609 = vmatpush.msra.mxu0 %v97
    %610 = vmatmul.f32.gmra.mxu0 %v262
    %v611 = vpop.f32.mrf.mxu0
    %v612 = vadd.f32 0.0, %v611
    %613 = vdwg.mxu0
    %614 = vmatpush.msra.mxu0 %v158
    %615 = vmatpush.msra.mxu0 %v154
    %616 = vmatpush.msra.mxu0 %v150
    %617 = vmatpush.msra.mxu0 %v146
    %618 = vmatpush.msra.mxu0 %v142
    %619 = vmatpush.msra.mxu0 %v138
    %620 = vmatpush.msra.mxu0 %v134
    %621 = vmatpush.msra.mxu0 %v130
    %622 = vmatpush.msra.mxu0 %v126
    %623 = vmatpush.msra.mxu0 %v122
    %624 = vmatpush.msra.mxu0 %v118
    %625 = vmatpush.msra.mxu0 %v114
    %626 = vmatpush.msra.mxu0 %v110
    %627 = vmatpush.msra.mxu0 %v106
    %628 = vmatpush.msra.mxu0 %v102
    %629 = vmatpush.msra.mxu0 %v98
    %630 = vmatmul.f32.gmra.mxu0 %v262
    %v631 = vpop.f32.mrf.mxu0
    %v632 = vadd.f32 0.0, %v631
    %633 = vdwg.mxu0
    %634 = vmatpush.msra.mxu0 %v159
    %635 = vmatpush.msra.mxu0 %v155
    %636 = vmatpush.msra.mxu0 %v151
    %637 = vmatpush.msra.mxu0 %v147
    %638 = vmatpush.msra.mxu0 %v143
    %639 = vmatpush.msra.mxu0 %v139
    %640 = vmatpush.msra.mxu0 %v135
    %641 = vmatpush.msra.mxu0 %v131
    %642 = vmatpush.msra.mxu0 %v127
    %643 = vmatpush.msra.mxu0 %v123
    %644 = vmatpush.msra.mxu0 %v119
    %645 = vmatpush.msra.mxu0 %v115
    %646 = vmatpush.msra.mxu0 %v111
    %647 = vmatpush.msra.mxu0 %v107
    %648 = vmatpush.msra.mxu0 %v103
    %649 = vmatpush.msra.mxu0 %v99
    %650 = vmatmul.f32.gmra.mxu0 %v262
    %v651 = vpop.f32.mrf.mxu0
    %v652 = vadd.f32 0.0, %v651
    %653 = vdwg.mxu0
    %654 = vmatpush.msra.mxu0 %v160
    %655 = vmatpush.msra.mxu0 %v156
    %656 = vmatpush.msra.mxu0 %v152
    %657 = vmatpush.msra.mxu0 %v148
    %658 = vmatpush.msra.mxu0 %v144
    %659 = vmatpush.msra.mxu0 %v140
    %660 = vmatpush.msra.mxu0 %v136
    %661 = vmatpush.msra.mxu0 %v132
    %662 = vmatpush.msra.mxu0 %v128
    %663 = vmatpush.msra.mxu0 %v124
    %664 = vmatpush.msra.mxu0 %v120
    %665 = vmatpush.msra.mxu0 %v116
    %666 = vmatpush.msra.mxu0 %v112
    %667 = vmatpush.msra.mxu0 %v108
    %668 = vmatpush.msra.mxu0 %v104
    %669 = vmatpush.msra.mxu0 %v100
    %670 = vmatmul.f32.gmra.mxu0 %v262
    %v671 = vpop.f32.mrf.mxu0
    %v672 = vadd.f32 0.0, %v671
    %673 = vdwg.mxu0
    %v674 = vadd.f32 %v590, %v612
    %v675 = vadd.f32 %v591, %v632
    %v676 = vadd.f32 %v592, %v652
    %v677 = vadd.f32 %v593, %v672
    %v678 = vmul.f32 %v674, 0.5
    %v679 = vmul.f32 %v675, 0.5
    %v680 = vmul.f32 %v676, 0.5
    %v681 = vtanh.pop %v678
    %v682 = vtanh.pop %v679
    %v683 = vtanh.pop %v680
    %v684 = vmul.f32 %v681, 0.5
    %v685 = vmul.f32 %v682, 0.5
    %v686 = vmul.f32 %v683, 0.5
    %v687 = vadd.f32 %v684, 0.5
    %v688 = vadd.f32 %v685, 0.5
    %v689 = vadd.f32 %v686, 0.5
    %v690 = vtanh.pop %v677
    %v691 = vmul.f32 %v688, %v260
    %v692 = vmul.f32 %v687, %v690
    %v693 = vadd.f32 %v691, %v692
    %v694 = vtanh.pop %v693
    %v695 = vmul.f32 %v689, %v694
    %696 = vmatpush.msra.mxu0 %v323
    %697 = vmatpush.msra.mxu0 %v319
    %698 = vmatpush.msra.mxu0 %v315
    %699 = vmatpush.msra.mxu0 %v311
    %700 = vmatpush.msra.mxu0 %v307
    %701 = vmatpush.msra.mxu0 %v303
    %702 = vmatpush.msra.mxu0 %v299
    %703 = vmatpush.msra.mxu0 %v295
    %704 = vmatpush.msra.mxu0 %v291
    %705 = vmatpush.msra.mxu0 %v287
    %706 = vmatpush.msra.mxu0 %v283
    %707 = vmatpush.msra.mxu0 %v279
    %708 = vmatpush.msra.mxu0 %v275
    %709 = vmatpush.msra.mxu0 %v271
    %710 = vmatpush.msra.mxu0 %v267
    %711 = vmatpush.msra.mxu0 %v263
    %712 = vmatmul.f32.gmra.mxu0 %v695
    %v713 = vpop.f32.mrf.mxu0
    %v714 = vadd.f32 %v393, %v713
    %715 = vdwg.mxu0
    %716 = vmatpush.msra.mxu0 %v387
    %717 = vmatpush.msra.mxu0 %v383
    %718 = vmatpush.msra.mxu0 %v379
    %719 = vmatpush.msra.mxu0 %v375
    %720 = vmatpush.msra.mxu0 %v371
    %721 = vmatpush.msra.mxu0 %v367
    %722 = vmatpush.msra.mxu0 %v363
    %723 = vmatpush.msra.mxu0 %v359
    %724 = vmatpush.msra.mxu0 %v355
    %725 = vmatpush.msra.mxu0 %v351
    %726 = vmatpush.msra.mxu0 %v347
    %727 = vmatpush.msra.mxu0 %v343
    %728 = vmatpush.msra.mxu0 %v339
    %729 = vmatpush.msra.mxu0 %v335
    %730 = vmatpush.msra.mxu0 %v331
    %731 = vmatpush.msra.mxu0 %v327
    %732 = vmatmul.f32.gmra.mxu0 %v578
    %v733 = vpop.f32.mrf.mxu0
    %v734 = vadd.f32 %v714, %v733
    %735 = vdwg.mxu0
    %736 = vmatpush.msra.mxu0 %v324
    %737 = vmatpush.msra.mxu0 %v320
    %738 = vmatpush.msra.mxu0 %v316
    %739 = vmatpush.msra.mxu0 %v312
    %740 = vmatpush.msra.mxu0 %v308
    %741 = vmatpush.msra.mxu0 %v304
    %742 = vmatpush.msra.mxu0 %v300
    %743 = vmatpush.msra.mxu0 %v296
    %744 = vmatpush.msra.mxu0 %v292
    %745 = vmatpush.msra.mxu0 %v288
    %746 = vmatpush.msra.mxu0 %v284
    %747 = vmatpush.msra.mxu0 %v280
    %748 = vmatpush.msra.mxu0 %v276
    %749 = vmatpush.msra.mxu0 %v272
    %750 = vmatpush.msra.mxu0 %v268
    %751 = vmatpush.msra.mxu0 %v264
    %752 = vmatmul.f32.gmra.mxu0 %v695
    %v753 = vpop.f32.mrf.mxu0
    %v754 = vadd.f32 %v394, %v753
    %755 = vdwg.mxu0
    %756 = vmatpush.msra.mxu0 %v388
    %757 = vmatpush.msra.mxu0 %v384
    %758 = vmatpush.msra.mxu0 %v380
    %759 = vmatpush.msra.mxu0 %v376
    %760 = vmatpush.msra.mxu0 %v372
    %761 = vmatpush.msra.mxu0 %v368
    %762 = vmatpush.msra.mxu0 %v364
    %763 = vmatpush.msra.mxu0 %v360
    %764 = vmatpush.msra.mxu0 %v356
    %765 = vmatpush.msra.mxu0 %v352
    %766 = vmatpush.msra.mxu0 %v348
    %767 = vmatpush.msra.mxu0 %v344
    %768 = vmatpush.msra.mxu0 %v340
    %769 = vmatpush.msra.mxu0 %v336
    %770 = vmatpush.msra.mxu0 %v332
    %771 = vmatpush.msra.mxu0 %v328
    %772 = vmatmul.f32.gmra.mxu0 %v578
    %v773 = vpop.f32.mrf.mxu0
    %v774 = vadd.f32 %v754, %v773
    %775 = vdwg.mxu0
    %776 = vmatpush.msra.mxu0 %v325
    %777 = vmatpush.msra.mxu0 %v321
    %778 = vmatpush.msra.mxu0 %v317
    %779 = vmatpush.msra.mxu0 %v313
    %780 = vmatpush.msra.mxu0 %v309
    %781 = vmatpush.msra.mxu0 %v305
    %782 = vmatpush.msra.mxu0 %v301
    %783 = vmatpush.msra.mxu0 %v297
    %784 = vmatpush.msra.mxu0 %v293
    %785 = vmatpush.msra.mxu0 %v289
    %786 = vmatpush.msra.mxu0 %v285
    %787 = vmatpush.msra.mxu0 %v281
    %788 = vmatpush.msra.mxu0 %v277
    %789 = vmatpush.msra.mxu0 %v273
    %790 = vmatpush.msra.mxu0 %v269
    %791 = vmatpush.msra.mxu0 %v265
    %792 = vmatmul.f32.gmra.mxu0 %v695
    %v793 = vpop.f32.mrf.mxu0
    %v794 = vadd.f32 %v395, %v793
    %795 = vdwg.mxu0
    %796 = vmatpush.msra.mxu0 %v389
    %797 = vmatpush.msra.mxu0 %v385
    %798 = vmatpush.msra.mxu0 %v381
    %799 = vmatpush.msra.mxu0 %v377
    %800 = vmatpush.msra.mxu0 %v373
    %801 = vmatpush.msra.mxu0 %v369
    %802 = vmatpush.msra.mxu0 %v365
    %803 = vmatpush.msra.mxu0 %v361
    %804 = vmatpush.msra.mxu0 %v357
    %805 = vmatpush.msra.mxu0 %v353
    %806 = vmatpush.msra.mxu0 %v349
    %807 = vmatpush.msra.mxu0 %v345
    %808 = vmatpush.msra.mxu0 %v341
    %809 = vmatpush.msra.mxu0 %v337
    %810 = vmatpush.msra.mxu0 %v333
    %811 = vmatpush.msra.mxu0 %v329
    %812 = vmatmul.f32.gmra.mxu0 %v578
    %v813 = vpop.f32.mrf.mxu0
    %v814 = vadd.f32 %v794, %v813
    %815 = vdwg.mxu0
    %816 = vmatpush.msra.mxu0 %v326
    %817 = vmatpush.msra.mxu0 %v322
    %818 = vmatpush.msra.mxu0 %v318
    %819 = vmatpush.msra.mxu0 %v314
    %820 = vmatpush.msra.mxu0 %v310
    %821 = vmatpush.msra.mxu0 %v306
    %822 = vmatpush.msra.mxu0 %v302
    %823 = vmatpush.msra.mxu0 %v298
    %824 = vmatpush.msra.mxu0 %v294
    %825 = vmatpush.msra.mxu0 %v290
    %826 = vmatpush.msra.mxu0 %v286
    %827 = vmatpush.msra.mxu0 %v282
    %828 = vmatpush.msra.mxu0 %v278
    %829 = vmatpush.msra.mxu0 %v274
    %830 = vmatpush.msra.mxu0 %v270
    %831 = vmatpush.msra.mxu0 %v266
    %832 = vmatmul.f32.gmra.mxu0 %v695
    %v833 = vpop.f32.mrf.mxu0
    %v834 = vadd.f32 %v396, %v833
    %835 = vdwg.mxu0
    %836 = vmatpush.msra.mxu0 %v390
    %837 = vmatpush.msra.mxu0 %v386
    %838 = vmatpush.msra.mxu0 %v382
    %839 = vmatpush.msra.mxu0 %v378
    %840 = vmatpush.msra.mxu0 %v374
    %841 = vmatpush.msra.mxu0 %v370
    %842 = vmatpush.msra.mxu0 %v366
    %843 = vmatpush.msra.mxu0 %v362
    %844 = vmatpush.msra.mxu0 %v358
    %845 = vmatpush.msra.mxu0 %v354
    %846 = vmatpush.msra.mxu0 %v350
    %847 = vmatpush.msra.mxu0 %v346
    %848 = vmatpush.msra.mxu0 %v342
    %849 = vmatpush.msra.mxu0 %v338
    %850 = vmatpush.msra.mxu0 %v334
    %851 = vmatpush.msra.mxu0 %v330
    %852 = vmatmul.f32.gmra.mxu0 %v578
    %v853 = vpop.f32.mrf.mxu0
    %v854 = vadd.f32 %v834, %v853
    %855 = vdwg.mxu0
    %v856 = vmul.f32 %v734, 0.5
    %v857 = vmul.f32 %v774, 0.5
    %v858 = vmul.f32 %v814, 0.5
    %v859 = vtanh.pop %v856
    %v860 = vtanh.pop %v857
    %v861 = vtanh.pop %v858
    %v862 = vmul.f32 %v859, 0.5
    %v863 = vmul.f32 %v860, 0.5
    %v864 = vmul.f32 %v861, 0.5
    %v865 = vadd.f32 %v862, 0.5
    %v866 = vadd.f32 %v863, 0.5
    %v867 = vadd.f32 %v864, 0.5
    %v868 = vtanh.pop %v854
    %v869 = vmul.f32 %v866, %v576
    %v870 = vmul.f32 %v865, %v868
    %v871 = vadd.f32 %v869, %v870
    %v872 = vtanh.pop %v871
    %v873 = vmul.f32 %v867, %v872
    %s874 = scalar_lea.vmem %s0, 16
    %v875 = vld [vmem:[%s874] sm:$0xff]
    %877 = vset.pattern.permute.xlu0 0
    %878 = vperm.xlu0 %877, %v875
    %v879 = vpop.permute.xlu0 %878
    %v881 = vmul.f32 %v879, %v71
    %v882 = vmul.f32 %v879, %v72
    %v883 = vmul.f32 %v879, %v73
    %v884 = vmul.f32 %v879, %v74
    %v885 = vadd.f32 %v881, %v85
    %v886 = vadd.f32 %v882, %v86
    %v887 = vadd.f32 %v883, %v87
    %v888 = vadd.f32 %v884, %v88
    %889 = vmatpush.msra.mxu0 %v157
    %890 = vmatpush.msra.mxu0 %v153
    %891 = vmatpush.msra.mxu0 %v149
    %892 = vmatpush.msra.mxu0 %v145
    %893 = vmatpush.msra.mxu0 %v141
    %894 = vmatpush.msra.mxu0 %v137
    %895 = vmatpush.msra.mxu0 %v133
    %896 = vmatpush.msra.mxu0 %v129
    %897 = vmatpush.msra.mxu0 %v125
    %898 = vmatpush.msra.mxu0 %v121
    %899 = vmatpush.msra.mxu0 %v117
    %900 = vmatpush.msra.mxu0 %v113
    %901 = vmatpush.msra.mxu0 %v109
    %902 = vmatpush.msra.mxu0 %v105
    %903 = vmatpush.msra.mxu0 %v101
    %904 = vmatpush.msra.mxu0 %v97
    %905 = vmatmul.f32.gmra.mxu0 %v695
    %v906 = vpop.f32.mrf.mxu0
    %v907 = vadd.f32 0.0, %v906
    %908 = vdwg.mxu0
    %909 = vmatpush.msra.mxu0 %v158
    %910 = vmatpush.msra.mxu0 %v154
    %911 = vmatpush.msra.mxu0 %v150
    %912 = vmatpush.msra.mxu0 %v146
    %913 = vmatpush.msra.mxu0 %v142
    %914 = vmatpush.msra.mxu0 %v138
    %915 = vmatpush.msra.mxu0 %v134
    %916 = vmatpush.msra.mxu0 %v130
    %917 = vmatpush.msra.mxu0 %v126
    %918 = vmatpush.msra.mxu0 %v122
    %919 = vmatpush.msra.mxu0 %v118
    %920 = vmatpush.msra.mxu0 %v114
    %921 = vmatpush.msra.mxu0 %v110
    %922 = vmatpush.msra.mxu0 %v106
    %923 = vmatpush.msra.mxu0 %v102
    %924 = vmatpush.msra.mxu0 %v98
    %925 = vmatmul.f32.gmra.mxu0 %v695
    %v926 = vpop.f32.mrf.mxu0
    %v927 = vadd.f32 0.0, %v926
    %928 = vdwg.mxu0
    %929 = vmatpush.msra.mxu0 %v159
    %930 = vmatpush.msra.mxu0 %v155
    %931 = vmatpush.msra.mxu0 %v151
    %932 = vmatpush.msra.mxu0 %v147
    %933 = vmatpush.msra.mxu0 %v143
    %934 = vmatpush.msra.mxu0 %v139
    %935 = vmatpush.msra.mxu0 %v135
    %936 = vmatpush.msra.mxu0 %v131
    %937 = vmatpush.msra.mxu0 %v127
    %938 = vmatpush.msra.mxu0 %v123
    %939 = vmatpush.msra.mxu0 %v119
    %940 = vmatpush.msra.mxu0 %v115
    %941 = vmatpush.msra.mxu0 %v111
    %942 = vmatpush.msra.mxu0 %v107
    %943 = vmatpush.msra.mxu0 %v103
    %944 = vmatpush.msra.mxu0 %v99
    %945 = vmatmul.f32.gmra.mxu0 %v695
    %v946 = vpop.f32.mrf.mxu0
    %v947 = vadd.f32 0.0, %v946
    %948 = vdwg.mxu0
    %949 = vmatpush.msra.mxu0 %v160
    %950 = vmatpush.msra.mxu0 %v156
    %951 = vmatpush.msra.mxu0 %v152
    %952 = vmatpush.msra.mxu0 %v148
    %953 = vmatpush.msra.mxu0 %v144
    %954 = vmatpush.msra.mxu0 %v140
    %955 = vmatpush.msra.mxu0 %v136
    %956 = vmatpush.msra.mxu0 %v132
    %957 = vmatpush.msra.mxu0 %v128
    %958 = vmatpush.msra.mxu0 %v124
    %959 = vmatpush.msra.mxu0 %v120
    %960 = vmatpush.msra.mxu0 %v116
    %961 = vmatpush.msra.mxu0 %v112
    %962 = vmatpush.msra.mxu0 %v108
    %963 = vmatpush.msra.mxu0 %v104
    %964 = vmatpush.msra.mxu0 %v100
    %965 = vmatmul.f32.gmra.mxu0 %v695
    %v966 = vpop.f32.mrf.mxu0
    %v967 = vadd.f32 0.0, %v966
    %968 = vdwg.mxu0
    %v969 = vadd.f32 %v885, %v907
    %v970 = vadd.f32 %v886, %v927
    %v971 = vadd.f32 %v887, %v947
    %v972 = vadd.f32 %v888, %v967
    %v973 = vmul.f32 %v969, 0.5
    %v974 = vmul.f32 %v970, 0.5
    %v975 = vmul.f32 %v971, 0.5
    %v976 = vtanh.pop %v973
    %v977 = vtanh.pop %v974
    %v978 = vtanh.pop %v975
    %v979 = vmul.f32 %v976, 0.5
    %v980 = vmul.f32 %v977, 0.5
    %v981 = vmul.f32 %v978, 0.5
    %v982 = vadd.f32 %v979, 0.5
    %v983 = vadd.f32 %v980, 0.5
    %v984 = vadd.f32 %v981, 0.5
    %v985 = vtanh.pop %v972
    %v986 = vmul.f32 %v983, %v693
    %v987 = vmul.f32 %v982, %v985
    %v988 = vadd.f32 %v986, %v987
    %v989 = vtanh.pop %v988
    %v990 = vmul.f32 %v984, %v989
    %991 = vmatpush.msra.mxu0 %v323
    %992 = vmatpush.msra.mxu0 %v319
    %993 = vmatpush.msra.mxu0 %v315
    %994 = vmatpush.msra.mxu0 %v311
    %995 = vmatpush.msra.mxu0 %v307
    %996 = vmatpush.msra.mxu0 %v303
    %997 = vmatpush.msra.mxu0 %v299
    %998 = vmatpush.msra.mxu0 %v295
    %999 = vmatpush.msra.mxu0 %v291
    %1000 = vmatpush.msra.mxu0 %v287
    %1001 = vmatpush.msra.mxu0 %v283
    %1002 = vmatpush.msra.mxu0 %v279
    %1003 = vmatpush.msra.mxu0 %v275
    %1004 = vmatpush.msra.mxu0 %v271
    %1005 = vmatpush.msra.mxu0 %v267
    %1006 = vmatpush.msra.mxu0 %v263
    %1007 = vmatmul.f32.gmra.mxu0 %v990
    %v1008 = vpop.f32.mrf.mxu0
    %v1009 = vadd.f32 %v393, %v1008
    %1010 = vdwg.mxu0
    %1011 = vmatpush.msra.mxu0 %v387
    %1012 = vmatpush.msra.mxu0 %v383
    %1013 = vmatpush.msra.mxu0 %v379
    %1014 = vmatpush.msra.mxu0 %v375
    %1015 = vmatpush.msra.mxu0 %v371
    %1016 = vmatpush.msra.mxu0 %v367
    %1017 = vmatpush.msra.mxu0 %v363
    %1018 = vmatpush.msra.mxu0 %v359
    %1019 = vmatpush.msra.mxu0 %v355
    %1020 = vmatpush.msra.mxu0 %v351
    %1021 = vmatpush.msra.mxu0 %v347
    %1022 = vmatpush.msra.mxu0 %v343
    %1023 = vmatpush.msra.mxu0 %v339
    %1024 = vmatpush.msra.mxu0 %v335
    %1025 = vmatpush.msra.mxu0 %v331
    %1026 = vmatpush.msra.mxu0 %v327
    %1027 = vmatmul.f32.gmra.mxu0 %v873
    %v1028 = vpop.f32.mrf.mxu0
    %v1029 = vadd.f32 %v1009, %v1028
    %1030 = vdwg.mxu0
    %1031 = vmatpush.msra.mxu0 %v324
    %1032 = vmatpush.msra.mxu0 %v320
    %1033 = vmatpush.msra.mxu0 %v316
    %1034 = vmatpush.msra.mxu0 %v312
    %1035 = vmatpush.msra.mxu0 %v308
    %1036 = vmatpush.msra.mxu0 %v304
    %1037 = vmatpush.msra.mxu0 %v300
    %1038 = vmatpush.msra.mxu0 %v296
    %1039 = vmatpush.msra.mxu0 %v292
    %1040 = vmatpush.msra.mxu0 %v288
    %1041 = vmatpush.msra.mxu0 %v284
    %1042 = vmatpush.msra.mxu0 %v280
    %1043 = vmatpush.msra.mxu0 %v276
    %1044 = vmatpush.msra.mxu0 %v272
    %1045 = vmatpush.msra.mxu0 %v268
    %1046 = vmatpush.msra.mxu0 %v264
    %1047 = vmatmul.f32.gmra.mxu0 %v990
    %v1048 = vpop.f32.mrf.mxu0
    %v1049 = vadd.f32 %v394, %v1048
    %1050 = vdwg.mxu0
    %1051 = vmatpush.msra.mxu0 %v388
    %1052 = vmatpush.msra.mxu0 %v384
    %1053 = vmatpush.msra.mxu0 %v380
    %1054 = vmatpush.msra.mxu0 %v376
    %1055 = vmatpush.msra.mxu0 %v372
    %1056 = vmatpush.msra.mxu0 %v368
    %1057 = vmatpush.msra.mxu0 %v364
    %1058 = vmatpush.msra.mxu0 %v360
    %1059 = vmatpush.msra.mxu0 %v356
    %1060 = vmatpush.msra.mxu0 %v352
    %1061 = vmatpush.msra.mxu0 %v348
    %1062 = vmatpush.msra.mxu0 %v344
    %1063 = vmatpush.msra.mxu0 %v340
    %1064 = vmatpush.msra.mxu0 %v336
    %1065 = vmatpush.msra.mxu0 %v332
    %1066 = vmatpush.msra.mxu0 %v328
    %1067 = vmatmul.f32.gmra.mxu0 %v873
    %v1068 = vpop.f32.mrf.mxu0
    %v1069 = vadd.f32 %v1049, %v1068
    %1070 = vdwg.mxu0
    %1071 = vmatpush.msra.mxu0 %v325
    %1072 = vmatpush.msra.mxu0 %v321
    %1073 = vmatpush.msra.mxu0 %v317
    %1074 = vmatpush.msra.mxu0 %v313
    %1075 = vmatpush.msra.mxu0 %v309
    %1076 = vmatpush.msra.mxu0 %v305
    %1077 = vmatpush.msra.mxu0 %v301
    %1078 = vmatpush.msra.mxu0 %v297
    %1079 = vmatpush.msra.mxu0 %v293
    %1080 = vmatpush.msra.mxu0 %v289
    %1081 = vmatpush.msra.mxu0 %v285
    %1082 = vmatpush.msra.mxu0 %v281
    %1083 = vmatpush.msra.mxu0 %v277
    %1084 = vmatpush.msra.mxu0 %v273
    %1085 = vmatpush.msra.mxu0 %v269
    %1086 = vmatpush.msra.mxu0 %v265
    %1087 = vmatmul.f32.gmra.mxu0 %v990
    %v1088 = vpop.f32.mrf.mxu0
    %v1089 = vadd.f32 %v395, %v1088
    %1090 = vdwg.mxu0
    %1091 = vmatpush.msra.mxu0 %v389
    %1092 = vmatpush.msra.mxu0 %v385
    %1093 = vmatpush.msra.mxu0 %v381
    %1094 = vmatpush.msra.mxu0 %v377
    %1095 = vmatpush.msra.mxu0 %v373
    %1096 = vmatpush.msra.mxu0 %v369
    %1097 = vmatpush.msra.mxu0 %v365
    %1098 = vmatpush.msra.mxu0 %v361
    %1099 = vmatpush.msra.mxu0 %v357
    %1100 = vmatpush.msra.mxu0 %v353
    %1101 = vmatpush.msra.mxu0 %v349
    %1102 = vmatpush.msra.mxu0 %v345
    %1103 = vmatpush.msra.mxu0 %v341
    %1104 = vmatpush.msra.mxu0 %v337
    %1105 = vmatpush.msra.mxu0 %v333
    %1106 = vmatpush.msra.mxu0 %v329
    %1107 = vmatmul.f32.gmra.mxu0 %v873
    %v1108 = vpop.f32.mrf.mxu0
    %v1109 = vadd.f32 %v1089, %v1108
    %1110 = vdwg.mxu0
    %1111 = vmatpush.msra.mxu0 %v326
    %1112 = vmatpush.msra.mxu0 %v322
    %1113 = vmatpush.msra.mxu0 %v318
    %1114 = vmatpush.msra.mxu0 %v314
    %1115 = vmatpush.msra.mxu0 %v310
    %1116 = vmatpush.msra.mxu0 %v306
    %1117 = vmatpush.msra.mxu0 %v302
    %1118 = vmatpush.msra.mxu0 %v298
    %1119 = vmatpush.msra.mxu0 %v294
    %1120 = vmatpush.msra.mxu0 %v290
    %1121 = vmatpush.msra.mxu0 %v286
    %1122 = vmatpush.msra.mxu0 %v282
    %1123 = vmatpush.msra.mxu0 %v278
    %1124 = vmatpush.msra.mxu0 %v274
    %1125 = vmatpush.msra.mxu0 %v270
    %1126 = vmatpush.msra.mxu0 %v266
    %1127 = vmatmul.f32.gmra.mxu0 %v990
    %v1128 = vpop.f32.mrf.mxu0
    %v1129 = vadd.f32 %v396, %v1128
    %1130 = vdwg.mxu0
    %1131 = vmatpush.msra.mxu0 %v390
    %1132 = vmatpush.msra.mxu0 %v386
    %1133 = vmatpush.msra.mxu0 %v382
    %1134 = vmatpush.msra.mxu0 %v378
    %1135 = vmatpush.msra.mxu0 %v374
    %1136 = vmatpush.msra.mxu0 %v370
    %1137 = vmatpush.msra.mxu0 %v366
    %1138 = vmatpush.msra.mxu0 %v362
    %1139 = vmatpush.msra.mxu0 %v358
    %1140 = vmatpush.msra.mxu0 %v354
    %1141 = vmatpush.msra.mxu0 %v350
    %1142 = vmatpush.msra.mxu0 %v346
    %1143 = vmatpush.msra.mxu0 %v342
    %1144 = vmatpush.msra.mxu0 %v338
    %1145 = vmatpush.msra.mxu0 %v334
    %1146 = vmatpush.msra.mxu0 %v330
    %1147 = vmatmul.f32.gmra.mxu0 %v873
    %v1148 = vpop.f32.mrf.mxu0
    %v1149 = vadd.f32 %v1129, %v1148
    %1150 = vdwg.mxu0
    %v1151 = vmul.f32 %v1029, 0.5
    %v1152 = vmul.f32 %v1069, 0.5
    %v1153 = vmul.f32 %v1109, 0.5
    %v1154 = vtanh.pop %v1151
    %v1155 = vtanh.pop %v1152
    %v1156 = vtanh.pop %v1153
    %v1157 = vmul.f32 %v1154, 0.5
    %v1158 = vmul.f32 %v1155, 0.5
    %v1159 = vmul.f32 %v1156, 0.5
    %v1160 = vadd.f32 %v1157, 0.5
    %v1161 = vadd.f32 %v1158, 0.5
    %v1162 = vadd.f32 %v1159, 0.5
    %v1163 = vtanh.pop %v1149
    %v1164 = vmul.f32 %v1161, %v871
    %v1165 = vmul.f32 %v1160, %v1163
    %v1166 = vadd.f32 %v1164, %v1165
    %v1167 = vtanh.pop %v1166
    %v1168 = vmul.f32 %v1162, %v1167
    %s1169 = scalar_lea.vmem %s0, 24
    %v1170 = vld [vmem:[%s1169] sm:$0xff]
    %1172 = vset.pattern.permute.xlu0 0
    %1173 = vperm.xlu0 %1172, %v1170
    %v1174 = vpop.permute.xlu0 %1173
    %v1176 = vmul.f32 %v1174, %v71
    %v1177 = vmul.f32 %v1174, %v72
    %v1178 = vmul.f32 %v1174, %v73
    %v1179 = vmul.f32 %v1174, %v74
    %v1180 = vadd.f32 %v1176, %v85
    %v1181 = vadd.f32 %v1177, %v86
    %v1182 = vadd.f32 %v1178, %v87
    %v1183 = vadd.f32 %v1179, %v88
    %1184 = vmatpush.msra.mxu0 %v157
    %1185 = vmatpush.msra.mxu0 %v153
    %1186 = vmatpush.msra.mxu0 %v149
    %1187 = vmatpush.msra.mxu0 %v145
    %1188 = vmatpush.msra.mxu0 %v141
    %1189 = vmatpush.msra.mxu0 %v137
    %1190 = vmatpush.msra.mxu0 %v133
    %1191 = vmatpush.msra.mxu0 %v129
    %1192 = vmatpush.msra.mxu0 %v125
    %1193 = vmatpush.msra.mxu0 %v121
    %1194 = vmatpush.msra.mxu0 %v117
    %1195 = vmatpush.msra.mxu0 %v113
    %1196 = vmatpush.msra.mxu0 %v109
    %1197 = vmatpush.msra.mxu0 %v105
    %1198 = vmatpush.msra.mxu0 %v101
    %1199 = vmatpush.msra.mxu0 %v97
    %1200 = vmatmul.f32.gmra.mxu0 %v990
    %v1201 = vpop.f32.mrf.mxu0
    %v1202 = vadd.f32 0.0, %v1201
    %1203 = vdwg.mxu0
    %1204 = vmatpush.msra.mxu0 %v158
    %1205 = vmatpush.msra.mxu0 %v154
    %1206 = vmatpush.msra.mxu0 %v150
    %1207 = vmatpush.msra.mxu0 %v146
    %1208 = vmatpush.msra.mxu0 %v142
    %1209 = vmatpush.msra.mxu0 %v138
    %1210 = vmatpush.msra.mxu0 %v134
    %1211 = vmatpush.msra.mxu0 %v130
    %1212 = vmatpush.msra.mxu0 %v126
    %1213 = vmatpush.msra.mxu0 %v122
    %1214 = vmatpush.msra.mxu0 %v118
    %1215 = vmatpush.msra.mxu0 %v114
    %1216 = vmatpush.msra.mxu0 %v110
    %1217 = vmatpush.msra.mxu0 %v106
    %1218 = vmatpush.msra.mxu0 %v102
    %1219 = vmatpush.msra.mxu0 %v98
    %1220 = vmatmul.f32.gmra.mxu0 %v990
    %v1221 = vpop.f32.mrf.mxu0
    %v1222 = vadd.f32 0.0, %v1221
    %1223 = vdwg.mxu0
    %1224 = vmatpush.msra.mxu0 %v159
    %1225 = vmatpush.msra.mxu0 %v155
    %1226 = vmatpush.msra.mxu0 %v151
    %1227 = vmatpush.msra.mxu0 %v147
    %1228 = vmatpush.msra.mxu0 %v143
    %1229 = vmatpush.msra.mxu0 %v139
    %1230 = vmatpush.msra.mxu0 %v135
    %1231 = vmatpush.msra.mxu0 %v131
    %1232 = vmatpush.msra.mxu0 %v127
    %1233 = vmatpush.msra.mxu0 %v123
    %1234 = vmatpush.msra.mxu0 %v119
    %1235 = vmatpush.msra.mxu0 %v115
    %1236 = vmatpush.msra.mxu0 %v111
    %1237 = vmatpush.msra.mxu0 %v107
    %1238 = vmatpush.msra.mxu0 %v103
    %1239 = vmatpush.msra.mxu0 %v99
    %1240 = vmatmul.f32.gmra.mxu0 %v990
    %v1241 = vpop.f32.mrf.mxu0
    %v1242 = vadd.f32 0.0, %v1241
    %1243 = vdwg.mxu0
    %1244 = vmatpush.msra.mxu0 %v160
    %1245 = vmatpush.msra.mxu0 %v156
    %1246 = vmatpush.msra.mxu0 %v152
    %1247 = vmatpush.msra.mxu0 %v148
    %1248 = vmatpush.msra.mxu0 %v144
    %1249 = vmatpush.msra.mxu0 %v140
    %1250 = vmatpush.msra.mxu0 %v136
    %1251 = vmatpush.msra.mxu0 %v132
    %1252 = vmatpush.msra.mxu0 %v128
    %1253 = vmatpush.msra.mxu0 %v124
    %1254 = vmatpush.msra.mxu0 %v120
    %1255 = vmatpush.msra.mxu0 %v116
    %1256 = vmatpush.msra.mxu0 %v112
    %1257 = vmatpush.msra.mxu0 %v108
    %1258 = vmatpush.msra.mxu0 %v104
    %1259 = vmatpush.msra.mxu0 %v100
    %1260 = vmatmul.f32.gmra.mxu0 %v990
    %v1261 = vpop.f32.mrf.mxu0
    %v1262 = vadd.f32 0.0, %v1261
    %1263 = vdwg.mxu0
    %v1264 = vadd.f32 %v1180, %v1202
    %v1265 = vadd.f32 %v1181, %v1222
    %v1266 = vadd.f32 %v1182, %v1242
    %v1267 = vadd.f32 %v1183, %v1262
    %v1268 = vmul.f32 %v1264, 0.5
    %v1269 = vmul.f32 %v1265, 0.5
    %v1270 = vmul.f32 %v1266, 0.5
    %v1271 = vtanh.pop %v1268
    %v1272 = vtanh.pop %v1269
    %v1273 = vtanh.pop %v1270
    %v1274 = vmul.f32 %v1271, 0.5
    %v1275 = vmul.f32 %v1272, 0.5
    %v1276 = vmul.f32 %v1273, 0.5
    %v1277 = vadd.f32 %v1274, 0.5
    %v1278 = vadd.f32 %v1275, 0.5
    %v1279 = vadd.f32 %v1276, 0.5
    %v1280 = vtanh.pop %v1267
    %v1281 = vmul.f32 %v1278, %v988
    %v1282 = vmul.f32 %v1277, %v1280
    %v1283 = vadd.f32 %v1281, %v1282
    %v1284 = vtanh.pop %v1283
    %v1285 = vmul.f32 %v1279, %v1284
    %1286 = vmatpush.msra.mxu0 %v323
    %1287 = vmatpush.msra.mxu0 %v319
    %1288 = vmatpush.msra.mxu0 %v315
    %1289 = vmatpush.msra.mxu0 %v311
    %1290 = vmatpush.msra.mxu0 %v307
    %1291 = vmatpush.msra.mxu0 %v303
    %1292 = vmatpush.msra.mxu0 %v299
    %1293 = vmatpush.msra.mxu0 %v295
    %1294 = vmatpush.msra.mxu0 %v291
    %1295 = vmatpush.msra.mxu0 %v287
    %1296 = vmatpush.msra.mxu0 %v283
    %1297 = vmatpush.msra.mxu0 %v279
    %1298 = vmatpush.msra.mxu0 %v275
    %1299 = vmatpush.msra.mxu0 %v271
    %1300 = vmatpush.msra.mxu0 %v267
    %1301 = vmatpush.msra.mxu0 %v263
    %1302 = vmatmul.f32.gmra.mxu0 %v1285
    %v1303 = vpop.f32.mrf.mxu0
    %v1304 = vadd.f32 %v393, %v1303
    %1305 = vdwg.mxu0
    %1306 = vmatpush.msra.mxu0 %v387
    %1307 = vmatpush.msra.mxu0 %v383
    %1308 = vmatpush.msra.mxu0 %v379
    %1309 = vmatpush.msra.mxu0 %v375
    %1310 = vmatpush.msra.mxu0 %v371
    %1311 = vmatpush.msra.mxu0 %v367
    %1312 = vmatpush.msra.mxu0 %v363
    %1313 = vmatpush.msra.mxu0 %v359
    %1314 = vmatpush.msra.mxu0 %v355
    %1315 = vmatpush.msra.mxu0 %v351
    %1316 = vmatpush.msra.mxu0 %v347
    %1317 = vmatpush.msra.mxu0 %v343
    %1318 = vmatpush.msra.mxu0 %v339
    %1319 = vmatpush.msra.mxu0 %v335
    %1320 = vmatpush.msra.mxu0 %v331
    %1321 = vmatpush.msra.mxu0 %v327
    %1322 = vmatmul.f32.gmra.mxu0 %v1168
    %v1323 = vpop.f32.mrf.mxu0
    %v1324 = vadd.f32 %v1304, %v1323
    %1325 = vdwg.mxu0
    %1326 = vmatpush.msra.mxu0 %v324
    %1327 = vmatpush.msra.mxu0 %v320
    %1328 = vmatpush.msra.mxu0 %v316
    %1329 = vmatpush.msra.mxu0 %v312
    %1330 = vmatpush.msra.mxu0 %v308
    %1331 = vmatpush.msra.mxu0 %v304
    %1332 = vmatpush.msra.mxu0 %v300
    %1333 = vmatpush.msra.mxu0 %v296
    %1334 = vmatpush.msra.mxu0 %v292
    %1335 = vmatpush.msra.mxu0 %v288
    %1336 = vmatpush.msra.mxu0 %v284
    %1337 = vmatpush.msra.mxu0 %v280
    %1338 = vmatpush.msra.mxu0 %v276
    %1339 = vmatpush.msra.mxu0 %v272
    %1340 = vmatpush.msra.mxu0 %v268
    %1341 = vmatpush.msra.mxu0 %v264
    %1342 = vmatmul.f32.gmra.mxu0 %v1285
    %v1343 = vpop.f32.mrf.mxu0
    %v1344 = vadd.f32 %v394, %v1343
    %1345 = vdwg.mxu0
    %1346 = vmatpush.msra.mxu0 %v388
    %1347 = vmatpush.msra.mxu0 %v384
    %1348 = vmatpush.msra.mxu0 %v380
    %1349 = vmatpush.msra.mxu0 %v376
    %1350 = vmatpush.msra.mxu0 %v372
    %1351 = vmatpush.msra.mxu0 %v368
    %1352 = vmatpush.msra.mxu0 %v364
    %1353 = vmatpush.msra.mxu0 %v360
    %1354 = vmatpush.msra.mxu0 %v356
    %1355 = vmatpush.msra.mxu0 %v352
    %1356 = vmatpush.msra.mxu0 %v348
    %1357 = vmatpush.msra.mxu0 %v344
    %1358 = vmatpush.msra.mxu0 %v340
    %1359 = vmatpush.msra.mxu0 %v336
    %1360 = vmatpush.msra.mxu0 %v332
    %1361 = vmatpush.msra.mxu0 %v328
    %1362 = vmatmul.f32.gmra.mxu0 %v1168
    %v1363 = vpop.f32.mrf.mxu0
    %v1364 = vadd.f32 %v1344, %v1363
    %1365 = vdwg.mxu0
    %1366 = vmatpush.msra.mxu0 %v325
    %1367 = vmatpush.msra.mxu0 %v321
    %1368 = vmatpush.msra.mxu0 %v317
    %1369 = vmatpush.msra.mxu0 %v313
    %1370 = vmatpush.msra.mxu0 %v309
    %1371 = vmatpush.msra.mxu0 %v305
    %1372 = vmatpush.msra.mxu0 %v301
    %1373 = vmatpush.msra.mxu0 %v297
    %1374 = vmatpush.msra.mxu0 %v293
    %1375 = vmatpush.msra.mxu0 %v289
    %1376 = vmatpush.msra.mxu0 %v285
    %1377 = vmatpush.msra.mxu0 %v281
    %1378 = vmatpush.msra.mxu0 %v277
    %1379 = vmatpush.msra.mxu0 %v273
    %1380 = vmatpush.msra.mxu0 %v269
    %1381 = vmatpush.msra.mxu0 %v265
    %1382 = vmatmul.f32.gmra.mxu0 %v1285
    %v1383 = vpop.f32.mrf.mxu0
    %v1384 = vadd.f32 %v395, %v1383
    %1385 = vdwg.mxu0
    %1386 = vmatpush.msra.mxu0 %v389
    %1387 = vmatpush.msra.mxu0 %v385
    %1388 = vmatpush.msra.mxu0 %v381
    %1389 = vmatpush.msra.mxu0 %v377
    %1390 = vmatpush.msra.mxu0 %v373
    %1391 = vmatpush.msra.mxu0 %v369
    %1392 = vmatpush.msra.mxu0 %v365
    %1393 = vmatpush.msra.mxu0 %v361
    %1394 = vmatpush.msra.mxu0 %v357
    %1395 = vmatpush.msra.mxu0 %v353
    %1396 = vmatpush.msra.mxu0 %v349
    %1397 = vmatpush.msra.mxu0 %v345
    %1398 = vmatpush.msra.mxu0 %v341
    %1399 = vmatpush.msra.mxu0 %v337
    %1400 = vmatpush.msra.mxu0 %v333
    %1401 = vmatpush.msra.mxu0 %v329
    %1402 = vmatmul.f32.gmra.mxu0 %v1168
    %v1403 = vpop.f32.mrf.mxu0
    %v1404 = vadd.f32 %v1384, %v1403
    %1405 = vdwg.mxu0
    %1406 = vmatpush.msra.mxu0 %v326
    %1407 = vmatpush.msra.mxu0 %v322
    %1408 = vmatpush.msra.mxu0 %v318
    %1409 = vmatpush.msra.mxu0 %v314
    %1410 = vmatpush.msra.mxu0 %v310
    %1411 = vmatpush.msra.mxu0 %v306
    %1412 = vmatpush.msra.mxu0 %v302
    %1413 = vmatpush.msra.mxu0 %v298
    %1414 = vmatpush.msra.mxu0 %v294
    %1415 = vmatpush.msra.mxu0 %v290
    %1416 = vmatpush.msra.mxu0 %v286
    %1417 = vmatpush.msra.mxu0 %v282
    %1418 = vmatpush.msra.mxu0 %v278
    %1419 = vmatpush.msra.mxu0 %v274
    %1420 = vmatpush.msra.mxu0 %v270
    %1421 = vmatpush.msra.mxu0 %v266
    %1422 = vmatmul.f32.gmra.mxu0 %v1285
    %v1423 = vpop.f32.mrf.mxu0
    %v1424 = vadd.f32 %v396, %v1423
    %1425 = vdwg.mxu0
    %1426 = vmatpush.msra.mxu0 %v390
    %1427 = vmatpush.msra.mxu0 %v386
    %1428 = vmatpush.msra.mxu0 %v382
    %1429 = vmatpush.msra.mxu0 %v378
    %1430 = vmatpush.msra.mxu0 %v374
    %1431 = vmatpush.msra.mxu0 %v370
    %1432 = vmatpush.msra.mxu0 %v366
    %1433 = vmatpush.msra.mxu0 %v362
    %1434 = vmatpush.msra.mxu0 %v358
    %1435 = vmatpush.msra.mxu0 %v354
    %1436 = vmatpush.msra.mxu0 %v350
    %1437 = vmatpush.msra.mxu0 %v346
    %1438 = vmatpush.msra.mxu0 %v342
    %1439 = vmatpush.msra.mxu0 %v338
    %1440 = vmatpush.msra.mxu0 %v334
    %1441 = vmatpush.msra.mxu0 %v330
    %1442 = vmatmul.f32.gmra.mxu0 %v1168
    %v1443 = vpop.f32.mrf.mxu0
    %v1444 = vadd.f32 %v1424, %v1443
    %1445 = vdwg.mxu0
    %v1446 = vmul.f32 %v1324, 0.5
    %v1447 = vmul.f32 %v1364, 0.5
    %v1448 = vmul.f32 %v1404, 0.5
    %v1449 = vtanh.pop %v1446
    %v1450 = vtanh.pop %v1447
    %v1451 = vtanh.pop %v1448
    %v1452 = vmul.f32 %v1449, 0.5
    %v1453 = vmul.f32 %v1450, 0.5
    %v1454 = vmul.f32 %v1451, 0.5
    %v1455 = vadd.f32 %v1452, 0.5
    %v1456 = vadd.f32 %v1453, 0.5
    %v1457 = vadd.f32 %v1454, 0.5
    %v1458 = vtanh.pop %v1444
    %v1459 = vmul.f32 %v1456, %v1166
    %v1460 = vmul.f32 %v1455, %v1458
    %v1461 = vadd.f32 %v1459, %v1460
    %v1462 = vtanh.pop %v1461
    %v1463 = vmul.f32 %v1457, %v1462
    %s1464 = scalar_lea.vmem %s0, 32
    %v1465 = vld [vmem:[%s1464] sm:$0xff]
    %1467 = vset.pattern.permute.xlu0 0
    %1468 = vperm.xlu0 %1467, %v1465
    %v1469 = vpop.permute.xlu0 %1468
    %v1471 = vmul.f32 %v1469, %v71
    %v1472 = vmul.f32 %v1469, %v72
    %v1473 = vmul.f32 %v1469, %v73
    %v1474 = vmul.f32 %v1469, %v74
    %v1475 = vadd.f32 %v1471, %v85
    %v1476 = vadd.f32 %v1472, %v86
    %v1477 = vadd.f32 %v1473, %v87
    %v1478 = vadd.f32 %v1474, %v88
    %1479 = vmatpush.msra.mxu0 %v157
    %1480 = vmatpush.msra.mxu0 %v153
    %1481 = vmatpush.msra.mxu0 %v149
    %1482 = vmatpush.msra.mxu0 %v145
    %1483 = vmatpush.msra.mxu0 %v141
    %1484 = vmatpush.msra.mxu0 %v137
    %1485 = vmatpush.msra.mxu0 %v133
    %1486 = vmatpush.msra.mxu0 %v129
    %1487 = vmatpush.msra.mxu0 %v125
    %1488 = vmatpush.msra.mxu0 %v121
    %1489 = vmatpush.msra.mxu0 %v117
    %1490 = vmatpush.msra.mxu0 %v113
    %1491 = vmatpush.msra.mxu0 %v109
    %1492 = vmatpush.msra.mxu0 %v105
    %1493 = vmatpush.msra.mxu0 %v101
    %1494 = vmatpush.msra.mxu0 %v97
    %1495 = vmatmul.f32.gmra.mxu0 %v1285
    %v1496 = vpop.f32.mrf.mxu0
    %v1497 = vadd.f32 0.0, %v1496
    %1498 = vdwg.mxu0
    %1499 = vmatpush.msra.mxu0 %v158
    %1500 = vmatpush.msra.mxu0 %v154
    %1501 = vmatpush.msra.mxu0 %v150
    %1502 = vmatpush.msra.mxu0 %v146
    %1503 = vmatpush.msra.mxu0 %v142
    %1504 = vmatpush.msra.mxu0 %v138
    %1505 = vmatpush.msra.mxu0 %v134
    %1506 = vmatpush.msra.mxu0 %v130
    %1507 = vmatpush.msra.mxu0 %v126
    %1508 = vmatpush.msra.mxu0 %v122
    %1509 = vmatpush.msra.mxu0 %v118
    %1510 = vmatpush.msra.mxu0 %v114
    %1511 = vmatpush.msra.mxu0 %v110
    %1512 = vmatpush.msra.mxu0 %v106
    %1513 = vmatpush.msra.mxu0 %v102
    %1514 = vmatpush.msra.mxu0 %v98
    %1515 = vmatmul.f32.gmra.mxu0 %v1285
    %v1516 = vpop.f32.mrf.mxu0
    %v1517 = vadd.f32 0.0, %v1516
    %1518 = vdwg.mxu0
    %1519 = vmatpush.msra.mxu0 %v159
    %1520 = vmatpush.msra.mxu0 %v155
    %1521 = vmatpush.msra.mxu0 %v151
    %1522 = vmatpush.msra.mxu0 %v147
    %1523 = vmatpush.msra.mxu0 %v143
    %1524 = vmatpush.msra.mxu0 %v139
    %1525 = vmatpush.msra.mxu0 %v135
    %1526 = vmatpush.msra.mxu0 %v131
    %1527 = vmatpush.msra.mxu0 %v127
    %1528 = vmatpush.msra.mxu0 %v123
    %1529 = vmatpush.msra.mxu0 %v119
    %1530 = vmatpush.msra.mxu0 %v115
    %1531 = vmatpush.msra.mxu0 %v111
    %1532 = vmatpush.msra.mxu0 %v107
    %1533 = vmatpush.msra.mxu0 %v103
    %1534 = vmatpush.msra.mxu0 %v99
    %1535 = vmatmul.f32.gmra.mxu0 %v1285
    %v1536 = vpop.f32.mrf.mxu0
    %v1537 = vadd.f32 0.0, %v1536
    %1538 = vdwg.mxu0
    %1539 = vmatpush.msra.mxu0 %v160
    %1540 = vmatpush.msra.mxu0 %v156
    %1541 = vmatpush.msra.mxu0 %v152
    %1542 = vmatpush.msra.mxu0 %v148
    %1543 = vmatpush.msra.mxu0 %v144
    %1544 = vmatpush.msra.mxu0 %v140
    %1545 = vmatpush.msra.mxu0 %v136
    %1546 = vmatpush.msra.mxu0 %v132
    %1547 = vmatpush.msra.mxu0 %v128
    %1548 = vmatpush.msra.mxu0 %v124
    %1549 = vmatpush.msra.mxu0 %v120
    %1550 = vmatpush.msra.mxu0 %v116
    %1551 = vmatpush.msra.mxu0 %v112
    %1552 = vmatpush.msra.mxu0 %v108
    %1553 = vmatpush.msra.mxu0 %v104
    %1554 = vmatpush.msra.mxu0 %v100
    %1555 = vmatmul.f32.gmra.mxu0 %v1285
    %v1556 = vpop.f32.mrf.mxu0
    %v1557 = vadd.f32 0.0, %v1556
    %1558 = vdwg.mxu0
    %v1559 = vadd.f32 %v1475, %v1497
    %v1560 = vadd.f32 %v1476, %v1517
    %v1561 = vadd.f32 %v1477, %v1537
    %v1562 = vadd.f32 %v1478, %v1557
    %v1563 = vmul.f32 %v1559, 0.5
    %v1564 = vmul.f32 %v1560, 0.5
    %v1565 = vmul.f32 %v1561, 0.5
    %v1566 = vtanh.pop %v1563
    %v1567 = vtanh.pop %v1564
    %v1568 = vtanh.pop %v1565
    %v1569 = vmul.f32 %v1566, 0.5
    %v1570 = vmul.f32 %v1567, 0.5
    %v1571 = vmul.f32 %v1568, 0.5
    %v1572 = vadd.f32 %v1569, 0.5
    %v1573 = vadd.f32 %v1570, 0.5
    %v1574 = vadd.f32 %v1571, 0.5
    %v1575 = vtanh.pop %v1562
    %v1576 = vmul.f32 %v1573, %v1283
    %v1577 = vmul.f32 %v1572, %v1575
    %v1578 = vadd.f32 %v1576, %v1577
    %v1579 = vtanh.pop %v1578
    %v1580 = vmul.f32 %v1574, %v1579
    %1581 = vmatpush.msra.mxu0 %v323
    %1582 = vmatpush.msra.mxu0 %v319
    %1583 = vmatpush.msra.mxu0 %v315
    %1584 = vmatpush.msra.mxu0 %v311
    %1585 = vmatpush.msra.mxu0 %v307
    %1586 = vmatpush.msra.mxu0 %v303
    %1587 = vmatpush.msra.mxu0 %v299
    %1588 = vmatpush.msra.mxu0 %v295
    %1589 = vmatpush.msra.mxu0 %v291
    %1590 = vmatpush.msra.mxu0 %v287
    %1591 = vmatpush.msra.mxu0 %v283
    %1592 = vmatpush.msra.mxu0 %v279
    %1593 = vmatpush.msra.mxu0 %v275
    %1594 = vmatpush.msra.mxu0 %v271
    %1595 = vmatpush.msra.mxu0 %v267
    %1596 = vmatpush.msra.mxu0 %v263
    %1597 = vmatmul.f32.gmra.mxu0 %v1580
    %v1598 = vpop.f32.mrf.mxu0
    %v1599 = vadd.f32 %v393, %v1598
    %1600 = vdwg.mxu0
    %1601 = vmatpush.msra.mxu0 %v387
    %1602 = vmatpush.msra.mxu0 %v383
    %1603 = vmatpush.msra.mxu0 %v379
    %1604 = vmatpush.msra.mxu0 %v375
    %1605 = vmatpush.msra.mxu0 %v371
    %1606 = vmatpush.msra.mxu0 %v367
    %1607 = vmatpush.msra.mxu0 %v363
    %1608 = vmatpush.msra.mxu0 %v359
    %1609 = vmatpush.msra.mxu0 %v355
    %1610 = vmatpush.msra.mxu0 %v351
    %1611 = vmatpush.msra.mxu0 %v347
    %1612 = vmatpush.msra.mxu0 %v343
    %1613 = vmatpush.msra.mxu0 %v339
    %1614 = vmatpush.msra.mxu0 %v335
    %1615 = vmatpush.msra.mxu0 %v331
    %1616 = vmatpush.msra.mxu0 %v327
    %1617 = vmatmul.f32.gmra.mxu0 %v1463
    %v1618 = vpop.f32.mrf.mxu0
    %v1619 = vadd.f32 %v1599, %v1618
    %1620 = vdwg.mxu0
    %1621 = vmatpush.msra.mxu0 %v324
    %1622 = vmatpush.msra.mxu0 %v320
    %1623 = vmatpush.msra.mxu0 %v316
    %1624 = vmatpush.msra.mxu0 %v312
    %1625 = vmatpush.msra.mxu0 %v308
    %1626 = vmatpush.msra.mxu0 %v304
    %1627 = vmatpush.msra.mxu0 %v300
    %1628 = vmatpush.msra.mxu0 %v296
    %1629 = vmatpush.msra.mxu0 %v292
    %1630 = vmatpush.msra.mxu0 %v288
    %1631 = vmatpush.msra.mxu0 %v284
    %1632 = vmatpush.msra.mxu0 %v280
    %1633 = vmatpush.msra.mxu0 %v276
    %1634 = vmatpush.msra.mxu0 %v272
    %1635 = vmatpush.msra.mxu0 %v268
    %1636 = vmatpush.msra.mxu0 %v264
    %1637 = vmatmul.f32.gmra.mxu0 %v1580
    %v1638 = vpop.f32.mrf.mxu0
    %v1639 = vadd.f32 %v394, %v1638
    %1640 = vdwg.mxu0
    %1641 = vmatpush.msra.mxu0 %v388
    %1642 = vmatpush.msra.mxu0 %v384
    %1643 = vmatpush.msra.mxu0 %v380
    %1644 = vmatpush.msra.mxu0 %v376
    %1645 = vmatpush.msra.mxu0 %v372
    %1646 = vmatpush.msra.mxu0 %v368
    %1647 = vmatpush.msra.mxu0 %v364
    %1648 = vmatpush.msra.mxu0 %v360
    %1649 = vmatpush.msra.mxu0 %v356
    %1650 = vmatpush.msra.mxu0 %v352
    %1651 = vmatpush.msra.mxu0 %v348
    %1652 = vmatpush.msra.mxu0 %v344
    %1653 = vmatpush.msra.mxu0 %v340
    %1654 = vmatpush.msra.mxu0 %v336
    %1655 = vmatpush.msra.mxu0 %v332
    %1656 = vmatpush.msra.mxu0 %v328
    %1657 = vmatmul.f32.gmra.mxu0 %v1463
    %v1658 = vpop.f32.mrf.mxu0
    %v1659 = vadd.f32 %v1639, %v1658
    %1660 = vdwg.mxu0
    %1661 = vmatpush.msra.mxu0 %v325
    %1662 = vmatpush.msra.mxu0 %v321
    %1663 = vmatpush.msra.mxu0 %v317
    %1664 = vmatpush.msra.mxu0 %v313
    %1665 = vmatpush.msra.mxu0 %v309
    %1666 = vmatpush.msra.mxu0 %v305
    %1667 = vmatpush.msra.mxu0 %v301
    %1668 = vmatpush.msra.mxu0 %v297
    %1669 = vmatpush.msra.mxu0 %v293
    %1670 = vmatpush.msra.mxu0 %v289
    %1671 = vmatpush.msra.mxu0 %v285
    %1672 = vmatpush.msra.mxu0 %v281
    %1673 = vmatpush.msra.mxu0 %v277
    %1674 = vmatpush.msra.mxu0 %v273
    %1675 = vmatpush.msra.mxu0 %v269
    %1676 = vmatpush.msra.mxu0 %v265
    %1677 = vmatmul.f32.gmra.mxu0 %v1580
    %v1678 = vpop.f32.mrf.mxu0
    %v1679 = vadd.f32 %v395, %v1678
    %1680 = vdwg.mxu0
    %1681 = vmatpush.msra.mxu0 %v389
    %1682 = vmatpush.msra.mxu0 %v385
    %1683 = vmatpush.msra.mxu0 %v381
    %1684 = vmatpush.msra.mxu0 %v377
    %1685 = vmatpush.msra.mxu0 %v373
    %1686 = vmatpush.msra.mxu0 %v369
    %1687 = vmatpush.msra.mxu0 %v365
    %1688 = vmatpush.msra.mxu0 %v361
    %1689 = vmatpush.msra.mxu0 %v357
    %1690 = vmatpush.msra.mxu0 %v353
    %1691 = vmatpush.msra.mxu0 %v349
    %1692 = vmatpush.msra.mxu0 %v345
    %1693 = vmatpush.msra.mxu0 %v341
    %1694 = vmatpush.msra.mxu0 %v337
    %1695 = vmatpush.msra.mxu0 %v333
    %1696 = vmatpush.msra.mxu0 %v329
    %1697 = vmatmul.f32.gmra.mxu0 %v1463
    %v1698 = vpop.f32.mrf.mxu0
    %v1699 = vadd.f32 %v1679, %v1698
    %1700 = vdwg.mxu0
    %1701 = vmatpush.msra.mxu0 %v326
    %1702 = vmatpush.msra.mxu0 %v322
    %1703 = vmatpush.msra.mxu0 %v318
    %1704 = vmatpush.msra.mxu0 %v314
    %1705 = vmatpush.msra.mxu0 %v310
    %1706 = vmatpush.msra.mxu0 %v306
    %1707 = vmatpush.msra.mxu0 %v302
    %1708 = vmatpush.msra.mxu0 %v298
    %1709 = vmatpush.msra.mxu0 %v294
    %1710 = vmatpush.msra.mxu0 %v290
    %1711 = vmatpush.msra.mxu0 %v286
    %1712 = vmatpush.msra.mxu0 %v282
    %1713 = vmatpush.msra.mxu0 %v278
    %1714 = vmatpush.msra.mxu0 %v274
    %1715 = vmatpush.msra.mxu0 %v270
    %1716 = vmatpush.msra.mxu0 %v266
    %1717 = vmatmul.f32.gmra.mxu0 %v1580
    %v1718 = vpop.f32.mrf.mxu0
    %v1719 = vadd.f32 %v396, %v1718
    %1720 = vdwg.mxu0
    %1721 = vmatpush.msra.mxu0 %v390
    %1722 = vmatpush.msra.mxu0 %v386
    %1723 = vmatpush.msra.mxu0 %v382
    %1724 = vmatpush.msra.mxu0 %v378
    %1725 = vmatpush.msra.mxu0 %v374
    %1726 = vmatpush.msra.mxu0 %v370
    %1727 = vmatpush.msra.mxu0 %v366
    %1728 = vmatpush.msra.mxu0 %v362
    %1729 = vmatpush.msra.mxu0 %v358
    %1730 = vmatpush.msra.mxu0 %v354
    %1731 = vmatpush.msra.mxu0 %v350
    %1732 = vmatpush.msra.mxu0 %v346
    %1733 = vmatpush.msra.mxu0 %v342
    %1734 = vmatpush.msra.mxu0 %v338
    %1735 = vmatpush.msra.mxu0 %v334
    %1736 = vmatpush.msra.mxu0 %v330
    %1737 = vmatmul.f32.gmra.mxu0 %v1463
    %v1738 = vpop.f32.mrf.mxu0
    %v1739 = vadd.f32 %v1719, %v1738
    %1740 = vdwg.mxu0
    %v1741 = vmul.f32 %v1619, 0.5
    %v1742 = vmul.f32 %v1659, 0.5
    %v1743 = vmul.f32 %v1699, 0.5
    %v1744 = vtanh.pop %v1741
    %v1745 = vtanh.pop %v1742
    %v1746 = vtanh.pop %v1743
    %v1747 = vmul.f32 %v1744, 0.5
    %v1748 = vmul.f32 %v1745, 0.5
    %v1749 = vmul.f32 %v1746, 0.5
    %v1750 = vadd.f32 %v1747, 0.5
    %v1751 = vadd.f32 %v1748, 0.5
    %v1752 = vadd.f32 %v1749, 0.5
    %v1753 = vtanh.pop %v1739
    %v1754 = vmul.f32 %v1751, %v1461
    %v1755 = vmul.f32 %v1750, %v1753
    %v1756 = vadd.f32 %v1754, %v1755
    %v1757 = vtanh.pop %v1756
    %v1758 = vmul.f32 %v1752, %v1757
    %s1759 = scalar_lea.vmem %s0, 40
    %v1760 = vld [vmem:[%s1759] sm:$0xff]
    %1762 = vset.pattern.permute.xlu0 0
    %1763 = vperm.xlu0 %1762, %v1760
    %v1764 = vpop.permute.xlu0 %1763
    %v1766 = vmul.f32 %v1764, %v71
    %v1767 = vmul.f32 %v1764, %v72
    %v1768 = vmul.f32 %v1764, %v73
    %v1769 = vmul.f32 %v1764, %v74
    %v1770 = vadd.f32 %v1766, %v85
    %v1771 = vadd.f32 %v1767, %v86
    %v1772 = vadd.f32 %v1768, %v87
    %v1773 = vadd.f32 %v1769, %v88
    %1774 = vmatpush.msra.mxu0 %v157
    %1775 = vmatpush.msra.mxu0 %v153
    %1776 = vmatpush.msra.mxu0 %v149
    %1777 = vmatpush.msra.mxu0 %v145
    %1778 = vmatpush.msra.mxu0 %v141
    %1779 = vmatpush.msra.mxu0 %v137
    %1780 = vmatpush.msra.mxu0 %v133
    %1781 = vmatpush.msra.mxu0 %v129
    %1782 = vmatpush.msra.mxu0 %v125
    %1783 = vmatpush.msra.mxu0 %v121
    %1784 = vmatpush.msra.mxu0 %v117
    %1785 = vmatpush.msra.mxu0 %v113
    %1786 = vmatpush.msra.mxu0 %v109
    %1787 = vmatpush.msra.mxu0 %v105
    %1788 = vmatpush.msra.mxu0 %v101
    %1789 = vmatpush.msra.mxu0 %v97
    %1790 = vmatmul.f32.gmra.mxu0 %v1580
    %v1791 = vpop.f32.mrf.mxu0
    %v1792 = vadd.f32 0.0, %v1791
    %1793 = vdwg.mxu0
    %1794 = vmatpush.msra.mxu0 %v158
    %1795 = vmatpush.msra.mxu0 %v154
    %1796 = vmatpush.msra.mxu0 %v150
    %1797 = vmatpush.msra.mxu0 %v146
    %1798 = vmatpush.msra.mxu0 %v142
    %1799 = vmatpush.msra.mxu0 %v138
    %1800 = vmatpush.msra.mxu0 %v134
    %1801 = vmatpush.msra.mxu0 %v130
    %1802 = vmatpush.msra.mxu0 %v126
    %1803 = vmatpush.msra.mxu0 %v122
    %1804 = vmatpush.msra.mxu0 %v118
    %1805 = vmatpush.msra.mxu0 %v114
    %1806 = vmatpush.msra.mxu0 %v110
    %1807 = vmatpush.msra.mxu0 %v106
    %1808 = vmatpush.msra.mxu0 %v102
    %1809 = vmatpush.msra.mxu0 %v98
    %1810 = vmatmul.f32.gmra.mxu0 %v1580
    %v1811 = vpop.f32.mrf.mxu0
    %v1812 = vadd.f32 0.0, %v1811
    %1813 = vdwg.mxu0
    %1814 = vmatpush.msra.mxu0 %v159
    %1815 = vmatpush.msra.mxu0 %v155
    %1816 = vmatpush.msra.mxu0 %v151
    %1817 = vmatpush.msra.mxu0 %v147
    %1818 = vmatpush.msra.mxu0 %v143
    %1819 = vmatpush.msra.mxu0 %v139
    %1820 = vmatpush.msra.mxu0 %v135
    %1821 = vmatpush.msra.mxu0 %v131
    %1822 = vmatpush.msra.mxu0 %v127
    %1823 = vmatpush.msra.mxu0 %v123
    %1824 = vmatpush.msra.mxu0 %v119
    %1825 = vmatpush.msra.mxu0 %v115
    %1826 = vmatpush.msra.mxu0 %v111
    %1827 = vmatpush.msra.mxu0 %v107
    %1828 = vmatpush.msra.mxu0 %v103
    %1829 = vmatpush.msra.mxu0 %v99
    %1830 = vmatmul.f32.gmra.mxu0 %v1580
    %v1831 = vpop.f32.mrf.mxu0
    %v1832 = vadd.f32 0.0, %v1831
    %1833 = vdwg.mxu0
    %1834 = vmatpush.msra.mxu0 %v160
    %1835 = vmatpush.msra.mxu0 %v156
    %1836 = vmatpush.msra.mxu0 %v152
    %1837 = vmatpush.msra.mxu0 %v148
    %1838 = vmatpush.msra.mxu0 %v144
    %1839 = vmatpush.msra.mxu0 %v140
    %1840 = vmatpush.msra.mxu0 %v136
    %1841 = vmatpush.msra.mxu0 %v132
    %1842 = vmatpush.msra.mxu0 %v128
    %1843 = vmatpush.msra.mxu0 %v124
    %1844 = vmatpush.msra.mxu0 %v120
    %1845 = vmatpush.msra.mxu0 %v116
    %1846 = vmatpush.msra.mxu0 %v112
    %1847 = vmatpush.msra.mxu0 %v108
    %1848 = vmatpush.msra.mxu0 %v104
    %1849 = vmatpush.msra.mxu0 %v100
    %1850 = vmatmul.f32.gmra.mxu0 %v1580
    %v1851 = vpop.f32.mrf.mxu0
    %v1852 = vadd.f32 0.0, %v1851
    %1853 = vdwg.mxu0
    %v1854 = vadd.f32 %v1770, %v1792
    %v1855 = vadd.f32 %v1771, %v1812
    %v1856 = vadd.f32 %v1772, %v1832
    %v1857 = vadd.f32 %v1773, %v1852
    %v1858 = vmul.f32 %v1854, 0.5
    %v1859 = vmul.f32 %v1855, 0.5
    %v1860 = vmul.f32 %v1856, 0.5
    %v1861 = vtanh.pop %v1858
    %v1862 = vtanh.pop %v1859
    %v1863 = vtanh.pop %v1860
    %v1864 = vmul.f32 %v1861, 0.5
    %v1865 = vmul.f32 %v1862, 0.5
    %v1866 = vmul.f32 %v1863, 0.5
    %v1867 = vadd.f32 %v1864, 0.5
    %v1868 = vadd.f32 %v1865, 0.5
    %v1869 = vadd.f32 %v1866, 0.5
    %v1870 = vtanh.pop %v1857
    %v1871 = vmul.f32 %v1868, %v1578
    %v1872 = vmul.f32 %v1867, %v1870
    %v1873 = vadd.f32 %v1871, %v1872
    %v1874 = vtanh.pop %v1873
    %v1875 = vmul.f32 %v1869, %v1874
    %1876 = vmatpush.msra.mxu0 %v323
    %1877 = vmatpush.msra.mxu0 %v319
    %1878 = vmatpush.msra.mxu0 %v315
    %1879 = vmatpush.msra.mxu0 %v311
    %1880 = vmatpush.msra.mxu0 %v307
    %1881 = vmatpush.msra.mxu0 %v303
    %1882 = vmatpush.msra.mxu0 %v299
    %1883 = vmatpush.msra.mxu0 %v295
    %1884 = vmatpush.msra.mxu0 %v291
    %1885 = vmatpush.msra.mxu0 %v287
    %1886 = vmatpush.msra.mxu0 %v283
    %1887 = vmatpush.msra.mxu0 %v279
    %1888 = vmatpush.msra.mxu0 %v275
    %1889 = vmatpush.msra.mxu0 %v271
    %1890 = vmatpush.msra.mxu0 %v267
    %1891 = vmatpush.msra.mxu0 %v263
    %1892 = vmatmul.f32.gmra.mxu0 %v1875
    %v1893 = vpop.f32.mrf.mxu0
    %v1894 = vadd.f32 %v393, %v1893
    %1895 = vdwg.mxu0
    %1896 = vmatpush.msra.mxu0 %v387
    %1897 = vmatpush.msra.mxu0 %v383
    %1898 = vmatpush.msra.mxu0 %v379
    %1899 = vmatpush.msra.mxu0 %v375
    %1900 = vmatpush.msra.mxu0 %v371
    %1901 = vmatpush.msra.mxu0 %v367
    %1902 = vmatpush.msra.mxu0 %v363
    %1903 = vmatpush.msra.mxu0 %v359
    %1904 = vmatpush.msra.mxu0 %v355
    %1905 = vmatpush.msra.mxu0 %v351
    %1906 = vmatpush.msra.mxu0 %v347
    %1907 = vmatpush.msra.mxu0 %v343
    %1908 = vmatpush.msra.mxu0 %v339
    %1909 = vmatpush.msra.mxu0 %v335
    %1910 = vmatpush.msra.mxu0 %v331
    %1911 = vmatpush.msra.mxu0 %v327
    %1912 = vmatmul.f32.gmra.mxu0 %v1758
    %v1913 = vpop.f32.mrf.mxu0
    %v1914 = vadd.f32 %v1894, %v1913
    %1915 = vdwg.mxu0
    %1916 = vmatpush.msra.mxu0 %v324
    %1917 = vmatpush.msra.mxu0 %v320
    %1918 = vmatpush.msra.mxu0 %v316
    %1919 = vmatpush.msra.mxu0 %v312
    %1920 = vmatpush.msra.mxu0 %v308
    %1921 = vmatpush.msra.mxu0 %v304
    %1922 = vmatpush.msra.mxu0 %v300
    %1923 = vmatpush.msra.mxu0 %v296
    %1924 = vmatpush.msra.mxu0 %v292
    %1925 = vmatpush.msra.mxu0 %v288
    %1926 = vmatpush.msra.mxu0 %v284
    %1927 = vmatpush.msra.mxu0 %v280
    %1928 = vmatpush.msra.mxu0 %v276
    %1929 = vmatpush.msra.mxu0 %v272
    %1930 = vmatpush.msra.mxu0 %v268
    %1931 = vmatpush.msra.mxu0 %v264
    %1932 = vmatmul.f32.gmra.mxu0 %v1875
    %v1933 = vpop.f32.mrf.mxu0
    %v1934 = vadd.f32 %v394, %v1933
    %1935 = vdwg.mxu0
    %1936 = vmatpush.msra.mxu0 %v388
    %1937 = vmatpush.msra.mxu0 %v384
    %1938 = vmatpush.msra.mxu0 %v380
    %1939 = vmatpush.msra.mxu0 %v376
    %1940 = vmatpush.msra.mxu0 %v372
    %1941 = vmatpush.msra.mxu0 %v368
    %1942 = vmatpush.msra.mxu0 %v364
    %1943 = vmatpush.msra.mxu0 %v360
    %1944 = vmatpush.msra.mxu0 %v356
    %1945 = vmatpush.msra.mxu0 %v352
    %1946 = vmatpush.msra.mxu0 %v348
    %1947 = vmatpush.msra.mxu0 %v344
    %1948 = vmatpush.msra.mxu0 %v340
    %1949 = vmatpush.msra.mxu0 %v336
    %1950 = vmatpush.msra.mxu0 %v332
    %1951 = vmatpush.msra.mxu0 %v328
    %1952 = vmatmul.f32.gmra.mxu0 %v1758
    %v1953 = vpop.f32.mrf.mxu0
    %v1954 = vadd.f32 %v1934, %v1953
    %1955 = vdwg.mxu0
    %1956 = vmatpush.msra.mxu0 %v325
    %1957 = vmatpush.msra.mxu0 %v321
    %1958 = vmatpush.msra.mxu0 %v317
    %1959 = vmatpush.msra.mxu0 %v313
    %1960 = vmatpush.msra.mxu0 %v309
    %1961 = vmatpush.msra.mxu0 %v305
    %1962 = vmatpush.msra.mxu0 %v301
    %1963 = vmatpush.msra.mxu0 %v297
    %1964 = vmatpush.msra.mxu0 %v293
    %1965 = vmatpush.msra.mxu0 %v289
    %1966 = vmatpush.msra.mxu0 %v285
    %1967 = vmatpush.msra.mxu0 %v281
    %1968 = vmatpush.msra.mxu0 %v277
    %1969 = vmatpush.msra.mxu0 %v273
    %1970 = vmatpush.msra.mxu0 %v269
    %1971 = vmatpush.msra.mxu0 %v265
    %1972 = vmatmul.f32.gmra.mxu0 %v1875
    %v1973 = vpop.f32.mrf.mxu0
    %v1974 = vadd.f32 %v395, %v1973
    %1975 = vdwg.mxu0
    %1976 = vmatpush.msra.mxu0 %v389
    %1977 = vmatpush.msra.mxu0 %v385
    %1978 = vmatpush.msra.mxu0 %v381
    %1979 = vmatpush.msra.mxu0 %v377
    %1980 = vmatpush.msra.mxu0 %v373
    %1981 = vmatpush.msra.mxu0 %v369
    %1982 = vmatpush.msra.mxu0 %v365
    %1983 = vmatpush.msra.mxu0 %v361
    %1984 = vmatpush.msra.mxu0 %v357
    %1985 = vmatpush.msra.mxu0 %v353
    %1986 = vmatpush.msra.mxu0 %v349
    %1987 = vmatpush.msra.mxu0 %v345
    %1988 = vmatpush.msra.mxu0 %v341
    %1989 = vmatpush.msra.mxu0 %v337
    %1990 = vmatpush.msra.mxu0 %v333
    %1991 = vmatpush.msra.mxu0 %v329
    %1992 = vmatmul.f32.gmra.mxu0 %v1758
    %v1993 = vpop.f32.mrf.mxu0
    %v1994 = vadd.f32 %v1974, %v1993
    %1995 = vdwg.mxu0
    %1996 = vmatpush.msra.mxu0 %v326
    %1997 = vmatpush.msra.mxu0 %v322
    %1998 = vmatpush.msra.mxu0 %v318
    %1999 = vmatpush.msra.mxu0 %v314
    %2000 = vmatpush.msra.mxu0 %v310
    %2001 = vmatpush.msra.mxu0 %v306
    %2002 = vmatpush.msra.mxu0 %v302
    %2003 = vmatpush.msra.mxu0 %v298
    %2004 = vmatpush.msra.mxu0 %v294
    %2005 = vmatpush.msra.mxu0 %v290
    %2006 = vmatpush.msra.mxu0 %v286
    %2007 = vmatpush.msra.mxu0 %v282
    %2008 = vmatpush.msra.mxu0 %v278
    %2009 = vmatpush.msra.mxu0 %v274
    %2010 = vmatpush.msra.mxu0 %v270
    %2011 = vmatpush.msra.mxu0 %v266
    %2012 = vmatmul.f32.gmra.mxu0 %v1875
    %v2013 = vpop.f32.mrf.mxu0
    %v2014 = vadd.f32 %v396, %v2013
    %2015 = vdwg.mxu0
    %2016 = vmatpush.msra.mxu0 %v390
    %2017 = vmatpush.msra.mxu0 %v386
    %2018 = vmatpush.msra.mxu0 %v382
    %2019 = vmatpush.msra.mxu0 %v378
    %2020 = vmatpush.msra.mxu0 %v374
    %2021 = vmatpush.msra.mxu0 %v370
    %2022 = vmatpush.msra.mxu0 %v366
    %2023 = vmatpush.msra.mxu0 %v362
    %2024 = vmatpush.msra.mxu0 %v358
    %2025 = vmatpush.msra.mxu0 %v354
    %2026 = vmatpush.msra.mxu0 %v350
    %2027 = vmatpush.msra.mxu0 %v346
    %2028 = vmatpush.msra.mxu0 %v342
    %2029 = vmatpush.msra.mxu0 %v338
    %2030 = vmatpush.msra.mxu0 %v334
    %2031 = vmatpush.msra.mxu0 %v330
    %2032 = vmatmul.f32.gmra.mxu0 %v1758
    %v2033 = vpop.f32.mrf.mxu0
    %v2034 = vadd.f32 %v2014, %v2033
    %2035 = vdwg.mxu0
    %v2036 = vmul.f32 %v1914, 0.5
    %v2037 = vmul.f32 %v1954, 0.5
    %v2038 = vmul.f32 %v1994, 0.5
    %v2039 = vtanh.pop %v2036
    %v2040 = vtanh.pop %v2037
    %v2041 = vtanh.pop %v2038
    %v2042 = vmul.f32 %v2039, 0.5
    %v2043 = vmul.f32 %v2040, 0.5
    %v2044 = vmul.f32 %v2041, 0.5
    %v2045 = vadd.f32 %v2042, 0.5
    %v2046 = vadd.f32 %v2043, 0.5
    %v2047 = vadd.f32 %v2044, 0.5
    %v2048 = vtanh.pop %v2034
    %v2049 = vmul.f32 %v2046, %v1756
    %v2050 = vmul.f32 %v2045, %v2048
    %v2051 = vadd.f32 %v2049, %v2050
    %v2052 = vtanh.pop %v2051
    %v2053 = vmul.f32 %v2047, %v2052
    %s2054 = scalar_lea.vmem %s0, 48
    %v2055 = vld [vmem:[%s2054] sm:$0xff]
    %2057 = vset.pattern.permute.xlu0 0
    %2058 = vperm.xlu0 %2057, %v2055
    %v2059 = vpop.permute.xlu0 %2058
    %v2061 = vmul.f32 %v2059, %v71
    %v2062 = vmul.f32 %v2059, %v72
    %v2063 = vmul.f32 %v2059, %v73
    %v2064 = vmul.f32 %v2059, %v74
    %v2065 = vadd.f32 %v2061, %v85
    %v2066 = vadd.f32 %v2062, %v86
    %v2067 = vadd.f32 %v2063, %v87
    %v2068 = vadd.f32 %v2064, %v88
    %2069 = vmatpush.msra.mxu0 %v157
    %2070 = vmatpush.msra.mxu0 %v153
    %2071 = vmatpush.msra.mxu0 %v149
    %2072 = vmatpush.msra.mxu0 %v145
    %2073 = vmatpush.msra.mxu0 %v141
    %2074 = vmatpush.msra.mxu0 %v137
    %2075 = vmatpush.msra.mxu0 %v133
    %2076 = vmatpush.msra.mxu0 %v129
    %2077 = vmatpush.msra.mxu0 %v125
    %2078 = vmatpush.msra.mxu0 %v121
    %2079 = vmatpush.msra.mxu0 %v117
    %2080 = vmatpush.msra.mxu0 %v113
    %2081 = vmatpush.msra.mxu0 %v109
    %2082 = vmatpush.msra.mxu0 %v105
    %2083 = vmatpush.msra.mxu0 %v101
    %2084 = vmatpush.msra.mxu0 %v97
    %2085 = vmatmul.f32.gmra.mxu0 %v1875
    %v2086 = vpop.f32.mrf.mxu0
    %v2087 = vadd.f32 0.0, %v2086
    %2088 = vdwg.mxu0
    %2089 = vmatpush.msra.mxu0 %v158
    %2090 = vmatpush.msra.mxu0 %v154
    %2091 = vmatpush.msra.mxu0 %v150
    %2092 = vmatpush.msra.mxu0 %v146
    %2093 = vmatpush.msra.mxu0 %v142
    %2094 = vmatpush.msra.mxu0 %v138
    %2095 = vmatpush.msra.mxu0 %v134
    %2096 = vmatpush.msra.mxu0 %v130
    %2097 = vmatpush.msra.mxu0 %v126
    %2098 = vmatpush.msra.mxu0 %v122
    %2099 = vmatpush.msra.mxu0 %v118
    %2100 = vmatpush.msra.mxu0 %v114
    %2101 = vmatpush.msra.mxu0 %v110
    %2102 = vmatpush.msra.mxu0 %v106
    %2103 = vmatpush.msra.mxu0 %v102
    %2104 = vmatpush.msra.mxu0 %v98
    %2105 = vmatmul.f32.gmra.mxu0 %v1875
    %v2106 = vpop.f32.mrf.mxu0
    %v2107 = vadd.f32 0.0, %v2106
    %2108 = vdwg.mxu0
    %2109 = vmatpush.msra.mxu0 %v159
    %2110 = vmatpush.msra.mxu0 %v155
    %2111 = vmatpush.msra.mxu0 %v151
    %2112 = vmatpush.msra.mxu0 %v147
    %2113 = vmatpush.msra.mxu0 %v143
    %2114 = vmatpush.msra.mxu0 %v139
    %2115 = vmatpush.msra.mxu0 %v135
    %2116 = vmatpush.msra.mxu0 %v131
    %2117 = vmatpush.msra.mxu0 %v127
    %2118 = vmatpush.msra.mxu0 %v123
    %2119 = vmatpush.msra.mxu0 %v119
    %2120 = vmatpush.msra.mxu0 %v115
    %2121 = vmatpush.msra.mxu0 %v111
    %2122 = vmatpush.msra.mxu0 %v107
    %2123 = vmatpush.msra.mxu0 %v103
    %2124 = vmatpush.msra.mxu0 %v99
    %2125 = vmatmul.f32.gmra.mxu0 %v1875
    %v2126 = vpop.f32.mrf.mxu0
    %v2127 = vadd.f32 0.0, %v2126
    %2128 = vdwg.mxu0
    %2129 = vmatpush.msra.mxu0 %v160
    %2130 = vmatpush.msra.mxu0 %v156
    %2131 = vmatpush.msra.mxu0 %v152
    %2132 = vmatpush.msra.mxu0 %v148
    %2133 = vmatpush.msra.mxu0 %v144
    %2134 = vmatpush.msra.mxu0 %v140
    %2135 = vmatpush.msra.mxu0 %v136
    %2136 = vmatpush.msra.mxu0 %v132
    %2137 = vmatpush.msra.mxu0 %v128
    %2138 = vmatpush.msra.mxu0 %v124
    %2139 = vmatpush.msra.mxu0 %v120
    %2140 = vmatpush.msra.mxu0 %v116
    %2141 = vmatpush.msra.mxu0 %v112
    %2142 = vmatpush.msra.mxu0 %v108
    %2143 = vmatpush.msra.mxu0 %v104
    %2144 = vmatpush.msra.mxu0 %v100
    %2145 = vmatmul.f32.gmra.mxu0 %v1875
    %v2146 = vpop.f32.mrf.mxu0
    %v2147 = vadd.f32 0.0, %v2146
    %2148 = vdwg.mxu0
    %v2149 = vadd.f32 %v2065, %v2087
    %v2150 = vadd.f32 %v2066, %v2107
    %v2151 = vadd.f32 %v2067, %v2127
    %v2152 = vadd.f32 %v2068, %v2147
    %v2153 = vmul.f32 %v2149, 0.5
    %v2154 = vmul.f32 %v2150, 0.5
    %v2155 = vmul.f32 %v2151, 0.5
    %v2156 = vtanh.pop %v2153
    %v2157 = vtanh.pop %v2154
    %v2158 = vtanh.pop %v2155
    %v2159 = vmul.f32 %v2156, 0.5
    %v2160 = vmul.f32 %v2157, 0.5
    %v2161 = vmul.f32 %v2158, 0.5
    %v2162 = vadd.f32 %v2159, 0.5
    %v2163 = vadd.f32 %v2160, 0.5
    %v2164 = vadd.f32 %v2161, 0.5
    %v2165 = vtanh.pop %v2152
    %v2166 = vmul.f32 %v2163, %v1873
    %v2167 = vmul.f32 %v2162, %v2165
    %v2168 = vadd.f32 %v2166, %v2167
    %v2169 = vtanh.pop %v2168
    %v2170 = vmul.f32 %v2164, %v2169
    %2171 = vmatpush.msra.mxu0 %v323
    %2172 = vmatpush.msra.mxu0 %v319
    %2173 = vmatpush.msra.mxu0 %v315
    %2174 = vmatpush.msra.mxu0 %v311
    %2175 = vmatpush.msra.mxu0 %v307
    %2176 = vmatpush.msra.mxu0 %v303
    %2177 = vmatpush.msra.mxu0 %v299
    %2178 = vmatpush.msra.mxu0 %v295
    %2179 = vmatpush.msra.mxu0 %v291
    %2180 = vmatpush.msra.mxu0 %v287
    %2181 = vmatpush.msra.mxu0 %v283
    %2182 = vmatpush.msra.mxu0 %v279
    %2183 = vmatpush.msra.mxu0 %v275
    %2184 = vmatpush.msra.mxu0 %v271
    %2185 = vmatpush.msra.mxu0 %v267
    %2186 = vmatpush.msra.mxu0 %v263
    %2187 = vmatmul.f32.gmra.mxu0 %v2170
    %v2188 = vpop.f32.mrf.mxu0
    %v2189 = vadd.f32 %v393, %v2188
    %2190 = vdwg.mxu0
    %2191 = vmatpush.msra.mxu0 %v387
    %2192 = vmatpush.msra.mxu0 %v383
    %2193 = vmatpush.msra.mxu0 %v379
    %2194 = vmatpush.msra.mxu0 %v375
    %2195 = vmatpush.msra.mxu0 %v371
    %2196 = vmatpush.msra.mxu0 %v367
    %2197 = vmatpush.msra.mxu0 %v363
    %2198 = vmatpush.msra.mxu0 %v359
    %2199 = vmatpush.msra.mxu0 %v355
    %2200 = vmatpush.msra.mxu0 %v351
    %2201 = vmatpush.msra.mxu0 %v347
    %2202 = vmatpush.msra.mxu0 %v343
    %2203 = vmatpush.msra.mxu0 %v339
    %2204 = vmatpush.msra.mxu0 %v335
    %2205 = vmatpush.msra.mxu0 %v331
    %2206 = vmatpush.msra.mxu0 %v327
    %2207 = vmatmul.f32.gmra.mxu0 %v2053
    %v2208 = vpop.f32.mrf.mxu0
    %v2209 = vadd.f32 %v2189, %v2208
    %2210 = vdwg.mxu0
    %2211 = vmatpush.msra.mxu0 %v324
    %2212 = vmatpush.msra.mxu0 %v320
    %2213 = vmatpush.msra.mxu0 %v316
    %2214 = vmatpush.msra.mxu0 %v312
    %2215 = vmatpush.msra.mxu0 %v308
    %2216 = vmatpush.msra.mxu0 %v304
    %2217 = vmatpush.msra.mxu0 %v300
    %2218 = vmatpush.msra.mxu0 %v296
    %2219 = vmatpush.msra.mxu0 %v292
    %2220 = vmatpush.msra.mxu0 %v288
    %2221 = vmatpush.msra.mxu0 %v284
    %2222 = vmatpush.msra.mxu0 %v280
    %2223 = vmatpush.msra.mxu0 %v276
    %2224 = vmatpush.msra.mxu0 %v272
    %2225 = vmatpush.msra.mxu0 %v268
    %2226 = vmatpush.msra.mxu0 %v264
    %2227 = vmatmul.f32.gmra.mxu0 %v2170
    %v2228 = vpop.f32.mrf.mxu0
    %v2229 = vadd.f32 %v394, %v2228
    %2230 = vdwg.mxu0
    %2231 = vmatpush.msra.mxu0 %v388
    %2232 = vmatpush.msra.mxu0 %v384
    %2233 = vmatpush.msra.mxu0 %v380
    %2234 = vmatpush.msra.mxu0 %v376
    %2235 = vmatpush.msra.mxu0 %v372
    %2236 = vmatpush.msra.mxu0 %v368
    %2237 = vmatpush.msra.mxu0 %v364
    %2238 = vmatpush.msra.mxu0 %v360
    %2239 = vmatpush.msra.mxu0 %v356
    %2240 = vmatpush.msra.mxu0 %v352
    %2241 = vmatpush.msra.mxu0 %v348
    %2242 = vmatpush.msra.mxu0 %v344
    %2243 = vmatpush.msra.mxu0 %v340
    %2244 = vmatpush.msra.mxu0 %v336
    %2245 = vmatpush.msra.mxu0 %v332
    %2246 = vmatpush.msra.mxu0 %v328
    %2247 = vmatmul.f32.gmra.mxu0 %v2053
    %v2248 = vpop.f32.mrf.mxu0
    %v2249 = vadd.f32 %v2229, %v2248
    %2250 = vdwg.mxu0
    %2251 = vmatpush.msra.mxu0 %v325
    %2252 = vmatpush.msra.mxu0 %v321
    %2253 = vmatpush.msra.mxu0 %v317
    %2254 = vmatpush.msra.mxu0 %v313
    %2255 = vmatpush.msra.mxu0 %v309
    %2256 = vmatpush.msra.mxu0 %v305
    %2257 = vmatpush.msra.mxu0 %v301
    %2258 = vmatpush.msra.mxu0 %v297
    %2259 = vmatpush.msra.mxu0 %v293
    %2260 = vmatpush.msra.mxu0 %v289
    %2261 = vmatpush.msra.mxu0 %v285
    %2262 = vmatpush.msra.mxu0 %v281
    %2263 = vmatpush.msra.mxu0 %v277
    %2264 = vmatpush.msra.mxu0 %v273
    %2265 = vmatpush.msra.mxu0 %v269
    %2266 = vmatpush.msra.mxu0 %v265
    %2267 = vmatmul.f32.gmra.mxu0 %v2170
    %v2268 = vpop.f32.mrf.mxu0
    %v2269 = vadd.f32 %v395, %v2268
    %2270 = vdwg.mxu0
    %2271 = vmatpush.msra.mxu0 %v389
    %2272 = vmatpush.msra.mxu0 %v385
    %2273 = vmatpush.msra.mxu0 %v381
    %2274 = vmatpush.msra.mxu0 %v377
    %2275 = vmatpush.msra.mxu0 %v373
    %2276 = vmatpush.msra.mxu0 %v369
    %2277 = vmatpush.msra.mxu0 %v365
    %2278 = vmatpush.msra.mxu0 %v361
    %2279 = vmatpush.msra.mxu0 %v357
    %2280 = vmatpush.msra.mxu0 %v353
    %2281 = vmatpush.msra.mxu0 %v349
    %2282 = vmatpush.msra.mxu0 %v345
    %2283 = vmatpush.msra.mxu0 %v341
    %2284 = vmatpush.msra.mxu0 %v337
    %2285 = vmatpush.msra.mxu0 %v333
    %2286 = vmatpush.msra.mxu0 %v329
    %2287 = vmatmul.f32.gmra.mxu0 %v2053
    %v2288 = vpop.f32.mrf.mxu0
    %v2289 = vadd.f32 %v2269, %v2288
    %2290 = vdwg.mxu0
    %2291 = vmatpush.msra.mxu0 %v326
    %2292 = vmatpush.msra.mxu0 %v322
    %2293 = vmatpush.msra.mxu0 %v318
    %2294 = vmatpush.msra.mxu0 %v314
    %2295 = vmatpush.msra.mxu0 %v310
    %2296 = vmatpush.msra.mxu0 %v306
    %2297 = vmatpush.msra.mxu0 %v302
    %2298 = vmatpush.msra.mxu0 %v298
    %2299 = vmatpush.msra.mxu0 %v294
    %2300 = vmatpush.msra.mxu0 %v290
    %2301 = vmatpush.msra.mxu0 %v286
    %2302 = vmatpush.msra.mxu0 %v282
    %2303 = vmatpush.msra.mxu0 %v278
    %2304 = vmatpush.msra.mxu0 %v274
    %2305 = vmatpush.msra.mxu0 %v270
    %2306 = vmatpush.msra.mxu0 %v266
    %2307 = vmatmul.f32.gmra.mxu0 %v2170
    %v2308 = vpop.f32.mrf.mxu0
    %v2309 = vadd.f32 %v396, %v2308
    %2310 = vdwg.mxu0
    %2311 = vmatpush.msra.mxu0 %v390
    %2312 = vmatpush.msra.mxu0 %v386
    %2313 = vmatpush.msra.mxu0 %v382
    %2314 = vmatpush.msra.mxu0 %v378
    %2315 = vmatpush.msra.mxu0 %v374
    %2316 = vmatpush.msra.mxu0 %v370
    %2317 = vmatpush.msra.mxu0 %v366
    %2318 = vmatpush.msra.mxu0 %v362
    %2319 = vmatpush.msra.mxu0 %v358
    %2320 = vmatpush.msra.mxu0 %v354
    %2321 = vmatpush.msra.mxu0 %v350
    %2322 = vmatpush.msra.mxu0 %v346
    %2323 = vmatpush.msra.mxu0 %v342
    %2324 = vmatpush.msra.mxu0 %v338
    %2325 = vmatpush.msra.mxu0 %v334
    %2326 = vmatpush.msra.mxu0 %v330
    %2327 = vmatmul.f32.gmra.mxu0 %v2053
    %v2328 = vpop.f32.mrf.mxu0
    %v2329 = vadd.f32 %v2309, %v2328
    %2330 = vdwg.mxu0
    %v2331 = vmul.f32 %v2209, 0.5
    %v2332 = vmul.f32 %v2249, 0.5
    %v2333 = vmul.f32 %v2289, 0.5
    %v2334 = vtanh.pop %v2331
    %v2335 = vtanh.pop %v2332
    %v2336 = vtanh.pop %v2333
    %v2337 = vmul.f32 %v2334, 0.5
    %v2338 = vmul.f32 %v2335, 0.5
    %v2339 = vmul.f32 %v2336, 0.5
    %v2340 = vadd.f32 %v2337, 0.5
    %v2341 = vadd.f32 %v2338, 0.5
    %v2342 = vadd.f32 %v2339, 0.5
    %v2343 = vtanh.pop %v2329
    %v2344 = vmul.f32 %v2341, %v2051
    %v2345 = vmul.f32 %v2340, %v2343
    %v2346 = vadd.f32 %v2344, %v2345
    %v2347 = vtanh.pop %v2346
    %v2348 = vmul.f32 %v2342, %v2347
    %s2349 = scalar_lea.vmem %s0, 56
    %v2350 = vld [vmem:[%s2349] sm:$0xff]
    %2352 = vset.pattern.permute.xlu0 0
    %2353 = vperm.xlu0 %2352, %v2350
    %v2354 = vpop.permute.xlu0 %2353
    %v2356 = vmul.f32 %v2354, %v71
    %v2357 = vmul.f32 %v2354, %v72
    %v2358 = vmul.f32 %v2354, %v73
    %v2359 = vmul.f32 %v2354, %v74
    %v2360 = vadd.f32 %v2356, %v85
    %v2361 = vadd.f32 %v2357, %v86
    %v2362 = vadd.f32 %v2358, %v87
    %v2363 = vadd.f32 %v2359, %v88
    %2364 = vmatpush.msra.mxu0 %v157
    %2365 = vmatpush.msra.mxu0 %v153
    %2366 = vmatpush.msra.mxu0 %v149
    %2367 = vmatpush.msra.mxu0 %v145
    %2368 = vmatpush.msra.mxu0 %v141
    %2369 = vmatpush.msra.mxu0 %v137
    %2370 = vmatpush.msra.mxu0 %v133
    %2371 = vmatpush.msra.mxu0 %v129
    %2372 = vmatpush.msra.mxu0 %v125
    %2373 = vmatpush.msra.mxu0 %v121
    %2374 = vmatpush.msra.mxu0 %v117
    %2375 = vmatpush.msra.mxu0 %v113
    %2376 = vmatpush.msra.mxu0 %v109
    %2377 = vmatpush.msra.mxu0 %v105
    %2378 = vmatpush.msra.mxu0 %v101
    %2379 = vmatpush.msra.mxu0 %v97
    %2380 = vmatmul.f32.gmra.mxu0 %v2170
    %v2381 = vpop.f32.mrf.mxu0
    %v2382 = vadd.f32 0.0, %v2381
    %2383 = vdwg.mxu0
    %2384 = vmatpush.msra.mxu0 %v158
    %2385 = vmatpush.msra.mxu0 %v154
    %2386 = vmatpush.msra.mxu0 %v150
    %2387 = vmatpush.msra.mxu0 %v146
    %2388 = vmatpush.msra.mxu0 %v142
    %2389 = vmatpush.msra.mxu0 %v138
    %2390 = vmatpush.msra.mxu0 %v134
    %2391 = vmatpush.msra.mxu0 %v130
    %2392 = vmatpush.msra.mxu0 %v126
    %2393 = vmatpush.msra.mxu0 %v122
    %2394 = vmatpush.msra.mxu0 %v118
    %2395 = vmatpush.msra.mxu0 %v114
    %2396 = vmatpush.msra.mxu0 %v110
    %2397 = vmatpush.msra.mxu0 %v106
    %2398 = vmatpush.msra.mxu0 %v102
    %2399 = vmatpush.msra.mxu0 %v98
    %2400 = vmatmul.f32.gmra.mxu0 %v2170
    %v2401 = vpop.f32.mrf.mxu0
    %v2402 = vadd.f32 0.0, %v2401
    %2403 = vdwg.mxu0
    %2404 = vmatpush.msra.mxu0 %v159
    %2405 = vmatpush.msra.mxu0 %v155
    %2406 = vmatpush.msra.mxu0 %v151
    %2407 = vmatpush.msra.mxu0 %v147
    %2408 = vmatpush.msra.mxu0 %v143
    %2409 = vmatpush.msra.mxu0 %v139
    %2410 = vmatpush.msra.mxu0 %v135
    %2411 = vmatpush.msra.mxu0 %v131
    %2412 = vmatpush.msra.mxu0 %v127
    %2413 = vmatpush.msra.mxu0 %v123
    %2414 = vmatpush.msra.mxu0 %v119
    %2415 = vmatpush.msra.mxu0 %v115
    %2416 = vmatpush.msra.mxu0 %v111
    %2417 = vmatpush.msra.mxu0 %v107
    %2418 = vmatpush.msra.mxu0 %v103
    %2419 = vmatpush.msra.mxu0 %v99
    %2420 = vmatmul.f32.gmra.mxu0 %v2170
    %v2421 = vpop.f32.mrf.mxu0
    %v2422 = vadd.f32 0.0, %v2421
    %2423 = vdwg.mxu0
    %2424 = vmatpush.msra.mxu0 %v160
    %2425 = vmatpush.msra.mxu0 %v156
    %2426 = vmatpush.msra.mxu0 %v152
    %2427 = vmatpush.msra.mxu0 %v148
    %2428 = vmatpush.msra.mxu0 %v144
    %2429 = vmatpush.msra.mxu0 %v140
    %2430 = vmatpush.msra.mxu0 %v136
    %2431 = vmatpush.msra.mxu0 %v132
    %2432 = vmatpush.msra.mxu0 %v128
    %2433 = vmatpush.msra.mxu0 %v124
    %2434 = vmatpush.msra.mxu0 %v120
    %2435 = vmatpush.msra.mxu0 %v116
    %2436 = vmatpush.msra.mxu0 %v112
    %2437 = vmatpush.msra.mxu0 %v108
    %2438 = vmatpush.msra.mxu0 %v104
    %2439 = vmatpush.msra.mxu0 %v100
    %2440 = vmatmul.f32.gmra.mxu0 %v2170
    %v2441 = vpop.f32.mrf.mxu0
    %v2442 = vadd.f32 0.0, %v2441
    %2443 = vdwg.mxu0
    %v2444 = vadd.f32 %v2360, %v2382
    %v2445 = vadd.f32 %v2361, %v2402
    %v2446 = vadd.f32 %v2362, %v2422
    %v2447 = vadd.f32 %v2363, %v2442
    %v2448 = vmul.f32 %v2444, 0.5
    %v2449 = vmul.f32 %v2445, 0.5
    %v2450 = vmul.f32 %v2446, 0.5
    %v2451 = vtanh.pop %v2448
    %v2452 = vtanh.pop %v2449
    %v2453 = vtanh.pop %v2450
    %v2454 = vmul.f32 %v2451, 0.5
    %v2455 = vmul.f32 %v2452, 0.5
    %v2456 = vmul.f32 %v2453, 0.5
    %v2457 = vadd.f32 %v2454, 0.5
    %v2458 = vadd.f32 %v2455, 0.5
    %v2459 = vadd.f32 %v2456, 0.5
    %v2460 = vtanh.pop %v2447
    %v2461 = vmul.f32 %v2458, %v2168
    %v2462 = vmul.f32 %v2457, %v2460
    %v2463 = vadd.f32 %v2461, %v2462
    %v2464 = vtanh.pop %v2463
    %v2465 = vmul.f32 %v2459, %v2464
    %2466 = vmatpush.msra.mxu0 %v323
    %2467 = vmatpush.msra.mxu0 %v319
    %2468 = vmatpush.msra.mxu0 %v315
    %2469 = vmatpush.msra.mxu0 %v311
    %2470 = vmatpush.msra.mxu0 %v307
    %2471 = vmatpush.msra.mxu0 %v303
    %2472 = vmatpush.msra.mxu0 %v299
    %2473 = vmatpush.msra.mxu0 %v295
    %2474 = vmatpush.msra.mxu0 %v291
    %2475 = vmatpush.msra.mxu0 %v287
    %2476 = vmatpush.msra.mxu0 %v283
    %2477 = vmatpush.msra.mxu0 %v279
    %2478 = vmatpush.msra.mxu0 %v275
    %2479 = vmatpush.msra.mxu0 %v271
    %2480 = vmatpush.msra.mxu0 %v267
    %2481 = vmatpush.msra.mxu0 %v263
    %2482 = vmatmul.f32.gmra.mxu0 %v2465
    %v2483 = vpop.f32.mrf.mxu0
    %v2484 = vadd.f32 %v393, %v2483
    %2485 = vdwg.mxu0
    %2486 = vmatpush.msra.mxu0 %v387
    %2487 = vmatpush.msra.mxu0 %v383
    %2488 = vmatpush.msra.mxu0 %v379
    %2489 = vmatpush.msra.mxu0 %v375
    %2490 = vmatpush.msra.mxu0 %v371
    %2491 = vmatpush.msra.mxu0 %v367
    %2492 = vmatpush.msra.mxu0 %v363
    %2493 = vmatpush.msra.mxu0 %v359
    %2494 = vmatpush.msra.mxu0 %v355
    %2495 = vmatpush.msra.mxu0 %v351
    %2496 = vmatpush.msra.mxu0 %v347
    %2497 = vmatpush.msra.mxu0 %v343
    %2498 = vmatpush.msra.mxu0 %v339
    %2499 = vmatpush.msra.mxu0 %v335
    %2500 = vmatpush.msra.mxu0 %v331
    %2501 = vmatpush.msra.mxu0 %v327
    %2502 = vmatmul.f32.gmra.mxu0 %v2348
    %v2503 = vpop.f32.mrf.mxu0
    %v2504 = vadd.f32 %v2484, %v2503
    %2505 = vdwg.mxu0
    %2506 = vmatpush.msra.mxu0 %v324
    %2507 = vmatpush.msra.mxu0 %v320
    %2508 = vmatpush.msra.mxu0 %v316
    %2509 = vmatpush.msra.mxu0 %v312
    %2510 = vmatpush.msra.mxu0 %v308
    %2511 = vmatpush.msra.mxu0 %v304
    %2512 = vmatpush.msra.mxu0 %v300
    %2513 = vmatpush.msra.mxu0 %v296
    %2514 = vmatpush.msra.mxu0 %v292
    %2515 = vmatpush.msra.mxu0 %v288
    %2516 = vmatpush.msra.mxu0 %v284
    %2517 = vmatpush.msra.mxu0 %v280
    %2518 = vmatpush.msra.mxu0 %v276
    %2519 = vmatpush.msra.mxu0 %v272
    %2520 = vmatpush.msra.mxu0 %v268
    %2521 = vmatpush.msra.mxu0 %v264
    %2522 = vmatmul.f32.gmra.mxu0 %v2465
    %v2523 = vpop.f32.mrf.mxu0
    %v2524 = vadd.f32 %v394, %v2523
    %2525 = vdwg.mxu0
    %2526 = vmatpush.msra.mxu0 %v388
    %2527 = vmatpush.msra.mxu0 %v384
    %2528 = vmatpush.msra.mxu0 %v380
    %2529 = vmatpush.msra.mxu0 %v376
    %2530 = vmatpush.msra.mxu0 %v372
    %2531 = vmatpush.msra.mxu0 %v368
    %2532 = vmatpush.msra.mxu0 %v364
    %2533 = vmatpush.msra.mxu0 %v360
    %2534 = vmatpush.msra.mxu0 %v356
    %2535 = vmatpush.msra.mxu0 %v352
    %2536 = vmatpush.msra.mxu0 %v348
    %2537 = vmatpush.msra.mxu0 %v344
    %2538 = vmatpush.msra.mxu0 %v340
    %2539 = vmatpush.msra.mxu0 %v336
    %2540 = vmatpush.msra.mxu0 %v332
    %2541 = vmatpush.msra.mxu0 %v328
    %2542 = vmatmul.f32.gmra.mxu0 %v2348
    %v2543 = vpop.f32.mrf.mxu0
    %v2544 = vadd.f32 %v2524, %v2543
    %2545 = vdwg.mxu0
    %2546 = vmatpush.msra.mxu0 %v325
    %2547 = vmatpush.msra.mxu0 %v321
    %2548 = vmatpush.msra.mxu0 %v317
    %2549 = vmatpush.msra.mxu0 %v313
    %2550 = vmatpush.msra.mxu0 %v309
    %2551 = vmatpush.msra.mxu0 %v305
    %2552 = vmatpush.msra.mxu0 %v301
    %2553 = vmatpush.msra.mxu0 %v297
    %2554 = vmatpush.msra.mxu0 %v293
    %2555 = vmatpush.msra.mxu0 %v289
    %2556 = vmatpush.msra.mxu0 %v285
    %2557 = vmatpush.msra.mxu0 %v281
    %2558 = vmatpush.msra.mxu0 %v277
    %2559 = vmatpush.msra.mxu0 %v273
    %2560 = vmatpush.msra.mxu0 %v269
    %2561 = vmatpush.msra.mxu0 %v265
    %2562 = vmatmul.f32.gmra.mxu0 %v2465
    %v2563 = vpop.f32.mrf.mxu0
    %v2564 = vadd.f32 %v395, %v2563
    %2565 = vdwg.mxu0
    %2566 = vmatpush.msra.mxu0 %v389
    %2567 = vmatpush.msra.mxu0 %v385
    %2568 = vmatpush.msra.mxu0 %v381
    %2569 = vmatpush.msra.mxu0 %v377
    %2570 = vmatpush.msra.mxu0 %v373
    %2571 = vmatpush.msra.mxu0 %v369
    %2572 = vmatpush.msra.mxu0 %v365
    %2573 = vmatpush.msra.mxu0 %v361
    %2574 = vmatpush.msra.mxu0 %v357
    %2575 = vmatpush.msra.mxu0 %v353
    %2576 = vmatpush.msra.mxu0 %v349
    %2577 = vmatpush.msra.mxu0 %v345
    %2578 = vmatpush.msra.mxu0 %v341
    %2579 = vmatpush.msra.mxu0 %v337
    %2580 = vmatpush.msra.mxu0 %v333
    %2581 = vmatpush.msra.mxu0 %v329
    %2582 = vmatmul.f32.gmra.mxu0 %v2348
    %v2583 = vpop.f32.mrf.mxu0
    %v2584 = vadd.f32 %v2564, %v2583
    %2585 = vdwg.mxu0
    %2586 = vmatpush.msra.mxu0 %v326
    %2587 = vmatpush.msra.mxu0 %v322
    %2588 = vmatpush.msra.mxu0 %v318
    %2589 = vmatpush.msra.mxu0 %v314
    %2590 = vmatpush.msra.mxu0 %v310
    %2591 = vmatpush.msra.mxu0 %v306
    %2592 = vmatpush.msra.mxu0 %v302
    %2593 = vmatpush.msra.mxu0 %v298
    %2594 = vmatpush.msra.mxu0 %v294
    %2595 = vmatpush.msra.mxu0 %v290
    %2596 = vmatpush.msra.mxu0 %v286
    %2597 = vmatpush.msra.mxu0 %v282
    %2598 = vmatpush.msra.mxu0 %v278
    %2599 = vmatpush.msra.mxu0 %v274
    %2600 = vmatpush.msra.mxu0 %v270
    %2601 = vmatpush.msra.mxu0 %v266
    %2602 = vmatmul.f32.gmra.mxu0 %v2465
    %v2603 = vpop.f32.mrf.mxu0
    %v2604 = vadd.f32 %v396, %v2603
    %2605 = vdwg.mxu0
    %2606 = vmatpush.msra.mxu0 %v390
    %2607 = vmatpush.msra.mxu0 %v386
    %2608 = vmatpush.msra.mxu0 %v382
    %2609 = vmatpush.msra.mxu0 %v378
    %2610 = vmatpush.msra.mxu0 %v374
    %2611 = vmatpush.msra.mxu0 %v370
    %2612 = vmatpush.msra.mxu0 %v366
    %2613 = vmatpush.msra.mxu0 %v362
    %2614 = vmatpush.msra.mxu0 %v358
    %2615 = vmatpush.msra.mxu0 %v354
    %2616 = vmatpush.msra.mxu0 %v350
    %2617 = vmatpush.msra.mxu0 %v346
    %2618 = vmatpush.msra.mxu0 %v342
    %2619 = vmatpush.msra.mxu0 %v338
    %2620 = vmatpush.msra.mxu0 %v334
    %2621 = vmatpush.msra.mxu0 %v330
    %2622 = vmatmul.f32.gmra.mxu0 %v2348
    %v2623 = vpop.f32.mrf.mxu0
    %v2624 = vadd.f32 %v2604, %v2623
    %2625 = vdwg.mxu0
    %v2626 = vmul.f32 %v2504, 0.5
    %v2627 = vmul.f32 %v2544, 0.5
    %v2628 = vmul.f32 %v2584, 0.5
    %v2629 = vtanh.pop %v2626
    %v2630 = vtanh.pop %v2627
    %v2631 = vtanh.pop %v2628
    %v2632 = vmul.f32 %v2629, 0.5
    %v2633 = vmul.f32 %v2630, 0.5
    %v2634 = vmul.f32 %v2631, 0.5
    %v2635 = vadd.f32 %v2632, 0.5
    %v2636 = vadd.f32 %v2633, 0.5
    %v2637 = vadd.f32 %v2634, 0.5
    %v2638 = vtanh.pop %v2624
    %v2639 = vmul.f32 %v2636, %v2346
    %v2640 = vmul.f32 %v2635, %v2638
    %v2641 = vadd.f32 %v2639, %v2640
    %v2642 = vtanh.pop %v2641
    %v2643 = vmul.f32 %v2637, %v2642
    %v2644 = vld [vmem:[%s6] sm:$0xff]
    %v2645 = vld [vmem:[%s6 + $0x8] sm:$0xff]
    %v2646 = vld [vmem:[%s6 + $0x10] sm:$0xff]
    %v2647 = vld [vmem:[%s6 + $0x18] sm:$0xff]
    %v2648 = vld [vmem:[%s6 + $0x20] sm:$0xff]
    %v2649 = vld [vmem:[%s6 + $0x28] sm:$0xff]
    %v2650 = vld [vmem:[%s6 + $0x30] sm:$0xff]
    %v2651 = vld [vmem:[%s6 + $0x38] sm:$0xff]
    %v2652 = vld [vmem:[%s6 + $0x40] sm:$0xff]
    %v2653 = vld [vmem:[%s6 + $0x48] sm:$0xff]
    %v2654 = vld [vmem:[%s6 + $0x50] sm:$0xff]
    %v2655 = vld [vmem:[%s6 + $0x58] sm:$0xff]
    %v2656 = vld [vmem:[%s6 + $0x60] sm:$0xff]
    %v2657 = vld [vmem:[%s6 + $0x68] sm:$0xff]
    %v2658 = vld [vmem:[%s6 + $0x70] sm:$0xff]
    %v2659 = vld [vmem:[%s6 + $0x78] sm:$0xff]
    %v2660 = vld [vmem:[#allocation2] sm:$0x1]
    %v2662 = vperm.slane %v2660, 0
    %2664 = vmatpush.msra.mxu0 %v2659
    %2665 = vmatpush.msra.mxu0 %v2658
    %2666 = vmatpush.msra.mxu0 %v2657
    %2667 = vmatpush.msra.mxu0 %v2656
    %2668 = vmatpush.msra.mxu0 %v2655
    %2669 = vmatpush.msra.mxu0 %v2654
    %2670 = vmatpush.msra.mxu0 %v2653
    %2671 = vmatpush.msra.mxu0 %v2652
    %2672 = vmatpush.msra.mxu0 %v2651
    %2673 = vmatpush.msra.mxu0 %v2650
    %2674 = vmatpush.msra.mxu0 %v2649
    %2675 = vmatpush.msra.mxu0 %v2648
    %2676 = vmatpush.msra.mxu0 %v2647
    %2677 = vmatpush.msra.mxu0 %v2646
    %2678 = vmatpush.msra.mxu0 %v2645
    %2679 = vmatpush.msra.mxu0 %v2644
    %2680 = vmatmul.f32.gmra.mxu0 %v2643
    %v2681 = vpop.f32.mrf.mxu0
    %v2682 = vadd.f32 %v2662, %v2681
    %2683 = vdwg.mxu0
    %vm2684 = vcmask 7168
    %2685 = vst.msk [vmem:[%s8] sm:$0xff] %vm2684, %v2682
    // Predicated region
    $region42: #{tpu_custom_call.1} parent=1 // pred_check
      _
    $region43: #{tpu_custom_call.1} parent=1 // pred_check_branch
      %2687 = sbr.rel (0) target = $region45
    $region44: #{tpu_custom_call.1} parent=1 // pred_region
      _
    $region45: #{tpu_custom_call.1} parent=1 // pred_fallthru
      _
    // Predicated region
    $region46: #{tpu_custom_call.1} parent=1 // pred_check
      _
    $region47: #{tpu_custom_call.1} parent=1 // pred_check_branch
      %2689 = sbr.rel (0) target = $region49
    $region48: #{tpu_custom_call.1} parent=1 // pred_region
      _
    $region49: #{tpu_custom_call.1} parent=1 // pred_fallthru
      _
    %2690 = vsyncpa [#allocation4], 1
    %2691 = vsyncpa [#allocation6], 1

</llo_original>
